<compile_context>
chip_gen: v7x
topology: tpu7x:2x2x1
jax: 0.10.0
libtpu: 0.0.40
codegen_flags: <defaults>
</compile_context>

<pallas_src>
import jax
import jax.numpy as jnp
from jax.experimental import pallas as pl
from jax.experimental.pallas import tpu as pltpu

BN_EPS = 1e-5
_MAX_TM = 32768  # lane-tile cap; beyond ~0.5-1 MiB per step gains plateau


def _vmem_budget():
    """Generation-aware scoped-VMEM limit (v5e/v6e 128 MiB -> 64 MiB scoped,
    v7x 64 MiB -> 32 MiB scoped)."""
    cap = 128 * 1024 * 1024
    try:
        info = pltpu.get_tpu_info()
        cap = int(getattr(info, "vmem_capacity_bytes", cap)) or cap
    except Exception:
        pass
    return min(max(cap // 2, 16 * 1024 * 1024), 96 * 1024 * 1024)


def _plan_tm(dhw, tm_cap):
    """Pick the lane tile TM.
      * dhw <= cap: single full-extent block (always a legal block shape).
      * else prefer a 128-multiple divisor of dhw in [cap/2, cap] (no ragged tail).
      * else use cap rounded to 128 with a cdiv grid + masked tail tile."""
    if dhw <= tm_cap:
        return dhw
    top = max((tm_cap // 128) * 128, 128)
    for cand in range(top, max(top // 2, 128) - 1, -128):
        if dhw % cand == 0:
            return cand
    return top


def fc_block_forward(x_ncdhw, weight, gamma, beta, *,
                     max_lane_tile=_MAX_TM, allow_fused=True):
    """x_ncdhw: (N, Cin, D, H, W); weight: (Cout, Cin, 1, 1, 1) (PyTorch layout)."""
    N, Cin, D, H, W = x_ncdhw.shape
    Cout = weight.shape[0]
    DHW = D * H * W
    M = N * DHW

    x_dtype = x_ncdhw.dtype
    sz = x_ncdhw.dtype.itemsize
    x3d = x_ncdhw.reshape(N, Cin, DHW)                       # free reshape (contiguous)
    w2d = weight.reshape(Cout, Cin).astype(jnp.float32)
    gamma32 = gamma.astype(jnp.float32).reshape(Cout, 1)
    beta32 = beta.astype(jnp.float32).reshape(Cout, 1)

    # Keep MXU operands in the input dtype (native bf16 MXU mode when x is bf16).
    mxu_dtype = x_dtype if x_dtype == jnp.bfloat16 else jnp.float32

    vmem_limit = _vmem_budget()
    bytes_x = int(x3d.size) * sz

    # ---------------- fast path: everything fits in VMEM at once ----------------
    fused_bytes = (N * Cin * DHW * sz            # x
                   + N * Cout * DHW * 4          # f32 y intermediates
                   + N * Cout * DHW * sz         # output
                   + (Cout * Cin + 2 * Cout) * 4)
    if allow_fused and fused_bytes <= int(0.4 * vmem_limit):
        w_k = w2d.astype(mxu_dtype)

        def _fused_kernel(w_ref, g_ref, b_ref, x_ref, o_ref):
            w = w_ref[...]
            ys = [jnp.dot(w, x_ref[n], preferred_element_type=jnp.float32)
                  for n in range(N)]                                  # N x (Cout, DHW)
            s = sum(jnp.sum(y, axis=-1, keepdims=True) for y in ys)
            mean = s * (1.0 / M)                                      # (Cout, 1)
            s2 = sum(jnp.sum(jnp.square(y - mean), axis=-1, keepdims=True)
                     for y in ys)
            var = s2 * (1.0 / M)                                      # centered, exact
            scale = g_ref[...] * jax.lax.rsqrt(var + BN_EPS)          # (Cout, 1)
            bias = b_ref[...] - scale * mean                          # (Cout, 1)
            for n in range(N):
                o_ref[n] = jnp.maximum(ys[n] * scale + bias, 0.0).astype(o_ref.dtype)

        out3d = pl.pallas_call(
            _fused_kernel,
            out_shape=jax.ShapeDtypeStruct((N, Cout, DHW), x_dtype),
            grid_spec=pltpu.PrefetchScalarGridSpec(
                num_scalar_prefetch=0,
                grid=(1,),
                in_specs=[pl.BlockSpec((Cout, Cin), lambda i: (0, 0)),
                          pl.BlockSpec((Cout, 1), lambda i: (0, 0)),
                          pl.BlockSpec((Cout, 1), lambda i: (0, 0)),
                          pl.BlockSpec((N, Cin, DHW), lambda i: (0, 0, 0))],
                out_specs=pl.BlockSpec((N, Cout, DHW), lambda i: (0, 0, 0))),
            compiler_params=pltpu.CompilerParams(
                dimension_semantics=("arbitrary",),
                vmem_limit_bytes=vmem_limit),
            cost_estimate=pl.CostEstimate(
                flops=2 * M * Cin * Cout + 8 * M * Cout,
                transcendentals=0,
                bytes_accessed=fused_bytes),
        )(w_k, gamma32, beta32, x3d)
        return out3d.reshape(N, Cout, D, H, W)

    # ---------------- two-pass streaming path (large inputs) ----------------
    # TM: biggest lane tile whose pass-2 working set (double-buffered x + out,
    # plus the f32 matmul result before the cast) stays inside ~60% of the
    # scoped VMEM limit, capped at max_lane_tile.
    per_lane = 2 * Cin * sz + 2 * Cout * sz + Cout * 4
    tm_cap = max(128, min(int(0.6 * vmem_limit) // per_lane, max_lane_tile))
    TM = _plan_tm(DHW, tm_cap)
    num_tiles = pl.cdiv(DHW, TM)
    ragged = (DHW % TM) != 0

    # Split the spatial reduction over a leading "parallel" axis of 2 when the
    # batch axis is small (fills both v7x TensorCores); harmless elsewhere.
    nsplit = 2 if (num_tiles >= 2 and num_tiles % 2 == 0) else 1
    tiles_per_split = num_tiles // nsplit

    # -------- pass 1: stream x once, accumulate S = sum x and G = sum x x^T ----
    def _stats_kernel(x_ref, sum_ref, gram_ref):
        @pl.when(pl.program_id(2) == 0)
        def _():
            sum_ref[...] = jnp.zeros_like(sum_ref)
            gram_ref[...] = jnp.zeros_like(gram_ref)

        x = x_ref[0]                                             # (Cin, TM)
        if ragged:  # zero the undefined tail columns of the boundary tile
            tile = pl.program_id(1) * tiles_per_split + pl.program_id(2)
            col = jax.lax.broadcasted_iota(jnp.int32, x.shape, 1)
            x = jnp.where(tile * TM + col < DHW, x, jnp.zeros_like(x))
        s = jnp.sum(x.astype(jnp.float32), axis=-1, keepdims=True)   # (Cin, 1)
        g = jax.lax.dot_general(                                     # (Cin, Cin)
            x, x, dimension_numbers=(((1,), (1,)), ((), ())),
            preferred_element_type=jnp.float32)
        sum_ref[...] += s[None, None]
        gram_ref[...] += g[None, None]

    sums, grams = pl.pallas_call(
        _stats_kernel,
        out_shape=(jax.ShapeDtypeStruct((N, nsplit, Cin, 1), jnp.float32),
                   jax.ShapeDtypeStruct((N, nsplit, Cin, Cin), jnp.float32)),
        grid_spec=pltpu.PrefetchScalarGridSpec(
            num_scalar_prefetch=0,
            grid=(N, nsplit, tiles_per_split),
            in_specs=[pl.BlockSpec(
                (1, Cin, TM),
                lambda n, p, t: (n, 0, p * tiles_per_split + t))],
            out_specs=[pl.BlockSpec((1, 1, Cin, 1), lambda n, p, t: (n, p, 0, 0)),
                       pl.BlockSpec((1, 1, Cin, Cin), lambda n, p, t: (n, p, 0, 0))]),
        compiler_params=pltpu.CompilerParams(
            dimension_semantics=("parallel", "parallel", "arbitrary"),
            vmem_limit_bytes=vmem_limit),
        cost_estimate=pl.CostEstimate(
            flops=2 * M * Cin * Cin + M * Cin,
            transcendentals=0,
            bytes_accessed=bytes_x + N * nsplit * Cin * (Cin + 1) * 4),
    )(x3d)

    # Tiny host-side reductions / BN fold (O(Cin^2 + Cin*Cout) work).
    S = jnp.sum(sums, axis=(0, 1))[:, 0]                      # (Cin,)
    G = jnp.sum(grams, axis=(0, 1))                           # (Cin, Cin)
    mean = (w2d @ S) / M                                      # (Cout,)
    e2 = jnp.einsum("oc,cd,od->o", w2d, G, w2d) / M           # (Cout,)  E[y^2]
    var = jnp.maximum(e2 - mean * mean, 0.0)                  # biased (training) var
    scale = gamma32[:, 0] * jax.lax.rsqrt(var + BN_EPS)       # (Cout,)
    w_eff = (w2d * scale[:, None]).astype(mxu_dtype)          # (Cout, Cin)
    b_eff = (beta32[:, 0] - scale * mean)[:, None]            # (Cout, 1) f32
    # TODO(synk): regime switch (compute y-stats and scale in place) when
    # Cin >> Cout would cut HBM traffic further; Gram form is better otherwise.

    # -------- pass 2: fused (BN-folded) matmul + bias + ReLU, one read/write ---
    def _apply_kernel(w_ref, b_ref, x_ref, o_ref):
        y = jnp.dot(w_ref[...], x_ref[0], preferred_element_type=jnp.float32)
        y = y + b_ref[...]
        o_ref[...] = jnp.maximum(y, 0.0).astype(o_ref.dtype)[None]

    out3d = pl.pallas_call(
        _apply_kernel,
        out_shape=jax.ShapeDtypeStruct((N, Cout, DHW), x_dtype),
        grid_spec=pltpu.PrefetchScalarGridSpec(
            num_scalar_prefetch=0,
            grid=(N, num_tiles),
            in_specs=[pl.BlockSpec((Cout, Cin), lambda n, t: (0, 0)),
                      pl.BlockSpec((Cout, 1), lambda n, t: (0, 0)),
                      pl.BlockSpec((1, Cin, TM), lambda n, t: (n, 0, t))],
            out_specs=pl.BlockSpec((1, Cout, TM), lambda n, t: (n, 0, t))),
        compiler_params=pltpu.CompilerParams(
            dimension_semantics=("parallel", "parallel"),
            vmem_limit_bytes=vmem_limit),
        cost_estimate=pl.CostEstimate(
            flops=2 * M * Cin * Cout + 2 * M * Cout,
            transcendentals=0,
            bytes_accessed=bytes_x + N * Cout * DHW * sz + (Cout * Cin + Cout) * 4),
    )(w_eff, b_eff, x3d)

    return out3d.reshape(N, Cout, D, H, W)


def fc_block_ref(x_ncdhw, weight, gamma, beta):
    """Pure-JAX reference mirroring PyTorch Conv3d(1x1x1)+BatchNorm3d(train)+ReLU."""
    Cout, Cin = weight.shape[0], weight.shape[1]
    y = jnp.einsum("ncdhw,oc->nodhw", x_ncdhw.astype(jnp.float32),
                   weight.reshape(Cout, Cin).astype(jnp.float32))
    mean = jnp.mean(y, axis=(0, 2, 3, 4), keepdims=True)
    var = jnp.mean((y - mean) ** 2, axis=(0, 2, 3, 4), keepdims=True)
    y_hat = (y - mean) * jax.lax.rsqrt(var + BN_EPS)
    out = y_hat * gamma.reshape(1, Cout, 1, 1, 1) + beta.reshape(1, Cout, 1, 1, 1)
    return jnp.maximum(out, 0.0)


if __name__ == "__main__":
    key = jax.random.PRNGKey(0)
    k_x, k_w, k_g, k_b, k_x2, k_x3 = jax.random.split(key, 6)

    N, Cin, Cout, D, H, W = 2, 4, 8, 16, 16, 16

    # Synthetic parameters matching PyTorch shapes (Conv3d weight (Cout,Cin,1,1,1),
    # no bias; BN affine gamma/beta perturbed so the fold path is exercised).
    weight = 0.1 * jax.random.normal(k_w, (Cout, Cin, 1, 1, 1), dtype=jnp.float32)
    gamma = 1.0 + 0.1 * jax.random.normal(k_g, (Cout,), dtype=jnp.float32)
    beta = 0.1 * jax.random.normal(k_b, (Cout,), dtype=jnp.float32)

    # 1) Small case -> single fused VMEM-resident kernel (fast path).
    x = jax.random.normal(k_x, (N, Cin, D, H, W), dtype=jnp.float32)
    out = jax.block_until_ready(fc_block_forward(x, weight, gamma, beta))
    ref = fc_block_ref(x, weight, gamma, beta)
    assert out.shape == (N, Cout, D, H, W)
    assert jnp.allclose(out, ref, atol=1e-4, rtol=1e-4), "fused path mismatch"

    # 2) Tiled streaming path with a ragged (non-128-divisible-by-TM) tail tile.
    x2 = jax.random.normal(k_x2, (2, Cin, 12, 12, 10), dtype=jnp.float32)  # DHW=1440
    out2 = jax.block_until_ready(
        fc_block_forward(x2, weight, gamma, beta, max_lane_tile=512, allow_fused=False))
    ref2 = fc_block_ref(x2, weight, gamma, beta)
    assert jnp.allclose(out2, ref2, atol=1e-3, rtol=1e-3), "tiled ragged mismatch"

    # 3) Tiled path exercising the 2-way spatial split of pass 1 (small batch).
    x3 = jax.random.normal(k_x3, (1, Cin, 16, 16, 8), dtype=jnp.float32)   # DHW=2048
    out3 = jax.block_until_ready(
        fc_block_forward(x3, weight, gamma, beta, max_lane_tile=512, allow_fused=False))
    ref3 = fc_block_ref(x3, weight, gamma, beta)
    assert jnp.allclose(out3, ref3, atol=1e-3, rtol=1e-3), "tiled split mismatch"

    # TODO(synk): BatchNorm3d running_mean/running_var buffer updates (training
    # side-effect, does not affect the forward output) are not modeled.
    print("KERNEL_OK")
</pallas_src>

<mosaic_0001>
module attributes {stable_mosaic.version = 11 : i64} {
  func.func @_fused_kernel(%arg0: i32, %arg1: memref<8x4xf32, #tpu.memory_space<vmem>>, %arg2: memref<8x1xf32, #tpu.memory_space<vmem>>, %arg3: memref<8x1xf32, #tpu.memory_space<vmem>>, %arg4: memref<2x4x4096xf32, #tpu.memory_space<vmem>>, %arg5: memref<2x8x4096xf32, #tpu.memory_space<vmem>>) attributes {dimension_semantics = [#tpu.dimension_semantics<arbitrary>], iteration_bounds = array<i64: 1>, scalar_prefetch = 0 : i64, scratch_operands = 0 : i64, tpu.core_type = #tpu.core_type<tc>, window_params = [{pipeline_mode = #tpu.pipeline_mode<synchronous>, transform_indices = @transform_0, window_bounds = array<i64: 8, 4>}, {pipeline_mode = #tpu.pipeline_mode<synchronous>, transform_indices = @transform_1, window_bounds = array<i64: 8, 1>}, {pipeline_mode = #tpu.pipeline_mode<synchronous>, transform_indices = @transform_2, window_bounds = array<i64: 8, 1>}, {pipeline_mode = #tpu.pipeline_mode<synchronous>, transform_indices = @transform_3, window_bounds = array<i64: 2, 4, 4096>}, {pipeline_mode = #tpu.pipeline_mode<synchronous>, transform_indices = @transform_4, window_bounds = array<i64: 2, 8, 4096>}]} {
    %c0 = arith.constant 0 : index
    %c0_0 = arith.constant 0 : index
    %0 = vector.load %arg1[%c0, %c0_0] : memref<8x4xf32, #tpu.memory_space<vmem>>, vector<8x4xf32>
    %c0_1 = arith.constant 0 : index
    %c0_2 = arith.constant 0 : index
    %c0_3 = arith.constant 0 : index
    %1 = vector.load %arg4[%c0_1, %c0_2, %c0_3] : memref<2x4x4096xf32, #tpu.memory_space<vmem>>, vector<1x4x4096xf32>
    %2 = vector.shape_cast %1 : vector<1x4x4096xf32> to vector<4x4096xf32>
    %cst = arith.constant dense<0.000000e+00> : vector<8x4096xf32>
    %3 = tpu.matmul %0, %2, %cst {dimension_numbers = #tpu.dot_dimension_numbers<[1], [0], [0], [1], [0, 0, 1, 1], [], []>} : vector<8x4xf32>, vector<4x4096xf32>, vector<8x4096xf32> -> vector<8x4096xf32>
    %c1 = arith.constant 1 : index
    %c0_4 = arith.constant 0 : index
    %c0_5 = arith.constant 0 : index
    %4 = vector.load %arg4[%c1, %c0_4, %c0_5] : memref<2x4x4096xf32, #tpu.memory_space<vmem>>, vector<1x4x4096xf32>
    %5 = vector.shape_cast %4 : vector<1x4x4096xf32> to vector<4x4096xf32>
    %cst_6 = arith.constant dense<0.000000e+00> : vector<8x4096xf32>
    %6 = tpu.matmul %0, %5, %cst_6 {dimension_numbers = #tpu.dot_dimension_numbers<[1], [0], [0], [1], [0, 0, 1, 1], [], []>} : vector<8x4xf32>, vector<4x4096xf32>, vector<8x4096xf32> -> vector<8x4096xf32>
    %cst_7 = arith.constant dense<0.000000e+00> : vector<8xf32>
    %7 = vector.multi_reduction <add>, %3, %cst_7 [1] : vector<8x4096xf32> to vector<8xf32>
    %8 = vector.shape_cast %7 : vector<8xf32> to vector<8x1xf32>
    %cst_8 = arith.constant 0.000000e+00 : f32
    %9 = vector.broadcast %cst_8 : f32 to vector<8x1xf32>
    %10 = arith.addf %9, %8 : vector<8x1xf32>
    %cst_9 = arith.constant dense<0.000000e+00> : vector<8xf32>
    %11 = vector.multi_reduction <add>, %6, %cst_9 [1] : vector<8x4096xf32> to vector<8xf32>
    %12 = vector.shape_cast %11 : vector<8xf32> to vector<8x1xf32>
    %13 = arith.addf %10, %12 : vector<8x1xf32>
    %cst_10 = arith.constant 1.22070313E-4 : f32
    %14 = vector.broadcast %cst_10 : f32 to vector<8x1xf32>
    %15 = arith.mulf %13, %14 : vector<8x1xf32>
    %16 = vector.broadcast %15 : vector<8x1xf32> to vector<8x4096xf32>
    %17 = arith.subf %3, %16 : vector<8x4096xf32>
    %18 = arith.mulf %17, %17 : vector<8x4096xf32>
    %cst_11 = arith.constant dense<0.000000e+00> : vector<8xf32>
    %19 = vector.multi_reduction <add>, %18, %cst_11 [1] : vector<8x4096xf32> to vector<8xf32>
    %20 = vector.shape_cast %19 : vector<8xf32> to vector<8x1xf32>
    %cst_12 = arith.constant 0.000000e+00 : f32
    %21 = vector.broadcast %cst_12 : f32 to vector<8x1xf32>
    %22 = arith.addf %21, %20 : vector<8x1xf32>
    %23 = vector.broadcast %15 : vector<8x1xf32> to vector<8x4096xf32>
    %24 = arith.subf %6, %23 : vector<8x4096xf32>
    %25 = arith.mulf %24, %24 : vector<8x4096xf32>
    %cst_13 = arith.constant dense<0.000000e+00> : vector<8xf32>
    %26 = vector.multi_reduction <add>, %25, %cst_13 [1] : vector<8x4096xf32> to vector<8xf32>
    %27 = vector.shape_cast %26 : vector<8xf32> to vector<8x1xf32>
    %28 = arith.addf %22, %27 : vector<8x1xf32>
    %cst_14 = arith.constant 1.22070313E-4 : f32
    %29 = vector.broadcast %cst_14 : f32 to vector<8x1xf32>
    %30 = arith.mulf %28, %29 : vector<8x1xf32>
    %c0_15 = arith.constant 0 : index
    %c0_16 = arith.constant 0 : index
    %31 = vector.load %arg2[%c0_15, %c0_16] : memref<8x1xf32, #tpu.memory_space<vmem>>, vector<8x1xf32>
    %cst_17 = arith.constant 9.99999974E-6 : f32
    %32 = vector.broadcast %cst_17 : f32 to vector<8x1xf32>
    %33 = arith.addf %30, %32 : vector<8x1xf32>
    %34 = math.rsqrt %33 : vector<8x1xf32>
    %35 = arith.mulf %31, %34 : vector<8x1xf32>
    %c0_18 = arith.constant 0 : index
    %c0_19 = arith.constant 0 : index
    %36 = vector.load %arg3[%c0_18, %c0_19] : memref<8x1xf32, #tpu.memory_space<vmem>>, vector<8x1xf32>
    %37 = arith.mulf %35, %15 : vector<8x1xf32>
    %38 = arith.subf %36, %37 : vector<8x1xf32>
    %39 = vector.broadcast %35 : vector<8x1xf32> to vector<8x4096xf32>
    %40 = arith.mulf %3, %39 : vector<8x4096xf32>
    %41 = vector.broadcast %38 : vector<8x1xf32> to vector<8x4096xf32>
    %42 = arith.addf %40, %41 : vector<8x4096xf32>
    %cst_20 = arith.constant 0.000000e+00 : f32
    %43 = vector.broadcast %cst_20 : f32 to vector<8x4096xf32>
    %44 = arith.maximumf %42, %43 : vector<8x4096xf32>
    %c0_21 = arith.constant 0 : index
    %c0_22 = arith.constant 0 : index
    %c0_23 = arith.constant 0 : index
    %45 = vector.load %arg5[%c0_21, %c0_22, %c0_23] : memref<2x8x4096xf32, #tpu.memory_space<vmem>>, vector<1x8x4096xf32>
    %46 = vector.shape_cast %45 : vector<1x8x4096xf32> to vector<8x4096xf32>
    %47 = vector.shape_cast %44 : vector<8x4096xf32> to vector<1x8x4096xf32>
    tpu.vector_store %arg5[%c0_21, %c0_22, %c0_23], %47 {strides = array<i32>} : memref<2x8x4096xf32, #tpu.memory_space<vmem>>, vector<1x8x4096xf32>,
    %48 = vector.broadcast %35 : vector<8x1xf32> to vector<8x4096xf32>
    %49 = arith.mulf %6, %48 : vector<8x4096xf32>
    %50 = vector.broadcast %38 : vector<8x1xf32> to vector<8x4096xf32>
    %51 = arith.addf %49, %50 : vector<8x4096xf32>
    %cst_24 = arith.constant 0.000000e+00 : f32
    %52 = vector.broadcast %cst_24 : f32 to vector<8x4096xf32>
    %53 = arith.maximumf %51, %52 : vector<8x4096xf32>
    %c1_25 = arith.constant 1 : index
    %c0_26 = arith.constant 0 : index
    %c0_27 = arith.constant 0 : index
    %54 = vector.load %arg5[%c1_25, %c0_26, %c0_27] : memref<2x8x4096xf32, #tpu.memory_space<vmem>>, vector<1x8x4096xf32>
    %55 = vector.shape_cast %54 : vector<1x8x4096xf32> to vector<8x4096xf32>
    %56 = vector.shape_cast %53 : vector<8x4096xf32> to vector<1x8x4096xf32>
    tpu.vector_store %arg5[%c1_25, %c0_26, %c0_27], %56 {strides = array<i32>} : memref<2x8x4096xf32, #tpu.memory_space<vmem>>, vector<1x8x4096xf32>,
    return
  }
  func.func @transform_0(%arg0: i32) -> (i32, i32) {
    %c0_i32 = arith.constant 0 : i32
    %c0_i32_0 = arith.constant 0 : i32
    %c0_i32_1 = arith.constant 0 : i32
    return %c0_i32, %c0_i32_0 : i32, i32
  }
  func.func @transform_1(%arg0: i32) -> (i32, i32) {
    %c0_i32 = arith.constant 0 : i32
    %c0_i32_0 = arith.constant 0 : i32
    %c0_i32_1 = arith.constant 0 : i32
    return %c0_i32, %c0_i32_0 : i32, i32
  }
  func.func @transform_2(%arg0: i32) -> (i32, i32) {
    %c0_i32 = arith.constant 0 : i32
    %c0_i32_0 = arith.constant 0 : i32
    %c0_i32_1 = arith.constant 0 : i32
    return %c0_i32, %c0_i32_0 : i32, i32
  }
  func.func @transform_3(%arg0: i32) -> (i32, i32, i32) {
    %c0_i32 = arith.constant 0 : i32
    %c0_i32_0 = arith.constant 0 : i32
    %c0_i32_1 = arith.constant 0 : i32
    %c0_i32_2 = arith.constant 0 : i32
    return %c0_i32, %c0_i32_0, %c0_i32_1 : i32, i32, i32
  }
  func.func @transform_4(%arg0: i32) -> (i32, i32, i32) {
    %c0_i32 = arith.constant 0 : i32
    %c0_i32_0 = arith.constant 0 : i32
    %c0_i32_1 = arith.constant 0 : i32
    %c0_i32_2 = arith.constant 0 : i32
    return %c0_i32, %c0_i32_0, %c0_i32_1 : i32, i32, i32
  }
}

</mosaic_0001>

<llo_original>
// kernel: tpu_custom_call.1
$region0: #{tpu_custom_call.1}
  #allocation0 [shape = 'u32[]', space=smem, size = 0x4, offset = 0x4, fixed_abs, tag = 'smem constant byte address 0x4 - core index']
  #allocation1 [shape = 'u32[144,128]{1,0:T(1,128)}', space=vmem, size = 0x12000, scoped, tag = 'internal scratch']
  %s0 = inlined_call_operand.hbm [shape: f32[8,4], index: 0, kind: input, shape index: {}]
  %s1 = inlined_call_operand.hbm [shape: f32[8,1], index: 1, kind: input, shape index: {}]
  %s2 = inlined_call_operand.hbm [shape: f32[8,1], index: 2, kind: input, shape index: {}]
  %s3 = inlined_call_operand.hbm [shape: f32[2,4,4096], index: 3, kind: input, shape index: {}]
  %s4 = inlined_call_operand.hbm [shape: f32[2,8,4096], index: 4, kind: output, shape index: {}]
  %s5 = sld [smem:[#allocation0]]
  $region42: #{tpu_custom_call.1} parent=0
    _
  %s7 = ssub.s32 1, %s5
  %s8 = scalar_select 0, %s7, %s5
  $region1: #{tpu_custom_call.1} parent=0
    #allocation2 [shape = 'u8[4096]{0}', space=vmem, size = 0x1000, scoped, tag = 'input window, operand 0, single buffered']
    #allocation3 [shape = 's32[1]{0}', space=sflag, size = 0x4, scoped, tag = 'scoped memory for tpu_custom_call.1']
    #allocation4 [shape = 's32[1]{0}', space=sflag, size = 0x4, scoped, tag = 'scoped memory for tpu_custom_call.1']
    #allocation5 [shape = 'u8[4096]{0}', space=vmem, size = 0x1000, scoped, tag = 'input window, operand 1, single buffered']
    #allocation6 [shape = 's32[1]{0}', space=sflag, size = 0x4, scoped, tag = 'scoped memory for tpu_custom_call.1']
    #allocation7 [shape = 'u8[4096]{0}', space=vmem, size = 0x1000, scoped, tag = 'input window, operand 2, single buffered']
    #allocation8 [shape = 'u8[131072]{0}', space=vmem, size = 0x20000, scoped, tag = 'input window, operand 3, single buffered']
    #allocation9 [shape = 's32[1]{0}', space=sflag, size = 0x4, scoped, tag = 'scoped memory for tpu_custom_call.1']
    #allocation10 [shape = 'u8[262144]{0}', space=vmem, size = 0x40000, scoped, tag = 'output window, operand 0, single buffered']
    %9 = vsyncpa [#allocation3], 0
    %10 = vsyncpa [#allocation6], 0
    %11 = vsyncpa [#allocation9], 0
    %12 = vsyncpa [#allocation4], 0
    // Predicated region
    $region2: #{tpu_custom_call.1} parent=1 // pred_check
      _
    $region3: #{tpu_custom_call.1} parent=1 // pred_check_branch
      %14 = sbr.rel (0) target = $region5
    $region4: #{tpu_custom_call.1} parent=1 // pred_region
      %s16 = ssub.s32 128, 128
      %17 = vsyncadd [#allocation3], %s16
      %s19 = sshll.u32 [#allocation2], 4
      %s20 = int_to_ptr.vmem [resolvable:$true] %s19
      %22 = dma.hbm_to_vmem [thread:$0]  %s0, 128, %s20, [#allocation3]
    $region5: #{tpu_custom_call.1} parent=1 // pred_fallthru
      _
    // Predicated region
    $region6: #{tpu_custom_call.1} parent=1 // pred_check
      _
    $region7: #{tpu_custom_call.1} parent=1 // pred_check_branch
      %24 = sbr.rel (0) target = $region9
    $region8: #{tpu_custom_call.1} parent=1 // pred_region
      %s26 = ssub.s32 128, 128
      %27 = vsyncadd [#allocation6], %s26
      %s29 = sshll.u32 [#allocation5], 4
      %s30 = int_to_ptr.vmem [resolvable:$true] %s29
      %32 = dma.hbm_to_vmem [thread:$0]  %s1, 128, %s30, [#allocation6]
    $region9: #{tpu_custom_call.1} parent=1 // pred_fallthru
      _
    // Predicated region
    $region10: #{tpu_custom_call.1} parent=1 // pred_check
      _
    $region11: #{tpu_custom_call.1} parent=1 // pred_check_branch
      %34 = sbr.rel (0) target = $region13
    $region12: #{tpu_custom_call.1} parent=1 // pred_region
      %s36 = ssub.s32 128, 128
      %37 = vsyncadd [#allocation6], %s36
      %s39 = sshll.u32 [#allocation7], 4
      %s40 = int_to_ptr.vmem [resolvable:$true] %s39
      %42 = dma.hbm_to_vmem [thread:$0]  %s2, 128, %s40, [#allocation6]
    $region13: #{tpu_custom_call.1} parent=1 // pred_fallthru
      _
    // Predicated region
    $region14: #{tpu_custom_call.1} parent=1 // pred_check
      _
    $region15: #{tpu_custom_call.1} parent=1 // pred_check_branch
      %44 = sbr.rel (0) target = $region17
    $region16: #{tpu_custom_call.1} parent=1 // pred_region
      %s46 = ssub.s32 4096, 4096
      %47 = vsyncadd [#allocation9], %s46
      %s48 = sshll.u32 [#allocation8], 4
      %s49 = int_to_ptr.vmem [resolvable:$true] %s48
      %54 = dma.hbm_to_vmem [thread:$0]  %s3, 4096, %s49, [#allocation9], 2048, 2048, 128
    $region17: #{tpu_custom_call.1} parent=1 // pred_fallthru
      _
    // Predicated region
    $region18: #{tpu_custom_call.1} parent=1 // pred_check
      _
    $region19: #{tpu_custom_call.1} parent=1 // pred_check_branch
      %56 = sbr.rel (0) target = $region21
    $region20: #{tpu_custom_call.1} parent=1 // pred_region
      %57 = dma.done [#allocation3], 128
    $region21: #{tpu_custom_call.1} parent=1 // pred_fallthru
      _
    // Predicated region
    $region22: #{tpu_custom_call.1} parent=1 // pred_check
      _
    $region23: #{tpu_custom_call.1} parent=1 // pred_check_branch
      %59 = sbr.rel (0) target = $region25
    $region24: #{tpu_custom_call.1} parent=1 // pred_region
      %60 = dma.done [#allocation6], 128
    $region25: #{tpu_custom_call.1} parent=1 // pred_fallthru
      _
    // Predicated region
    $region26: #{tpu_custom_call.1} parent=1 // pred_check
      _
    $region27: #{tpu_custom_call.1} parent=1 // pred_check_branch
      %62 = sbr.rel (0) target = $region29
    $region28: #{tpu_custom_call.1} parent=1 // pred_region
      %63 = dma.done [#allocation6], 128
    $region29: #{tpu_custom_call.1} parent=1 // pred_fallthru
      _
    // Predicated region
    $region30: #{tpu_custom_call.1} parent=1 // pred_check
      _
    $region31: #{tpu_custom_call.1} parent=1 // pred_check_branch
      %65 = sbr.rel (0) target = $region33
    $region32: #{tpu_custom_call.1} parent=1 // pred_region
      %66 = dma.done [#allocation9], 4096
    $region33: #{tpu_custom_call.1} parent=1 // pred_fallthru
      _
    %v67 = vld [vmem:[#allocation2] sm:$0xff]
    %v68 = vld [vmem:[#allocation8] sm:$0xff]
    %v69 = vld [vmem:[#allocation8 + $0x8] sm:$0xff]
    %v70 = vld [vmem:[#allocation8 + $0x10] sm:$0xff]
    %v71 = vld [vmem:[#allocation8 + $0x18] sm:$0xff]
    %v72 = vld [vmem:[#allocation8 + $0x20] sm:$0xff]
    %v73 = vld [vmem:[#allocation8 + $0x28] sm:$0xff]
    %v74 = vld [vmem:[#allocation8 + $0x30] sm:$0xff]
    %v75 = vld [vmem:[#allocation8 + $0x38] sm:$0xff]
    %v76 = vld [vmem:[#allocation8 + $0x40] sm:$0xff]
    %v77 = vld [vmem:[#allocation8 + $0x48] sm:$0xff]
    %v78 = vld [vmem:[#allocation8 + $0x50] sm:$0xff]
    %v79 = vld [vmem:[#allocation8 + $0x58] sm:$0xff]
    %v80 = vld [vmem:[#allocation8 + $0x60] sm:$0xff]
    %v81 = vld [vmem:[#allocation8 + $0x68] sm:$0xff]
    %v82 = vld [vmem:[#allocation8 + $0x70] sm:$0xff]
    %v83 = vld [vmem:[#allocation8 + $0x78] sm:$0xff]
    %v100 = vcombine.high %v68, %v68
    %v101 = vcombine.high %v69, %v69
    %v102 = vcombine.high %v70, %v70
    %v103 = vcombine.high %v71, %v71
    %v104 = vcombine.high %v72, %v72
    %v105 = vcombine.high %v73, %v73
    %v106 = vcombine.high %v74, %v74
    %v107 = vcombine.high %v75, %v75
    %v108 = vcombine.high %v76, %v76
    %v109 = vcombine.high %v77, %v77
    %v110 = vcombine.high %v78, %v78
    %v111 = vcombine.high %v79, %v79
    %v112 = vcombine.high %v80, %v80
    %v113 = vcombine.high %v81, %v81
    %v114 = vcombine.high %v82, %v82
    %v115 = vcombine.high %v83, %v83
    %vm116 = vcmask 31744
    %v118 = vsel %vm116, %v67, 0
    %vm120 = vcmask 1043456
    %v121 = vsel %vm120, %v68, 0
    %v123 = vsel %vm120, %v100, 0
    %v125 = vsel %vm120, %v69, 0
    %v127 = vsel %vm120, %v101, 0
    %v129 = vsel %vm120, %v70, 0
    %v131 = vsel %vm120, %v102, 0
    %v133 = vsel %vm120, %v71, 0
    %v135 = vsel %vm120, %v103, 0
    %v137 = vsel %vm120, %v72, 0
    %v139 = vsel %vm120, %v104, 0
    %v141 = vsel %vm120, %v73, 0
    %v143 = vsel %vm120, %v105, 0
    %v145 = vsel %vm120, %v74, 0
    %v147 = vsel %vm120, %v106, 0
    %v149 = vsel %vm120, %v75, 0
    %v151 = vsel %vm120, %v107, 0
    %v153 = vsel %vm120, %v76, 0
    %v155 = vsel %vm120, %v108, 0
    %v157 = vsel %vm120, %v77, 0
    %v159 = vsel %vm120, %v109, 0
    %v161 = vsel %vm120, %v78, 0
    %v163 = vsel %vm120, %v110, 0
    %v165 = vsel %vm120, %v79, 0
    %v167 = vsel %vm120, %v111, 0
    %v169 = vsel %vm120, %v80, 0
    %v171 = vsel %vm120, %v112, 0
    %v173 = vsel %vm120, %v81, 0
    %v175 = vsel %vm120, %v113, 0
    %v177 = vsel %vm120, %v82, 0
    %v179 = vsel %vm120, %v114, 0
    %v181 = vsel %vm120, %v83, 0
    %v183 = vsel %vm120, %v115, 0
    %185 = vmatprep.subr.mxu0 %v123
    %186 = vmatpush1.msra.mxu0 %v121
    %187 = vmatprep.subr.mxu0 0.0
    %188 = vmatpush1.msra.mxu0 0.0
    %189 = vmatprep.subr.mxu0 0.0
    %190 = vmatpush1.msra.mxu0 0.0
    %191 = vmatprep.subr.mxu0 0.0
    %192 = vmatpush1.msra.mxu0 0.0
    %193 = vmatprep.subr.mxu0 0.0
    %194 = vmatpush1.msra.mxu0 0.0
    %195 = vmatprep.subr.mxu0 0.0
    %196 = vmatpush1.msra.mxu0 0.0
    %197 = vmatprep.subr.mxu0 0.0
    %198 = vmatpush1.msra.mxu0 0.0
    %199 = vmatprep.subr.mxu0 0.0
    %200 = vmatpush1.msra.mxu0 0.0
    %201 = vmatprep.subr.mxu0 0.0
    %202 = vmatpush1.msra.mxu0 0.0
    %203 = vmatprep.subr.mxu0 0.0
    %204 = vmatpush1.msra.mxu0 0.0
    %205 = vmatprep.subr.mxu0 0.0
    %206 = vmatpush1.msra.mxu0 0.0
    %207 = vmatprep.subr.mxu0 0.0
    %208 = vmatpush1.msra.mxu0 0.0
    %209 = vmatprep.subr.mxu0 0.0
    %210 = vmatpush1.msra.mxu0 0.0
    %211 = vmatprep.subr.mxu0 0.0
    %212 = vmatpush1.msra.mxu0 0.0
    %213 = vmatprep.subr.mxu0 0.0
    %214 = vmatpush1.msra.mxu0 0.0
    %215 = vmatprep.subr.mxu0 0.0
    %216 = vmatpush1.msra.mxu0 0.0
    %217 = vmatprep.subr.mxu0 0.0
    %218 = vmatpush1.msra.mxu0 0.0
    %219 = vmatprep.subr.mxu0 0.0
    %220 = vmatpush1.msra.mxu0 0.0
    %221 = vmatprep.subr.mxu0 0.0
    %222 = vmatpush1.msra.mxu0 0.0
    %223 = vmatprep.subr.mxu0 0.0
    %224 = vmatpush1.msra.mxu0 0.0
    %225 = vmatprep.subr.mxu0 0.0
    %226 = vmatpush1.msra.mxu0 0.0
    %227 = vmatprep.subr.mxu0 0.0
    %228 = vmatpush1.msra.mxu0 0.0
    %229 = vmatprep.subr.mxu0 0.0
    %230 = vmatpush1.msra.mxu0 0.0
    %231 = vmatprep.subr.mxu0 0.0
    %232 = vmatpush1.msra.mxu0 0.0
    %233 = vmatprep.subr.mxu0 0.0
    %234 = vmatpush1.msra.mxu0 0.0
    %235 = vmatprep.subr.mxu0 0.0
    %236 = vmatpush1.msra.mxu0 0.0
    %237 = vmatprep.subr.mxu0 0.0
    %238 = vmatpush1.msra.mxu0 0.0
    %239 = vmatprep.subr.mxu0 0.0
    %240 = vmatpush1.msra.mxu0 0.0
    %241 = vmatprep.subr.mxu0 0.0
    %242 = vmatpush1.msra.mxu0 0.0
    %243 = vmatprep.subr.mxu0 0.0
    %244 = vmatpush1.msra.mxu0 0.0
    %245 = vmatprep.subr.mxu0 0.0
    %246 = vmatpush1.msra.mxu0 0.0
    %247 = vmatprep.subr.mxu0 0.0
    %248 = vmatpush1.msra.mxu0 0.0
    %249 = vmatprep.mubr.f32.mxu0 0.0
    %250 = vmatmul.mubr.f32.gmra.mrb[0].mxu0 %v118
    %v251 = vpop.f32.mrb[0].mxu0
    %v252 = vadd.f32 0.0, %v251
    %v253 = vpop.f32.mrb[0].mxu0
    %v254 = vadd.f32 0.0, %v253
    %255 = vdwg.mxu0
    %256 = vmatprep.subr.mxu0 %v127
    %257 = vmatpush1.msra.mxu0 %v125
    %258 = vmatprep.subr.mxu0 0.0
    %259 = vmatpush1.msra.mxu0 0.0
    %260 = vmatprep.subr.mxu0 0.0
    %261 = vmatpush1.msra.mxu0 0.0
    %262 = vmatprep.subr.mxu0 0.0
    %263 = vmatpush1.msra.mxu0 0.0
    %264 = vmatprep.subr.mxu0 0.0
    %265 = vmatpush1.msra.mxu0 0.0
    %266 = vmatprep.subr.mxu0 0.0
    %267 = vmatpush1.msra.mxu0 0.0
    %268 = vmatprep.subr.mxu0 0.0
    %269 = vmatpush1.msra.mxu0 0.0
    %270 = vmatprep.subr.mxu0 0.0
    %271 = vmatpush1.msra.mxu0 0.0
    %272 = vmatprep.subr.mxu0 0.0
    %273 = vmatpush1.msra.mxu0 0.0
    %274 = vmatprep.subr.mxu0 0.0
    %275 = vmatpush1.msra.mxu0 0.0
    %276 = vmatprep.subr.mxu0 0.0
    %277 = vmatpush1.msra.mxu0 0.0
    %278 = vmatprep.subr.mxu0 0.0
    %279 = vmatpush1.msra.mxu0 0.0
    %280 = vmatprep.subr.mxu0 0.0
    %281 = vmatpush1.msra.mxu0 0.0
    %282 = vmatprep.subr.mxu0 0.0
    %283 = vmatpush1.msra.mxu0 0.0
    %284 = vmatprep.subr.mxu0 0.0
    %285 = vmatpush1.msra.mxu0 0.0
    %286 = vmatprep.subr.mxu0 0.0
    %287 = vmatpush1.msra.mxu0 0.0
    %288 = vmatprep.subr.mxu0 0.0
    %289 = vmatpush1.msra.mxu0 0.0
    %290 = vmatprep.subr.mxu0 0.0
    %291 = vmatpush1.msra.mxu0 0.0
    %292 = vmatprep.subr.mxu0 0.0
    %293 = vmatpush1.msra.mxu0 0.0
    %294 = vmatprep.subr.mxu0 0.0
    %295 = vmatpush1.msra.mxu0 0.0
    %296 = vmatprep.subr.mxu0 0.0
    %297 = vmatpush1.msra.mxu0 0.0
    %298 = vmatprep.subr.mxu0 0.0
    %299 = vmatpush1.msra.mxu0 0.0
    %300 = vmatprep.subr.mxu0 0.0
    %301 = vmatpush1.msra.mxu0 0.0
    %302 = vmatprep.subr.mxu0 0.0
    %303 = vmatpush1.msra.mxu0 0.0
    %304 = vmatprep.subr.mxu0 0.0
    %305 = vmatpush1.msra.mxu0 0.0
    %306 = vmatprep.subr.mxu0 0.0
    %307 = vmatpush1.msra.mxu0 0.0
    %308 = vmatprep.subr.mxu0 0.0
    %309 = vmatpush1.msra.mxu0 0.0
    %310 = vmatprep.subr.mxu0 0.0
    %311 = vmatpush1.msra.mxu0 0.0
    %312 = vmatprep.subr.mxu0 0.0
    %313 = vmatpush1.msra.mxu0 0.0
    %314 = vmatprep.subr.mxu0 0.0
    %315 = vmatpush1.msra.mxu0 0.0
    %316 = vmatprep.subr.mxu0 0.0
    %317 = vmatpush1.msra.mxu0 0.0
    %318 = vmatprep.subr.mxu0 0.0
    %319 = vmatpush1.msra.mxu0 0.0
    %320 = vmatprep.mubr.f32.mxu0 0.0
    %321 = vmatmul.mubr.f32.gmra.mrb[0].mxu0 %v118
    %v322 = vpop.f32.mrb[0].mxu0
    %v323 = vadd.f32 0.0, %v322
    %v324 = vpop.f32.mrb[0].mxu0
    %v325 = vadd.f32 0.0, %v324
    %326 = vdwg.mxu0
    %327 = vmatprep.subr.mxu0 %v131
    %328 = vmatpush1.msra.mxu0 %v129
    %329 = vmatprep.subr.mxu0 0.0
    %330 = vmatpush1.msra.mxu0 0.0
    %331 = vmatprep.subr.mxu0 0.0
    %332 = vmatpush1.msra.mxu0 0.0
    %333 = vmatprep.subr.mxu0 0.0
    %334 = vmatpush1.msra.mxu0 0.0
    %335 = vmatprep.subr.mxu0 0.0
    %336 = vmatpush1.msra.mxu0 0.0
    %337 = vmatprep.subr.mxu0 0.0
    %338 = vmatpush1.msra.mxu0 0.0
    %339 = vmatprep.subr.mxu0 0.0
    %340 = vmatpush1.msra.mxu0 0.0
    %341 = vmatprep.subr.mxu0 0.0
    %342 = vmatpush1.msra.mxu0 0.0
    %343 = vmatprep.subr.mxu0 0.0
    %344 = vmatpush1.msra.mxu0 0.0
    %345 = vmatprep.subr.mxu0 0.0
    %346 = vmatpush1.msra.mxu0 0.0
    %347 = vmatprep.subr.mxu0 0.0
    %348 = vmatpush1.msra.mxu0 0.0
    %349 = vmatprep.subr.mxu0 0.0
    %350 = vmatpush1.msra.mxu0 0.0
    %351 = vmatprep.subr.mxu0 0.0
    %352 = vmatpush1.msra.mxu0 0.0
    %353 = vmatprep.subr.mxu0 0.0
    %354 = vmatpush1.msra.mxu0 0.0
    %355 = vmatprep.subr.mxu0 0.0
    %356 = vmatpush1.msra.mxu0 0.0
    %357 = vmatprep.subr.mxu0 0.0
    %358 = vmatpush1.msra.mxu0 0.0
    %359 = vmatprep.subr.mxu0 0.0
    %360 = vmatpush1.msra.mxu0 0.0
    %361 = vmatprep.subr.mxu0 0.0
    %362 = vmatpush1.msra.mxu0 0.0
    %363 = vmatprep.subr.mxu0 0.0
    %364 = vmatpush1.msra.mxu0 0.0
    %365 = vmatprep.subr.mxu0 0.0
    %366 = vmatpush1.msra.mxu0 0.0
    %367 = vmatprep.subr.mxu0 0.0
    %368 = vmatpush1.msra.mxu0 0.0
    %369 = vmatprep.subr.mxu0 0.0
    %370 = vmatpush1.msra.mxu0 0.0
    %371 = vmatprep.subr.mxu0 0.0
    %372 = vmatpush1.msra.mxu0 0.0
    %373 = vmatprep.subr.mxu0 0.0
    %374 = vmatpush1.msra.mxu0 0.0
    %375 = vmatprep.subr.mxu0 0.0
    %376 = vmatpush1.msra.mxu0 0.0
    %377 = vmatprep.subr.mxu0 0.0
    %378 = vmatpush1.msra.mxu0 0.0
    %379 = vmatprep.subr.mxu0 0.0
    %380 = vmatpush1.msra.mxu0 0.0
    %381 = vmatprep.subr.mxu0 0.0
    %382 = vmatpush1.msra.mxu0 0.0
    %383 = vmatprep.subr.mxu0 0.0
    %384 = vmatpush1.msra.mxu0 0.0
    %385 = vmatprep.subr.mxu0 0.0
    %386 = vmatpush1.msra.mxu0 0.0
    %387 = vmatprep.subr.mxu0 0.0
    %388 = vmatpush1.msra.mxu0 0.0
    %389 = vmatprep.subr.mxu0 0.0
    %390 = vmatpush1.msra.mxu0 0.0
    %391 = vmatprep.mubr.f32.mxu0 0.0
    %392 = vmatmul.mubr.f32.gmra.mrb[0].mxu0 %v118
    %v393 = vpop.f32.mrb[0].mxu0
    %v394 = vadd.f32 0.0, %v393
    %v395 = vpop.f32.mrb[0].mxu0
    %v396 = vadd.f32 0.0, %v395
    %397 = vdwg.mxu0
    %398 = vmatprep.subr.mxu0 %v135
    %399 = vmatpush1.msra.mxu0 %v133
    %400 = vmatprep.subr.mxu0 0.0
    %401 = vmatpush1.msra.mxu0 0.0
    %402 = vmatprep.subr.mxu0 0.0
    %403 = vmatpush1.msra.mxu0 0.0
    %404 = vmatprep.subr.mxu0 0.0
    %405 = vmatpush1.msra.mxu0 0.0
    %406 = vmatprep.subr.mxu0 0.0
    %407 = vmatpush1.msra.mxu0 0.0
    %408 = vmatprep.subr.mxu0 0.0
    %409 = vmatpush1.msra.mxu0 0.0
    %410 = vmatprep.subr.mxu0 0.0
    %411 = vmatpush1.msra.mxu0 0.0
    %412 = vmatprep.subr.mxu0 0.0
    %413 = vmatpush1.msra.mxu0 0.0
    %414 = vmatprep.subr.mxu0 0.0
    %415 = vmatpush1.msra.mxu0 0.0
    %416 = vmatprep.subr.mxu0 0.0
    %417 = vmatpush1.msra.mxu0 0.0
    %418 = vmatprep.subr.mxu0 0.0
    %419 = vmatpush1.msra.mxu0 0.0
    %420 = vmatprep.subr.mxu0 0.0
    %421 = vmatpush1.msra.mxu0 0.0
    %422 = vmatprep.subr.mxu0 0.0
    %423 = vmatpush1.msra.mxu0 0.0
    %424 = vmatprep.subr.mxu0 0.0
    %425 = vmatpush1.msra.mxu0 0.0
    %426 = vmatprep.subr.mxu0 0.0
    %427 = vmatpush1.msra.mxu0 0.0
    %428 = vmatprep.subr.mxu0 0.0
    %429 = vmatpush1.msra.mxu0 0.0
    %430 = vmatprep.subr.mxu0 0.0
    %431 = vmatpush1.msra.mxu0 0.0
    %432 = vmatprep.subr.mxu0 0.0
    %433 = vmatpush1.msra.mxu0 0.0
    %434 = vmatprep.subr.mxu0 0.0
    %435 = vmatpush1.msra.mxu0 0.0
    %436 = vmatprep.subr.mxu0 0.0
    %437 = vmatpush1.msra.mxu0 0.0
    %438 = vmatprep.subr.mxu0 0.0
    %439 = vmatpush1.msra.mxu0 0.0
    %440 = vmatprep.subr.mxu0 0.0
    %441 = vmatpush1.msra.mxu0 0.0
    %442 = vmatprep.subr.mxu0 0.0
    %443 = vmatpush1.msra.mxu0 0.0
    %444 = vmatprep.subr.mxu0 0.0
    %445 = vmatpush1.msra.mxu0 0.0
    %446 = vmatprep.subr.mxu0 0.0
    %447 = vmatpush1.msra.mxu0 0.0
    %448 = vmatprep.subr.mxu0 0.0
    %449 = vmatpush1.msra.mxu0 0.0
    %450 = vmatprep.subr.mxu0 0.0
    %451 = vmatpush1.msra.mxu0 0.0
    %452 = vmatprep.subr.mxu0 0.0
    %453 = vmatpush1.msra.mxu0 0.0
    %454 = vmatprep.subr.mxu0 0.0
    %455 = vmatpush1.msra.mxu0 0.0
    %456 = vmatprep.subr.mxu0 0.0
    %457 = vmatpush1.msra.mxu0 0.0
    %458 = vmatprep.subr.mxu0 0.0
    %459 = vmatpush1.msra.mxu0 0.0
    %460 = vmatprep.subr.mxu0 0.0
    %461 = vmatpush1.msra.mxu0 0.0
    %462 = vmatprep.mubr.f32.mxu0 0.0
    %463 = vmatmul.mubr.f32.gmra.mrb[0].mxu0 %v118
    %v464 = vpop.f32.mrb[0].mxu0
    %v465 = vadd.f32 0.0, %v464
    %v466 = vpop.f32.mrb[0].mxu0
    %v467 = vadd.f32 0.0, %v466
    %468 = vdwg.mxu0
    %469 = vmatprep.subr.mxu0 %v139
    %470 = vmatpush1.msra.mxu0 %v137
    %471 = vmatprep.subr.mxu0 0.0
    %472 = vmatpush1.msra.mxu0 0.0
    %473 = vmatprep.subr.mxu0 0.0
    %474 = vmatpush1.msra.mxu0 0.0
    %475 = vmatprep.subr.mxu0 0.0
    %476 = vmatpush1.msra.mxu0 0.0
    %477 = vmatprep.subr.mxu0 0.0
    %478 = vmatpush1.msra.mxu0 0.0
    %479 = vmatprep.subr.mxu0 0.0
    %480 = vmatpush1.msra.mxu0 0.0
    %481 = vmatprep.subr.mxu0 0.0
    %482 = vmatpush1.msra.mxu0 0.0
    %483 = vmatprep.subr.mxu0 0.0
    %484 = vmatpush1.msra.mxu0 0.0
    %485 = vmatprep.subr.mxu0 0.0
    %486 = vmatpush1.msra.mxu0 0.0
    %487 = vmatprep.subr.mxu0 0.0
    %488 = vmatpush1.msra.mxu0 0.0
    %489 = vmatprep.subr.mxu0 0.0
    %490 = vmatpush1.msra.mxu0 0.0
    %491 = vmatprep.subr.mxu0 0.0
    %492 = vmatpush1.msra.mxu0 0.0
    %493 = vmatprep.subr.mxu0 0.0
    %494 = vmatpush1.msra.mxu0 0.0
    %495 = vmatprep.subr.mxu0 0.0
    %496 = vmatpush1.msra.mxu0 0.0
    %497 = vmatprep.subr.mxu0 0.0
    %498 = vmatpush1.msra.mxu0 0.0
    %499 = vmatprep.subr.mxu0 0.0
    %500 = vmatpush1.msra.mxu0 0.0
    %501 = vmatprep.subr.mxu0 0.0
    %502 = vmatpush1.msra.mxu0 0.0
    %503 = vmatprep.subr.mxu0 0.0
    %504 = vmatpush1.msra.mxu0 0.0
    %505 = vmatprep.subr.mxu0 0.0
    %506 = vmatpush1.msra.mxu0 0.0
    %507 = vmatprep.subr.mxu0 0.0
    %508 = vmatpush1.msra.mxu0 0.0
    %509 = vmatprep.subr.mxu0 0.0
    %510 = vmatpush1.msra.mxu0 0.0
    %511 = vmatprep.subr.mxu0 0.0
    %512 = vmatpush1.msra.mxu0 0.0
    %513 = vmatprep.subr.mxu0 0.0
    %514 = vmatpush1.msra.mxu0 0.0
    %515 = vmatprep.subr.mxu0 0.0
    %516 = vmatpush1.msra.mxu0 0.0
    %517 = vmatprep.subr.mxu0 0.0
    %518 = vmatpush1.msra.mxu0 0.0
    %519 = vmatprep.subr.mxu0 0.0
    %520 = vmatpush1.msra.mxu0 0.0
    %521 = vmatprep.subr.mxu0 0.0
    %522 = vmatpush1.msra.mxu0 0.0
    %523 = vmatprep.subr.mxu0 0.0
    %524 = vmatpush1.msra.mxu0 0.0
    %525 = vmatprep.subr.mxu0 0.0
    %526 = vmatpush1.msra.mxu0 0.0
    %527 = vmatprep.subr.mxu0 0.0
    %528 = vmatpush1.msra.mxu0 0.0
    %529 = vmatprep.subr.mxu0 0.0
    %530 = vmatpush1.msra.mxu0 0.0
    %531 = vmatprep.subr.mxu0 0.0
    %532 = vmatpush1.msra.mxu0 0.0
    %533 = vmatprep.mubr.f32.mxu0 0.0
    %534 = vmatmul.mubr.f32.gmra.mrb[0].mxu0 %v118
    %v535 = vpop.f32.mrb[0].mxu0
    %v536 = vadd.f32 0.0, %v535
    %v537 = vpop.f32.mrb[0].mxu0
    %v538 = vadd.f32 0.0, %v537
    %539 = vdwg.mxu0
    %540 = vmatprep.subr.mxu0 %v143
    %541 = vmatpush1.msra.mxu0 %v141
    %542 = vmatprep.subr.mxu0 0.0
    %543 = vmatpush1.msra.mxu0 0.0
    %544 = vmatprep.subr.mxu0 0.0
    %545 = vmatpush1.msra.mxu0 0.0
    %546 = vmatprep.subr.mxu0 0.0
    %547 = vmatpush1.msra.mxu0 0.0
    %548 = vmatprep.subr.mxu0 0.0
    %549 = vmatpush1.msra.mxu0 0.0
    %550 = vmatprep.subr.mxu0 0.0
    %551 = vmatpush1.msra.mxu0 0.0
    %552 = vmatprep.subr.mxu0 0.0
    %553 = vmatpush1.msra.mxu0 0.0
    %554 = vmatprep.subr.mxu0 0.0
    %555 = vmatpush1.msra.mxu0 0.0
    %556 = vmatprep.subr.mxu0 0.0
    %557 = vmatpush1.msra.mxu0 0.0
    %558 = vmatprep.subr.mxu0 0.0
    %559 = vmatpush1.msra.mxu0 0.0
    %560 = vmatprep.subr.mxu0 0.0
    %561 = vmatpush1.msra.mxu0 0.0
    %562 = vmatprep.subr.mxu0 0.0
    %563 = vmatpush1.msra.mxu0 0.0
    %564 = vmatprep.subr.mxu0 0.0
    %565 = vmatpush1.msra.mxu0 0.0
    %566 = vmatprep.subr.mxu0 0.0
    %567 = vmatpush1.msra.mxu0 0.0
    %568 = vmatprep.subr.mxu0 0.0
    %569 = vmatpush1.msra.mxu0 0.0
    %570 = vmatprep.subr.mxu0 0.0
    %571 = vmatpush1.msra.mxu0 0.0
    %572 = vmatprep.subr.mxu0 0.0
    %573 = vmatpush1.msra.mxu0 0.0
    %574 = vmatprep.subr.mxu0 0.0
    %575 = vmatpush1.msra.mxu0 0.0
    %576 = vmatprep.subr.mxu0 0.0
    %577 = vmatpush1.msra.mxu0 0.0
    %578 = vmatprep.subr.mxu0 0.0
    %579 = vmatpush1.msra.mxu0 0.0
    %580 = vmatprep.subr.mxu0 0.0
    %581 = vmatpush1.msra.mxu0 0.0
    %582 = vmatprep.subr.mxu0 0.0
    %583 = vmatpush1.msra.mxu0 0.0
    %584 = vmatprep.subr.mxu0 0.0
    %585 = vmatpush1.msra.mxu0 0.0
    %586 = vmatprep.subr.mxu0 0.0
    %587 = vmatpush1.msra.mxu0 0.0
    %588 = vmatprep.subr.mxu0 0.0
    %589 = vmatpush1.msra.mxu0 0.0
    %590 = vmatprep.subr.mxu0 0.0
    %591 = vmatpush1.msra.mxu0 0.0
    %592 = vmatprep.subr.mxu0 0.0
    %593 = vmatpush1.msra.mxu0 0.0
    %594 = vmatprep.subr.mxu0 0.0
    %595 = vmatpush1.msra.mxu0 0.0
    %596 = vmatprep.subr.mxu0 0.0
    %597 = vmatpush1.msra.mxu0 0.0
    %598 = vmatprep.subr.mxu0 0.0
    %599 = vmatpush1.msra.mxu0 0.0
    %600 = vmatprep.subr.mxu0 0.0
    %601 = vmatpush1.msra.mxu0 0.0
    %602 = vmatprep.subr.mxu0 0.0
    %603 = vmatpush1.msra.mxu0 0.0
    %604 = vmatprep.mubr.f32.mxu0 0.0
    %605 = vmatmul.mubr.f32.gmra.mrb[0].mxu0 %v118
    %v606 = vpop.f32.mrb[0].mxu0
    %v607 = vadd.f32 0.0, %v606
    %v608 = vpop.f32.mrb[0].mxu0
    %v609 = vadd.f32 0.0, %v608
    %610 = vdwg.mxu0
    %611 = vmatprep.subr.mxu0 %v147
    %612 = vmatpush1.msra.mxu0 %v145
    %613 = vmatprep.subr.mxu0 0.0
    %614 = vmatpush1.msra.mxu0 0.0
    %615 = vmatprep.subr.mxu0 0.0
    %616 = vmatpush1.msra.mxu0 0.0
    %617 = vmatprep.subr.mxu0 0.0
    %618 = vmatpush1.msra.mxu0 0.0
    %619 = vmatprep.subr.mxu0 0.0
    %620 = vmatpush1.msra.mxu0 0.0
    %621 = vmatprep.subr.mxu0 0.0
    %622 = vmatpush1.msra.mxu0 0.0
    %623 = vmatprep.subr.mxu0 0.0
    %624 = vmatpush1.msra.mxu0 0.0
    %625 = vmatprep.subr.mxu0 0.0
    %626 = vmatpush1.msra.mxu0 0.0
    %627 = vmatprep.subr.mxu0 0.0
    %628 = vmatpush1.msra.mxu0 0.0
    %629 = vmatprep.subr.mxu0 0.0
    %630 = vmatpush1.msra.mxu0 0.0
    %631 = vmatprep.subr.mxu0 0.0
    %632 = vmatpush1.msra.mxu0 0.0
    %633 = vmatprep.subr.mxu0 0.0
    %634 = vmatpush1.msra.mxu0 0.0
    %635 = vmatprep.subr.mxu0 0.0
    %636 = vmatpush1.msra.mxu0 0.0
    %637 = vmatprep.subr.mxu0 0.0
    %638 = vmatpush1.msra.mxu0 0.0
    %639 = vmatprep.subr.mxu0 0.0
    %640 = vmatpush1.msra.mxu0 0.0
    %641 = vmatprep.subr.mxu0 0.0
    %642 = vmatpush1.msra.mxu0 0.0
    %643 = vmatprep.subr.mxu0 0.0
    %644 = vmatpush1.msra.mxu0 0.0
    %645 = vmatprep.subr.mxu0 0.0
    %646 = vmatpush1.msra.mxu0 0.0
    %647 = vmatprep.subr.mxu0 0.0
    %648 = vmatpush1.msra.mxu0 0.0
    %649 = vmatprep.subr.mxu0 0.0
    %650 = vmatpush1.msra.mxu0 0.0
    %651 = vmatprep.subr.mxu0 0.0
    %652 = vmatpush1.msra.mxu0 0.0
    %653 = vmatprep.subr.mxu0 0.0
    %654 = vmatpush1.msra.mxu0 0.0
    %655 = vmatprep.subr.mxu0 0.0
    %656 = vmatpush1.msra.mxu0 0.0
    %657 = vmatprep.subr.mxu0 0.0
    %658 = vmatpush1.msra.mxu0 0.0
    %659 = vmatprep.subr.mxu0 0.0
    %660 = vmatpush1.msra.mxu0 0.0
    %661 = vmatprep.subr.mxu0 0.0
    %662 = vmatpush1.msra.mxu0 0.0
    %663 = vmatprep.subr.mxu0 0.0
    %664 = vmatpush1.msra.mxu0 0.0
    %665 = vmatprep.subr.mxu0 0.0
    %666 = vmatpush1.msra.mxu0 0.0
    %667 = vmatprep.subr.mxu0 0.0
    %668 = vmatpush1.msra.mxu0 0.0
    %669 = vmatprep.subr.mxu0 0.0
    %670 = vmatpush1.msra.mxu0 0.0
    %671 = vmatprep.subr.mxu0 0.0
    %672 = vmatpush1.msra.mxu0 0.0
    %673 = vmatprep.subr.mxu0 0.0
    %674 = vmatpush1.msra.mxu0 0.0
    %675 = vmatprep.mubr.f32.mxu0 0.0
    %676 = vmatmul.mubr.f32.gmra.mrb[0].mxu0 %v118
    %v677 = vpop.f32.mrb[0].mxu0
    %v678 = vadd.f32 0.0, %v677
    %v679 = vpop.f32.mrb[0].mxu0
    %v680 = vadd.f32 0.0, %v679
    %681 = vdwg.mxu0
    %682 = vmatprep.subr.mxu0 %v151
    %683 = vmatpush1.msra.mxu0 %v149
    %684 = vmatprep.subr.mxu0 0.0
    %685 = vmatpush1.msra.mxu0 0.0
    %686 = vmatprep.subr.mxu0 0.0
    %687 = vmatpush1.msra.mxu0 0.0
    %688 = vmatprep.subr.mxu0 0.0
    %689 = vmatpush1.msra.mxu0 0.0
    %690 = vmatprep.subr.mxu0 0.0
    %691 = vmatpush1.msra.mxu0 0.0
    %692 = vmatprep.subr.mxu0 0.0
    %693 = vmatpush1.msra.mxu0 0.0
    %694 = vmatprep.subr.mxu0 0.0
    %695 = vmatpush1.msra.mxu0 0.0
    %696 = vmatprep.subr.mxu0 0.0
    %697 = vmatpush1.msra.mxu0 0.0
    %698 = vmatprep.subr.mxu0 0.0
    %699 = vmatpush1.msra.mxu0 0.0
    %700 = vmatprep.subr.mxu0 0.0
    %701 = vmatpush1.msra.mxu0 0.0
    %702 = vmatprep.subr.mxu0 0.0
    %703 = vmatpush1.msra.mxu0 0.0
    %704 = vmatprep.subr.mxu0 0.0
    %705 = vmatpush1.msra.mxu0 0.0
    %706 = vmatprep.subr.mxu0 0.0
    %707 = vmatpush1.msra.mxu0 0.0
    %708 = vmatprep.subr.mxu0 0.0
    %709 = vmatpush1.msra.mxu0 0.0
    %710 = vmatprep.subr.mxu0 0.0
    %711 = vmatpush1.msra.mxu0 0.0
    %712 = vmatprep.subr.mxu0 0.0
    %713 = vmatpush1.msra.mxu0 0.0
    %714 = vmatprep.subr.mxu0 0.0
    %715 = vmatpush1.msra.mxu0 0.0
    %716 = vmatprep.subr.mxu0 0.0
    %717 = vmatpush1.msra.mxu0 0.0
    %718 = vmatprep.subr.mxu0 0.0
    %719 = vmatpush1.msra.mxu0 0.0
    %720 = vmatprep.subr.mxu0 0.0
    %721 = vmatpush1.msra.mxu0 0.0
    %722 = vmatprep.subr.mxu0 0.0
    %723 = vmatpush1.msra.mxu0 0.0
    %724 = vmatprep.subr.mxu0 0.0
    %725 = vmatpush1.msra.mxu0 0.0
    %726 = vmatprep.subr.mxu0 0.0
    %727 = vmatpush1.msra.mxu0 0.0
    %728 = vmatprep.subr.mxu0 0.0
    %729 = vmatpush1.msra.mxu0 0.0
    %730 = vmatprep.subr.mxu0 0.0
    %731 = vmatpush1.msra.mxu0 0.0
    %732 = vmatprep.subr.mxu0 0.0
    %733 = vmatpush1.msra.mxu0 0.0
    %734 = vmatprep.subr.mxu0 0.0
    %735 = vmatpush1.msra.mxu0 0.0
    %736 = vmatprep.subr.mxu0 0.0
    %737 = vmatpush1.msra.mxu0 0.0
    %738 = vmatprep.subr.mxu0 0.0
    %739 = vmatpush1.msra.mxu0 0.0
    %740 = vmatprep.subr.mxu0 0.0
    %741 = vmatpush1.msra.mxu0 0.0
    %742 = vmatprep.subr.mxu0 0.0
    %743 = vmatpush1.msra.mxu0 0.0
    %744 = vmatprep.subr.mxu0 0.0
    %745 = vmatpush1.msra.mxu0 0.0
    %746 = vmatprep.mubr.f32.mxu0 0.0
    %747 = vmatmul.mubr.f32.gmra.mrb[0].mxu0 %v118
    %v748 = vpop.f32.mrb[0].mxu0
    %v749 = vadd.f32 0.0, %v748
    %v750 = vpop.f32.mrb[0].mxu0
    %v751 = vadd.f32 0.0, %v750
    %752 = vdwg.mxu0
    %753 = vmatprep.subr.mxu0 %v155
    %754 = vmatpush1.msra.mxu0 %v153
    %755 = vmatprep.subr.mxu0 0.0
    %756 = vmatpush1.msra.mxu0 0.0
    %757 = vmatprep.subr.mxu0 0.0
    %758 = vmatpush1.msra.mxu0 0.0
    %759 = vmatprep.subr.mxu0 0.0
    %760 = vmatpush1.msra.mxu0 0.0
    %761 = vmatprep.subr.mxu0 0.0
    %762 = vmatpush1.msra.mxu0 0.0
    %763 = vmatprep.subr.mxu0 0.0
    %764 = vmatpush1.msra.mxu0 0.0
    %765 = vmatprep.subr.mxu0 0.0
    %766 = vmatpush1.msra.mxu0 0.0
    %767 = vmatprep.subr.mxu0 0.0
    %768 = vmatpush1.msra.mxu0 0.0
    %769 = vmatprep.subr.mxu0 0.0
    %770 = vmatpush1.msra.mxu0 0.0
    %771 = vmatprep.subr.mxu0 0.0
    %772 = vmatpush1.msra.mxu0 0.0
    %773 = vmatprep.subr.mxu0 0.0
    %774 = vmatpush1.msra.mxu0 0.0
    %775 = vmatprep.subr.mxu0 0.0
    %776 = vmatpush1.msra.mxu0 0.0
    %777 = vmatprep.subr.mxu0 0.0
    %778 = vmatpush1.msra.mxu0 0.0
    %779 = vmatprep.subr.mxu0 0.0
    %780 = vmatpush1.msra.mxu0 0.0
    %781 = vmatprep.subr.mxu0 0.0
    %782 = vmatpush1.msra.mxu0 0.0
    %783 = vmatprep.subr.mxu0 0.0
    %784 = vmatpush1.msra.mxu0 0.0
    %785 = vmatprep.subr.mxu0 0.0
    %786 = vmatpush1.msra.mxu0 0.0
    %787 = vmatprep.subr.mxu0 0.0
    %788 = vmatpush1.msra.mxu0 0.0
    %789 = vmatprep.subr.mxu0 0.0
    %790 = vmatpush1.msra.mxu0 0.0
    %791 = vmatprep.subr.mxu0 0.0
    %792 = vmatpush1.msra.mxu0 0.0
    %793 = vmatprep.subr.mxu0 0.0
    %794 = vmatpush1.msra.mxu0 0.0
    %795 = vmatprep.subr.mxu0 0.0
    %796 = vmatpush1.msra.mxu0 0.0
    %797 = vmatprep.subr.mxu0 0.0
    %798 = vmatpush1.msra.mxu0 0.0
    %799 = vmatprep.subr.mxu0 0.0
    %800 = vmatpush1.msra.mxu0 0.0
    %801 = vmatprep.subr.mxu0 0.0
    %802 = vmatpush1.msra.mxu0 0.0
    %803 = vmatprep.subr.mxu0 0.0
    %804 = vmatpush1.msra.mxu0 0.0
    %805 = vmatprep.subr.mxu0 0.0
    %806 = vmatpush1.msra.mxu0 0.0
    %807 = vmatprep.subr.mxu0 0.0
    %808 = vmatpush1.msra.mxu0 0.0
    %809 = vmatprep.subr.mxu0 0.0
    %810 = vmatpush1.msra.mxu0 0.0
    %811 = vmatprep.subr.mxu0 0.0
    %812 = vmatpush1.msra.mxu0 0.0
    %813 = vmatprep.subr.mxu0 0.0
    %814 = vmatpush1.msra.mxu0 0.0
    %815 = vmatprep.subr.mxu0 0.0
    %816 = vmatpush1.msra.mxu0 0.0
    %817 = vmatprep.mubr.f32.mxu0 0.0
    %818 = vmatmul.mubr.f32.gmra.mrb[0].mxu0 %v118
    %v819 = vpop.f32.mrb[0].mxu0
    %v820 = vadd.f32 0.0, %v819
    %v821 = vpop.f32.mrb[0].mxu0
    %v822 = vadd.f32 0.0, %v821
    %823 = vdwg.mxu0
    %824 = vmatprep.subr.mxu0 %v159
    %825 = vmatpush1.msra.mxu0 %v157
    %826 = vmatprep.subr.mxu0 0.0
    %827 = vmatpush1.msra.mxu0 0.0
    %828 = vmatprep.subr.mxu0 0.0
    %829 = vmatpush1.msra.mxu0 0.0
    %830 = vmatprep.subr.mxu0 0.0
    %831 = vmatpush1.msra.mxu0 0.0
    %832 = vmatprep.subr.mxu0 0.0
    %833 = vmatpush1.msra.mxu0 0.0
    %834 = vmatprep.subr.mxu0 0.0
    %835 = vmatpush1.msra.mxu0 0.0
    %836 = vmatprep.subr.mxu0 0.0
    %837 = vmatpush1.msra.mxu0 0.0
    %838 = vmatprep.subr.mxu0 0.0
    %839 = vmatpush1.msra.mxu0 0.0
    %840 = vmatprep.subr.mxu0 0.0
    %841 = vmatpush1.msra.mxu0 0.0
    %842 = vmatprep.subr.mxu0 0.0
    %843 = vmatpush1.msra.mxu0 0.0
    %844 = vmatprep.subr.mxu0 0.0
    %845 = vmatpush1.msra.mxu0 0.0
    %846 = vmatprep.subr.mxu0 0.0
    %847 = vmatpush1.msra.mxu0 0.0
    %848 = vmatprep.subr.mxu0 0.0
    %849 = vmatpush1.msra.mxu0 0.0
    %850 = vmatprep.subr.mxu0 0.0
    %851 = vmatpush1.msra.mxu0 0.0
    %852 = vmatprep.subr.mxu0 0.0
    %853 = vmatpush1.msra.mxu0 0.0
    %854 = vmatprep.subr.mxu0 0.0
    %855 = vmatpush1.msra.mxu0 0.0
    %856 = vmatprep.subr.mxu0 0.0
    %857 = vmatpush1.msra.mxu0 0.0
    %858 = vmatprep.subr.mxu0 0.0
    %859 = vmatpush1.msra.mxu0 0.0
    %860 = vmatprep.subr.mxu0 0.0
    %861 = vmatpush1.msra.mxu0 0.0
    %862 = vmatprep.subr.mxu0 0.0
    %863 = vmatpush1.msra.mxu0 0.0
    %864 = vmatprep.subr.mxu0 0.0
    %865 = vmatpush1.msra.mxu0 0.0
    %866 = vmatprep.subr.mxu0 0.0
    %867 = vmatpush1.msra.mxu0 0.0
    %868 = vmatprep.subr.mxu0 0.0
    %869 = vmatpush1.msra.mxu0 0.0
    %870 = vmatprep.subr.mxu0 0.0
    %871 = vmatpush1.msra.mxu0 0.0
    %872 = vmatprep.subr.mxu0 0.0
    %873 = vmatpush1.msra.mxu0 0.0
    %874 = vmatprep.subr.mxu0 0.0
    %875 = vmatpush1.msra.mxu0 0.0
    %876 = vmatprep.subr.mxu0 0.0
    %877 = vmatpush1.msra.mxu0 0.0
    %878 = vmatprep.subr.mxu0 0.0
    %879 = vmatpush1.msra.mxu0 0.0
    %880 = vmatprep.subr.mxu0 0.0
    %881 = vmatpush1.msra.mxu0 0.0
    %882 = vmatprep.subr.mxu0 0.0
    %883 = vmatpush1.msra.mxu0 0.0
    %884 = vmatprep.subr.mxu0 0.0
    %885 = vmatpush1.msra.mxu0 0.0
    %886 = vmatprep.subr.mxu0 0.0
    %887 = vmatpush1.msra.mxu0 0.0
    %888 = vmatprep.mubr.f32.mxu0 0.0
    %889 = vmatmul.mubr.f32.gmra.mrb[0].mxu0 %v118
    %v890 = vpop.f32.mrb[0].mxu0
    %v891 = vadd.f32 0.0, %v890
    %v892 = vpop.f32.mrb[0].mxu0
    %v893 = vadd.f32 0.0, %v892
    %894 = vdwg.mxu0
    %895 = vmatprep.subr.mxu0 %v163
    %896 = vmatpush1.msra.mxu0 %v161
    %897 = vmatprep.subr.mxu0 0.0
    %898 = vmatpush1.msra.mxu0 0.0
    %899 = vmatprep.subr.mxu0 0.0
    %900 = vmatpush1.msra.mxu0 0.0
    %901 = vmatprep.subr.mxu0 0.0
    %902 = vmatpush1.msra.mxu0 0.0
    %903 = vmatprep.subr.mxu0 0.0
    %904 = vmatpush1.msra.mxu0 0.0
    %905 = vmatprep.subr.mxu0 0.0
    %906 = vmatpush1.msra.mxu0 0.0
    %907 = vmatprep.subr.mxu0 0.0
    %908 = vmatpush1.msra.mxu0 0.0
    %909 = vmatprep.subr.mxu0 0.0
    %910 = vmatpush1.msra.mxu0 0.0
    %911 = vmatprep.subr.mxu0 0.0
    %912 = vmatpush1.msra.mxu0 0.0
    %913 = vmatprep.subr.mxu0 0.0
    %914 = vmatpush1.msra.mxu0 0.0
    %915 = vmatprep.subr.mxu0 0.0
    %916 = vmatpush1.msra.mxu0 0.0
    %917 = vmatprep.subr.mxu0 0.0
    %918 = vmatpush1.msra.mxu0 0.0
    %919 = vmatprep.subr.mxu0 0.0
    %920 = vmatpush1.msra.mxu0 0.0
    %921 = vmatprep.subr.mxu0 0.0
    %922 = vmatpush1.msra.mxu0 0.0
    %923 = vmatprep.subr.mxu0 0.0
    %924 = vmatpush1.msra.mxu0 0.0
    %925 = vmatprep.subr.mxu0 0.0
    %926 = vmatpush1.msra.mxu0 0.0
    %927 = vmatprep.subr.mxu0 0.0
    %928 = vmatpush1.msra.mxu0 0.0
    %929 = vmatprep.subr.mxu0 0.0
    %930 = vmatpush1.msra.mxu0 0.0
    %931 = vmatprep.subr.mxu0 0.0
    %932 = vmatpush1.msra.mxu0 0.0
    %933 = vmatprep.subr.mxu0 0.0
    %934 = vmatpush1.msra.mxu0 0.0
    %935 = vmatprep.subr.mxu0 0.0
    %936 = vmatpush1.msra.mxu0 0.0
    %937 = vmatprep.subr.mxu0 0.0
    %938 = vmatpush1.msra.mxu0 0.0
    %939 = vmatprep.subr.mxu0 0.0
    %940 = vmatpush1.msra.mxu0 0.0
    %941 = vmatprep.subr.mxu0 0.0
    %942 = vmatpush1.msra.mxu0 0.0
    %943 = vmatprep.subr.mxu0 0.0
    %944 = vmatpush1.msra.mxu0 0.0
    %945 = vmatprep.subr.mxu0 0.0
    %946 = vmatpush1.msra.mxu0 0.0
    %947 = vmatprep.subr.mxu0 0.0
    %948 = vmatpush1.msra.mxu0 0.0
    %949 = vmatprep.subr.mxu0 0.0
    %950 = vmatpush1.msra.mxu0 0.0
    %951 = vmatprep.subr.mxu0 0.0
    %952 = vmatpush1.msra.mxu0 0.0
    %953 = vmatprep.subr.mxu0 0.0
    %954 = vmatpush1.msra.mxu0 0.0
    %955 = vmatprep.subr.mxu0 0.0
    %956 = vmatpush1.msra.mxu0 0.0
    %957 = vmatprep.subr.mxu0 0.0
    %958 = vmatpush1.msra.mxu0 0.0
    %959 = vmatprep.mubr.f32.mxu0 0.0
    %960 = vmatmul.mubr.f32.gmra.mrb[0].mxu0 %v118
    %v961 = vpop.f32.mrb[0].mxu0
    %v962 = vadd.f32 0.0, %v961
    %v963 = vpop.f32.mrb[0].mxu0
    %v964 = vadd.f32 0.0, %v963
    %965 = vdwg.mxu0
    %966 = vmatprep.subr.mxu0 %v167
    %967 = vmatpush1.msra.mxu0 %v165
    %968 = vmatprep.subr.mxu0 0.0
    %969 = vmatpush1.msra.mxu0 0.0
    %970 = vmatprep.subr.mxu0 0.0
    %971 = vmatpush1.msra.mxu0 0.0
    %972 = vmatprep.subr.mxu0 0.0
    %973 = vmatpush1.msra.mxu0 0.0
    %974 = vmatprep.subr.mxu0 0.0
    %975 = vmatpush1.msra.mxu0 0.0
    %976 = vmatprep.subr.mxu0 0.0
    %977 = vmatpush1.msra.mxu0 0.0
    %978 = vmatprep.subr.mxu0 0.0
    %979 = vmatpush1.msra.mxu0 0.0
    %980 = vmatprep.subr.mxu0 0.0
    %981 = vmatpush1.msra.mxu0 0.0
    %982 = vmatprep.subr.mxu0 0.0
    %983 = vmatpush1.msra.mxu0 0.0
    %984 = vmatprep.subr.mxu0 0.0
    %985 = vmatpush1.msra.mxu0 0.0
    %986 = vmatprep.subr.mxu0 0.0
    %987 = vmatpush1.msra.mxu0 0.0
    %988 = vmatprep.subr.mxu0 0.0
    %989 = vmatpush1.msra.mxu0 0.0
    %990 = vmatprep.subr.mxu0 0.0
    %991 = vmatpush1.msra.mxu0 0.0
    %992 = vmatprep.subr.mxu0 0.0
    %993 = vmatpush1.msra.mxu0 0.0
    %994 = vmatprep.subr.mxu0 0.0
    %995 = vmatpush1.msra.mxu0 0.0
    %996 = vmatprep.subr.mxu0 0.0
    %997 = vmatpush1.msra.mxu0 0.0
    %998 = vmatprep.subr.mxu0 0.0
    %999 = vmatpush1.msra.mxu0 0.0
    %1000 = vmatprep.subr.mxu0 0.0
    %1001 = vmatpush1.msra.mxu0 0.0
    %1002 = vmatprep.subr.mxu0 0.0
    %1003 = vmatpush1.msra.mxu0 0.0
    %1004 = vmatprep.subr.mxu0 0.0
    %1005 = vmatpush1.msra.mxu0 0.0
    %1006 = vmatprep.subr.mxu0 0.0
    %1007 = vmatpush1.msra.mxu0 0.0
    %1008 = vmatprep.subr.mxu0 0.0
    %1009 = vmatpush1.msra.mxu0 0.0
    %1010 = vmatprep.subr.mxu0 0.0
    %1011 = vmatpush1.msra.mxu0 0.0
    %1012 = vmatprep.subr.mxu0 0.0
    %1013 = vmatpush1.msra.mxu0 0.0
    %1014 = vmatprep.subr.mxu0 0.0
    %1015 = vmatpush1.msra.mxu0 0.0
    %1016 = vmatprep.subr.mxu0 0.0
    %1017 = vmatpush1.msra.mxu0 0.0
    %1018 = vmatprep.subr.mxu0 0.0
    %1019 = vmatpush1.msra.mxu0 0.0
    %1020 = vmatprep.subr.mxu0 0.0
    %1021 = vmatpush1.msra.mxu0 0.0
    %1022 = vmatprep.subr.mxu0 0.0
    %1023 = vmatpush1.msra.mxu0 0.0
    %1024 = vmatprep.subr.mxu0 0.0
    %1025 = vmatpush1.msra.mxu0 0.0
    %1026 = vmatprep.subr.mxu0 0.0
    %1027 = vmatpush1.msra.mxu0 0.0
    %1028 = vmatprep.subr.mxu0 0.0
    %1029 = vmatpush1.msra.mxu0 0.0
    %1030 = vmatprep.mubr.f32.mxu0 0.0
    %1031 = vmatmul.mubr.f32.gmra.mrb[0].mxu0 %v118
    %v1032 = vpop.f32.mrb[0].mxu0
    %v1033 = vadd.f32 0.0, %v1032
    %v1034 = vpop.f32.mrb[0].mxu0
    %v1035 = vadd.f32 0.0, %v1034
    %1036 = vdwg.mxu0
    %1037 = vmatprep.subr.mxu0 %v171
    %1038 = vmatpush1.msra.mxu0 %v169
    %1039 = vmatprep.subr.mxu0 0.0
    %1040 = vmatpush1.msra.mxu0 0.0
    %1041 = vmatprep.subr.mxu0 0.0
    %1042 = vmatpush1.msra.mxu0 0.0
    %1043 = vmatprep.subr.mxu0 0.0
    %1044 = vmatpush1.msra.mxu0 0.0
    %1045 = vmatprep.subr.mxu0 0.0
    %1046 = vmatpush1.msra.mxu0 0.0
    %1047 = vmatprep.subr.mxu0 0.0
    %1048 = vmatpush1.msra.mxu0 0.0
    %1049 = vmatprep.subr.mxu0 0.0
    %1050 = vmatpush1.msra.mxu0 0.0
    %1051 = vmatprep.subr.mxu0 0.0
    %1052 = vmatpush1.msra.mxu0 0.0
    %1053 = vmatprep.subr.mxu0 0.0
    %1054 = vmatpush1.msra.mxu0 0.0
    %1055 = vmatprep.subr.mxu0 0.0
    %1056 = vmatpush1.msra.mxu0 0.0
    %1057 = vmatprep.subr.mxu0 0.0
    %1058 = vmatpush1.msra.mxu0 0.0
    %1059 = vmatprep.subr.mxu0 0.0
    %1060 = vmatpush1.msra.mxu0 0.0
    %1061 = vmatprep.subr.mxu0 0.0
    %1062 = vmatpush1.msra.mxu0 0.0
    %1063 = vmatprep.subr.mxu0 0.0
    %1064 = vmatpush1.msra.mxu0 0.0
    %1065 = vmatprep.subr.mxu0 0.0
    %1066 = vmatpush1.msra.mxu0 0.0
    %1067 = vmatprep.subr.mxu0 0.0
    %1068 = vmatpush1.msra.mxu0 0.0
    %1069 = vmatprep.subr.mxu0 0.0
    %1070 = vmatpush1.msra.mxu0 0.0
    %1071 = vmatprep.subr.mxu0 0.0
    %1072 = vmatpush1.msra.mxu0 0.0
    %1073 = vmatprep.subr.mxu0 0.0
    %1074 = vmatpush1.msra.mxu0 0.0
    %1075 = vmatprep.subr.mxu0 0.0
    %1076 = vmatpush1.msra.mxu0 0.0
    %1077 = vmatprep.subr.mxu0 0.0
    %1078 = vmatpush1.msra.mxu0 0.0
    %1079 = vmatprep.subr.mxu0 0.0
    %1080 = vmatpush1.msra.mxu0 0.0
    %1081 = vmatprep.subr.mxu0 0.0
    %1082 = vmatpush1.msra.mxu0 0.0
    %1083 = vmatprep.subr.mxu0 0.0
    %1084 = vmatpush1.msra.mxu0 0.0
    %1085 = vmatprep.subr.mxu0 0.0
    %1086 = vmatpush1.msra.mxu0 0.0
    %1087 = vmatprep.subr.mxu0 0.0
    %1088 = vmatpush1.msra.mxu0 0.0
    %1089 = vmatprep.subr.mxu0 0.0
    %1090 = vmatpush1.msra.mxu0 0.0
    %1091 = vmatprep.subr.mxu0 0.0
    %1092 = vmatpush1.msra.mxu0 0.0
    %1093 = vmatprep.subr.mxu0 0.0
    %1094 = vmatpush1.msra.mxu0 0.0
    %1095 = vmatprep.subr.mxu0 0.0
    %1096 = vmatpush1.msra.mxu0 0.0
    %1097 = vmatprep.subr.mxu0 0.0
    %1098 = vmatpush1.msra.mxu0 0.0
    %1099 = vmatprep.subr.mxu0 0.0
    %1100 = vmatpush1.msra.mxu0 0.0
    %1101 = vmatprep.mubr.f32.mxu0 0.0
    %1102 = vmatmul.mubr.f32.gmra.mrb[0].mxu0 %v118
    %v1103 = vpop.f32.mrb[0].mxu0
    %v1104 = vadd.f32 0.0, %v1103
    %v1105 = vpop.f32.mrb[0].mxu0
    %v1106 = vadd.f32 0.0, %v1105
    %1107 = vdwg.mxu0
    %1108 = vmatprep.subr.mxu0 %v175
    %1109 = vmatpush1.msra.mxu0 %v173
    %1110 = vmatprep.subr.mxu0 0.0
    %1111 = vmatpush1.msra.mxu0 0.0
    %1112 = vmatprep.subr.mxu0 0.0
    %1113 = vmatpush1.msra.mxu0 0.0
    %1114 = vmatprep.subr.mxu0 0.0
    %1115 = vmatpush1.msra.mxu0 0.0
    %1116 = vmatprep.subr.mxu0 0.0
    %1117 = vmatpush1.msra.mxu0 0.0
    %1118 = vmatprep.subr.mxu0 0.0
    %1119 = vmatpush1.msra.mxu0 0.0
    %1120 = vmatprep.subr.mxu0 0.0
    %1121 = vmatpush1.msra.mxu0 0.0
    %1122 = vmatprep.subr.mxu0 0.0
    %1123 = vmatpush1.msra.mxu0 0.0
    %1124 = vmatprep.subr.mxu0 0.0
    %1125 = vmatpush1.msra.mxu0 0.0
    %1126 = vmatprep.subr.mxu0 0.0
    %1127 = vmatpush1.msra.mxu0 0.0
    %1128 = vmatprep.subr.mxu0 0.0
    %1129 = vmatpush1.msra.mxu0 0.0
    %1130 = vmatprep.subr.mxu0 0.0
    %1131 = vmatpush1.msra.mxu0 0.0
    %1132 = vmatprep.subr.mxu0 0.0
    %1133 = vmatpush1.msra.mxu0 0.0
    %1134 = vmatprep.subr.mxu0 0.0
    %1135 = vmatpush1.msra.mxu0 0.0
    %1136 = vmatprep.subr.mxu0 0.0
    %1137 = vmatpush1.msra.mxu0 0.0
    %1138 = vmatprep.subr.mxu0 0.0
    %1139 = vmatpush1.msra.mxu0 0.0
    %1140 = vmatprep.subr.mxu0 0.0
    %1141 = vmatpush1.msra.mxu0 0.0
    %1142 = vmatprep.subr.mxu0 0.0
    %1143 = vmatpush1.msra.mxu0 0.0
    %1144 = vmatprep.subr.mxu0 0.0
    %1145 = vmatpush1.msra.mxu0 0.0
    %1146 = vmatprep.subr.mxu0 0.0
    %1147 = vmatpush1.msra.mxu0 0.0
    %1148 = vmatprep.subr.mxu0 0.0
    %1149 = vmatpush1.msra.mxu0 0.0
    %1150 = vmatprep.subr.mxu0 0.0
    %1151 = vmatpush1.msra.mxu0 0.0
    %1152 = vmatprep.subr.mxu0 0.0
    %1153 = vmatpush1.msra.mxu0 0.0
    %1154 = vmatprep.subr.mxu0 0.0
    %1155 = vmatpush1.msra.mxu0 0.0
    %1156 = vmatprep.subr.mxu0 0.0
    %1157 = vmatpush1.msra.mxu0 0.0
    %1158 = vmatprep.subr.mxu0 0.0
    %1159 = vmatpush1.msra.mxu0 0.0
    %1160 = vmatprep.subr.mxu0 0.0
    %1161 = vmatpush1.msra.mxu0 0.0
    %1162 = vmatprep.subr.mxu0 0.0
    %1163 = vmatpush1.msra.mxu0 0.0
    %1164 = vmatprep.subr.mxu0 0.0
    %1165 = vmatpush1.msra.mxu0 0.0
    %1166 = vmatprep.subr.mxu0 0.0
    %1167 = vmatpush1.msra.mxu0 0.0
    %1168 = vmatprep.subr.mxu0 0.0
    %1169 = vmatpush1.msra.mxu0 0.0
    %1170 = vmatprep.subr.mxu0 0.0
    %1171 = vmatpush1.msra.mxu0 0.0
    %1172 = vmatprep.mubr.f32.mxu0 0.0
    %1173 = vmatmul.mubr.f32.gmra.mrb[0].mxu0 %v118
    %v1174 = vpop.f32.mrb[0].mxu0
    %v1175 = vadd.f32 0.0, %v1174
    %v1176 = vpop.f32.mrb[0].mxu0
    %v1177 = vadd.f32 0.0, %v1176
    %1178 = vdwg.mxu0
    %1179 = vmatprep.subr.mxu0 %v179
    %1180 = vmatpush1.msra.mxu0 %v177
    %1181 = vmatprep.subr.mxu0 0.0
    %1182 = vmatpush1.msra.mxu0 0.0
    %1183 = vmatprep.subr.mxu0 0.0
    %1184 = vmatpush1.msra.mxu0 0.0
    %1185 = vmatprep.subr.mxu0 0.0
    %1186 = vmatpush1.msra.mxu0 0.0
    %1187 = vmatprep.subr.mxu0 0.0
    %1188 = vmatpush1.msra.mxu0 0.0
    %1189 = vmatprep.subr.mxu0 0.0
    %1190 = vmatpush1.msra.mxu0 0.0
    %1191 = vmatprep.subr.mxu0 0.0
    %1192 = vmatpush1.msra.mxu0 0.0
    %1193 = vmatprep.subr.mxu0 0.0
    %1194 = vmatpush1.msra.mxu0 0.0
    %1195 = vmatprep.subr.mxu0 0.0
    %1196 = vmatpush1.msra.mxu0 0.0
    %1197 = vmatprep.subr.mxu0 0.0
    %1198 = vmatpush1.msra.mxu0 0.0
    %1199 = vmatprep.subr.mxu0 0.0
    %1200 = vmatpush1.msra.mxu0 0.0
    %1201 = vmatprep.subr.mxu0 0.0
    %1202 = vmatpush1.msra.mxu0 0.0
    %1203 = vmatprep.subr.mxu0 0.0
    %1204 = vmatpush1.msra.mxu0 0.0
    %1205 = vmatprep.subr.mxu0 0.0
    %1206 = vmatpush1.msra.mxu0 0.0
    %1207 = vmatprep.subr.mxu0 0.0
    %1208 = vmatpush1.msra.mxu0 0.0
    %1209 = vmatprep.subr.mxu0 0.0
    %1210 = vmatpush1.msra.mxu0 0.0
    %1211 = vmatprep.subr.mxu0 0.0
    %1212 = vmatpush1.msra.mxu0 0.0
    %1213 = vmatprep.subr.mxu0 0.0
    %1214 = vmatpush1.msra.mxu0 0.0
    %1215 = vmatprep.subr.mxu0 0.0
    %1216 = vmatpush1.msra.mxu0 0.0
    %1217 = vmatprep.subr.mxu0 0.0
    %1218 = vmatpush1.msra.mxu0 0.0
    %1219 = vmatprep.subr.mxu0 0.0
    %1220 = vmatpush1.msra.mxu0 0.0
    %1221 = vmatprep.subr.mxu0 0.0
    %1222 = vmatpush1.msra.mxu0 0.0
    %1223 = vmatprep.subr.mxu0 0.0
    %1224 = vmatpush1.msra.mxu0 0.0
    %1225 = vmatprep.subr.mxu0 0.0
    %1226 = vmatpush1.msra.mxu0 0.0
    %1227 = vmatprep.subr.mxu0 0.0
    %1228 = vmatpush1.msra.mxu0 0.0
    %1229 = vmatprep.subr.mxu0 0.0
    %1230 = vmatpush1.msra.mxu0 0.0
    %1231 = vmatprep.subr.mxu0 0.0
    %1232 = vmatpush1.msra.mxu0 0.0
    %1233 = vmatprep.subr.mxu0 0.0
    %1234 = vmatpush1.msra.mxu0 0.0
    %1235 = vmatprep.subr.mxu0 0.0
    %1236 = vmatpush1.msra.mxu0 0.0
    %1237 = vmatprep.subr.mxu0 0.0
    %1238 = vmatpush1.msra.mxu0 0.0
    %1239 = vmatprep.subr.mxu0 0.0
    %1240 = vmatpush1.msra.mxu0 0.0
    %1241 = vmatprep.subr.mxu0 0.0
    %1242 = vmatpush1.msra.mxu0 0.0
    %1243 = vmatprep.mubr.f32.mxu0 0.0
    %1244 = vmatmul.mubr.f32.gmra.mrb[0].mxu0 %v118
    %v1245 = vpop.f32.mrb[0].mxu0
    %v1246 = vadd.f32 0.0, %v1245
    %v1247 = vpop.f32.mrb[0].mxu0
    %v1248 = vadd.f32 0.0, %v1247
    %1249 = vdwg.mxu0
    %1250 = vmatprep.subr.mxu0 %v183
    %1251 = vmatpush1.msra.mxu0 %v181
    %1252 = vmatprep.subr.mxu0 0.0
    %1253 = vmatpush1.msra.mxu0 0.0
    %1254 = vmatprep.subr.mxu0 0.0
    %1255 = vmatpush1.msra.mxu0 0.0
    %1256 = vmatprep.subr.mxu0 0.0
    %1257 = vmatpush1.msra.mxu0 0.0
    %1258 = vmatprep.subr.mxu0 0.0
    %1259 = vmatpush1.msra.mxu0 0.0
    %1260 = vmatprep.subr.mxu0 0.0
    %1261 = vmatpush1.msra.mxu0 0.0
    %1262 = vmatprep.subr.mxu0 0.0
    %1263 = vmatpush1.msra.mxu0 0.0
    %1264 = vmatprep.subr.mxu0 0.0
    %1265 = vmatpush1.msra.mxu0 0.0
    %1266 = vmatprep.subr.mxu0 0.0
    %1267 = vmatpush1.msra.mxu0 0.0
    %1268 = vmatprep.subr.mxu0 0.0
    %1269 = vmatpush1.msra.mxu0 0.0
    %1270 = vmatprep.subr.mxu0 0.0
    %1271 = vmatpush1.msra.mxu0 0.0
    %1272 = vmatprep.subr.mxu0 0.0
    %1273 = vmatpush1.msra.mxu0 0.0
    %1274 = vmatprep.subr.mxu0 0.0
    %1275 = vmatpush1.msra.mxu0 0.0
    %1276 = vmatprep.subr.mxu0 0.0
    %1277 = vmatpush1.msra.mxu0 0.0
    %1278 = vmatprep.subr.mxu0 0.0
    %1279 = vmatpush1.msra.mxu0 0.0
    %1280 = vmatprep.subr.mxu0 0.0
    %1281 = vmatpush1.msra.mxu0 0.0
    %1282 = vmatprep.subr.mxu0 0.0
    %1283 = vmatpush1.msra.mxu0 0.0
    %1284 = vmatprep.subr.mxu0 0.0
    %1285 = vmatpush1.msra.mxu0 0.0
    %1286 = vmatprep.subr.mxu0 0.0
    %1287 = vmatpush1.msra.mxu0 0.0
    %1288 = vmatprep.subr.mxu0 0.0
    %1289 = vmatpush1.msra.mxu0 0.0
    %1290 = vmatprep.subr.mxu0 0.0
    %1291 = vmatpush1.msra.mxu0 0.0
    %1292 = vmatprep.subr.mxu0 0.0
    %1293 = vmatpush1.msra.mxu0 0.0
    %1294 = vmatprep.subr.mxu0 0.0
    %1295 = vmatpush1.msra.mxu0 0.0
    %1296 = vmatprep.subr.mxu0 0.0
    %1297 = vmatpush1.msra.mxu0 0.0
    %1298 = vmatprep.subr.mxu0 0.0
    %1299 = vmatpush1.msra.mxu0 0.0
    %1300 = vmatprep.subr.mxu0 0.0
    %1301 = vmatpush1.msra.mxu0 0.0
    %1302 = vmatprep.subr.mxu0 0.0
    %1303 = vmatpush1.msra.mxu0 0.0
    %1304 = vmatprep.subr.mxu0 0.0
    %1305 = vmatpush1.msra.mxu0 0.0
    %1306 = vmatprep.subr.mxu0 0.0
    %1307 = vmatpush1.msra.mxu0 0.0
    %1308 = vmatprep.subr.mxu0 0.0
    %1309 = vmatpush1.msra.mxu0 0.0
    %1310 = vmatprep.subr.mxu0 0.0
    %1311 = vmatpush1.msra.mxu0 0.0
    %1312 = vmatprep.subr.mxu0 0.0
    %1313 = vmatpush1.msra.mxu0 0.0
    %1314 = vmatprep.mubr.f32.mxu0 0.0
    %1315 = vmatmul.mubr.f32.gmra.mrb[0].mxu0 %v118
    %v1316 = vpop.f32.mrb[0].mxu0
    %v1317 = vadd.f32 0.0, %v1316
    %v1318 = vpop.f32.mrb[0].mxu0
    %v1319 = vadd.f32 0.0, %v1318
    %1320 = vdwg.mxu0
    %s1321 = scalar_lea.vmem [#allocation8], 128
    %v1322 = vld [vmem:[%s1321] sm:$0xff]
    %v1323 = vld [vmem:[%s1321 + $0x8] sm:$0xff]
    %v1324 = vld [vmem:[%s1321 + $0x10] sm:$0xff]
    %v1325 = vld [vmem:[%s1321 + $0x18] sm:$0xff]
    %v1326 = vld [vmem:[%s1321 + $0x20] sm:$0xff]
    %v1327 = vld [vmem:[%s1321 + $0x28] sm:$0xff]
    %v1328 = vld [vmem:[%s1321 + $0x30] sm:$0xff]
    %v1329 = vld [vmem:[%s1321 + $0x38] sm:$0xff]
    %v1330 = vld [vmem:[%s1321 + $0x40] sm:$0xff]
    %v1331 = vld [vmem:[%s1321 + $0x48] sm:$0xff]
    %v1332 = vld [vmem:[%s1321 + $0x50] sm:$0xff]
    %v1333 = vld [vmem:[%s1321 + $0x58] sm:$0xff]
    %v1334 = vld [vmem:[%s1321 + $0x60] sm:$0xff]
    %v1335 = vld [vmem:[%s1321 + $0x68] sm:$0xff]
    %v1336 = vld [vmem:[%s1321 + $0x70] sm:$0xff]
    %v1337 = vld [vmem:[%s1321 + $0x78] sm:$0xff]
    %v1354 = vcombine.high %v1322, %v1322
    %v1355 = vcombine.high %v1323, %v1323
    %v1356 = vcombine.high %v1324, %v1324
    %v1357 = vcombine.high %v1325, %v1325
    %v1358 = vcombine.high %v1326, %v1326
    %v1359 = vcombine.high %v1327, %v1327
    %v1360 = vcombine.high %v1328, %v1328
    %v1361 = vcombine.high %v1329, %v1329
    %v1362 = vcombine.high %v1330, %v1330
    %v1363 = vcombine.high %v1331, %v1331
    %v1364 = vcombine.high %v1332, %v1332
    %v1365 = vcombine.high %v1333, %v1333
    %v1366 = vcombine.high %v1334, %v1334
    %v1367 = vcombine.high %v1335, %v1335
    %v1368 = vcombine.high %v1336, %v1336
    %v1369 = vcombine.high %v1337, %v1337
    %v1370 = vsel %vm120, %v1322, 0
    %v1372 = vsel %vm120, %v1354, 0
    %v1374 = vsel %vm120, %v1323, 0
    %v1376 = vsel %vm120, %v1355, 0
    %v1378 = vsel %vm120, %v1324, 0
    %v1380 = vsel %vm120, %v1356, 0
    %v1382 = vsel %vm120, %v1325, 0
    %v1384 = vsel %vm120, %v1357, 0
    %v1386 = vsel %vm120, %v1326, 0
    %v1388 = vsel %vm120, %v1358, 0
    %v1390 = vsel %vm120, %v1327, 0
    %v1392 = vsel %vm120, %v1359, 0
    %v1394 = vsel %vm120, %v1328, 0
    %v1396 = vsel %vm120, %v1360, 0
    %v1398 = vsel %vm120, %v1329, 0
    %v1400 = vsel %vm120, %v1361, 0
    %v1402 = vsel %vm120, %v1330, 0
    %v1404 = vsel %vm120, %v1362, 0
    %v1406 = vsel %vm120, %v1331, 0
    %v1408 = vsel %vm120, %v1363, 0
    %v1410 = vsel %vm120, %v1332, 0
    %v1412 = vsel %vm120, %v1364, 0
    %v1414 = vsel %vm120, %v1333, 0
    %v1416 = vsel %vm120, %v1365, 0
    %v1418 = vsel %vm120, %v1334, 0
    %v1420 = vsel %vm120, %v1366, 0
    %v1422 = vsel %vm120, %v1335, 0
    %v1424 = vsel %vm120, %v1367, 0
    %v1426 = vsel %vm120, %v1336, 0
    %v1428 = vsel %vm120, %v1368, 0
    %v1430 = vsel %vm120, %v1337, 0
    %v1432 = vsel %vm120, %v1369, 0
    %1434 = vmatprep.subr.mxu0 %v1372
    %1435 = vmatpush1.msra.mxu0 %v1370
    %1436 = vmatprep.subr.mxu0 0.0
    %1437 = vmatpush1.msra.mxu0 0.0
    %1438 = vmatprep.subr.mxu0 0.0
    %1439 = vmatpush1.msra.mxu0 0.0
    %1440 = vmatprep.subr.mxu0 0.0
    %1441 = vmatpush1.msra.mxu0 0.0
    %1442 = vmatprep.subr.mxu0 0.0
    %1443 = vmatpush1.msra.mxu0 0.0
    %1444 = vmatprep.subr.mxu0 0.0
    %1445 = vmatpush1.msra.mxu0 0.0
    %1446 = vmatprep.subr.mxu0 0.0
    %1447 = vmatpush1.msra.mxu0 0.0
    %1448 = vmatprep.subr.mxu0 0.0
    %1449 = vmatpush1.msra.mxu0 0.0
    %1450 = vmatprep.subr.mxu0 0.0
    %1451 = vmatpush1.msra.mxu0 0.0
    %1452 = vmatprep.subr.mxu0 0.0
    %1453 = vmatpush1.msra.mxu0 0.0
    %1454 = vmatprep.subr.mxu0 0.0
    %1455 = vmatpush1.msra.mxu0 0.0
    %1456 = vmatprep.subr.mxu0 0.0
    %1457 = vmatpush1.msra.mxu0 0.0
    %1458 = vmatprep.subr.mxu0 0.0
    %1459 = vmatpush1.msra.mxu0 0.0
    %1460 = vmatprep.subr.mxu0 0.0
    %1461 = vmatpush1.msra.mxu0 0.0
    %1462 = vmatprep.subr.mxu0 0.0
    %1463 = vmatpush1.msra.mxu0 0.0
    %1464 = vmatprep.subr.mxu0 0.0
    %1465 = vmatpush1.msra.mxu0 0.0
    %1466 = vmatprep.subr.mxu0 0.0
    %1467 = vmatpush1.msra.mxu0 0.0
    %1468 = vmatprep.subr.mxu0 0.0
    %1469 = vmatpush1.msra.mxu0 0.0
    %1470 = vmatprep.subr.mxu0 0.0
    %1471 = vmatpush1.msra.mxu0 0.0
    %1472 = vmatprep.subr.mxu0 0.0
    %1473 = vmatpush1.msra.mxu0 0.0
    %1474 = vmatprep.subr.mxu0 0.0
    %1475 = vmatpush1.msra.mxu0 0.0
    %1476 = vmatprep.subr.mxu0 0.0
    %1477 = vmatpush1.msra.mxu0 0.0
    %1478 = vmatprep.subr.mxu0 0.0
    %1479 = vmatpush1.msra.mxu0 0.0
    %1480 = vmatprep.subr.mxu0 0.0
    %1481 = vmatpush1.msra.mxu0 0.0
    %1482 = vmatprep.subr.mxu0 0.0
    %1483 = vmatpush1.msra.mxu0 0.0
    %1484 = vmatprep.subr.mxu0 0.0
    %1485 = vmatpush1.msra.mxu0 0.0
    %1486 = vmatprep.subr.mxu0 0.0
    %1487 = vmatpush1.msra.mxu0 0.0
    %1488 = vmatprep.subr.mxu0 0.0
    %1489 = vmatpush1.msra.mxu0 0.0
    %1490 = vmatprep.subr.mxu0 0.0
    %1491 = vmatpush1.msra.mxu0 0.0
    %1492 = vmatprep.subr.mxu0 0.0
    %1493 = vmatpush1.msra.mxu0 0.0
    %1494 = vmatprep.subr.mxu0 0.0
    %1495 = vmatpush1.msra.mxu0 0.0
    %1496 = vmatprep.subr.mxu0 0.0
    %1497 = vmatpush1.msra.mxu0 0.0
    %1498 = vmatprep.mubr.f32.mxu0 0.0
    %1499 = vmatmul.mubr.f32.gmra.mrb[0].mxu0 %v118
    %v1500 = vpop.f32.mrb[0].mxu0
    %v1501 = vadd.f32 0.0, %v1500
    %v1502 = vpop.f32.mrb[0].mxu0
    %v1503 = vadd.f32 0.0, %v1502
    %1504 = vdwg.mxu0
    %1505 = vmatprep.subr.mxu0 %v1376
    %1506 = vmatpush1.msra.mxu0 %v1374
    %1507 = vmatprep.subr.mxu0 0.0
    %1508 = vmatpush1.msra.mxu0 0.0
    %1509 = vmatprep.subr.mxu0 0.0
    %1510 = vmatpush1.msra.mxu0 0.0
    %1511 = vmatprep.subr.mxu0 0.0
    %1512 = vmatpush1.msra.mxu0 0.0
    %1513 = vmatprep.subr.mxu0 0.0
    %1514 = vmatpush1.msra.mxu0 0.0
    %1515 = vmatprep.subr.mxu0 0.0
    %1516 = vmatpush1.msra.mxu0 0.0
    %1517 = vmatprep.subr.mxu0 0.0
    %1518 = vmatpush1.msra.mxu0 0.0
    %1519 = vmatprep.subr.mxu0 0.0
    %1520 = vmatpush1.msra.mxu0 0.0
    %1521 = vmatprep.subr.mxu0 0.0
    %1522 = vmatpush1.msra.mxu0 0.0
    %1523 = vmatprep.subr.mxu0 0.0
    %1524 = vmatpush1.msra.mxu0 0.0
    %1525 = vmatprep.subr.mxu0 0.0
    %1526 = vmatpush1.msra.mxu0 0.0
    %1527 = vmatprep.subr.mxu0 0.0
    %1528 = vmatpush1.msra.mxu0 0.0
    %1529 = vmatprep.subr.mxu0 0.0
    %1530 = vmatpush1.msra.mxu0 0.0
    %1531 = vmatprep.subr.mxu0 0.0
    %1532 = vmatpush1.msra.mxu0 0.0
    %1533 = vmatprep.subr.mxu0 0.0
    %1534 = vmatpush1.msra.mxu0 0.0
    %1535 = vmatprep.subr.mxu0 0.0
    %1536 = vmatpush1.msra.mxu0 0.0
    %1537 = vmatprep.subr.mxu0 0.0
    %1538 = vmatpush1.msra.mxu0 0.0
    %1539 = vmatprep.subr.mxu0 0.0
    %1540 = vmatpush1.msra.mxu0 0.0
    %1541 = vmatprep.subr.mxu0 0.0
    %1542 = vmatpush1.msra.mxu0 0.0
    %1543 = vmatprep.subr.mxu0 0.0
    %1544 = vmatpush1.msra.mxu0 0.0
    %1545 = vmatprep.subr.mxu0 0.0
    %1546 = vmatpush1.msra.mxu0 0.0
    %1547 = vmatprep.subr.mxu0 0.0
    %1548 = vmatpush1.msra.mxu0 0.0
    %1549 = vmatprep.subr.mxu0 0.0
    %1550 = vmatpush1.msra.mxu0 0.0
    %1551 = vmatprep.subr.mxu0 0.0
    %1552 = vmatpush1.msra.mxu0 0.0
    %1553 = vmatprep.subr.mxu0 0.0
    %1554 = vmatpush1.msra.mxu0 0.0
    %1555 = vmatprep.subr.mxu0 0.0
    %1556 = vmatpush1.msra.mxu0 0.0
    %1557 = vmatprep.subr.mxu0 0.0
    %1558 = vmatpush1.msra.mxu0 0.0
    %1559 = vmatprep.subr.mxu0 0.0
    %1560 = vmatpush1.msra.mxu0 0.0
    %1561 = vmatprep.subr.mxu0 0.0
    %1562 = vmatpush1.msra.mxu0 0.0
    %1563 = vmatprep.subr.mxu0 0.0
    %1564 = vmatpush1.msra.mxu0 0.0
    %1565 = vmatprep.subr.mxu0 0.0
    %1566 = vmatpush1.msra.mxu0 0.0
    %1567 = vmatprep.subr.mxu0 0.0
    %1568 = vmatpush1.msra.mxu0 0.0
    %1569 = vmatprep.mubr.f32.mxu0 0.0
    %1570 = vmatmul.mubr.f32.gmra.mrb[0].mxu0 %v118
    %v1571 = vpop.f32.mrb[0].mxu0
    %v1572 = vadd.f32 0.0, %v1571
    %v1573 = vpop.f32.mrb[0].mxu0
    %v1574 = vadd.f32 0.0, %v1573
    %1575 = vdwg.mxu0
    %1576 = vmatprep.subr.mxu0 %v1380
    %1577 = vmatpush1.msra.mxu0 %v1378
    %1578 = vmatprep.subr.mxu0 0.0
    %1579 = vmatpush1.msra.mxu0 0.0
    %1580 = vmatprep.subr.mxu0 0.0
    %1581 = vmatpush1.msra.mxu0 0.0
    %1582 = vmatprep.subr.mxu0 0.0
    %1583 = vmatpush1.msra.mxu0 0.0
    %1584 = vmatprep.subr.mxu0 0.0
    %1585 = vmatpush1.msra.mxu0 0.0
    %1586 = vmatprep.subr.mxu0 0.0
    %1587 = vmatpush1.msra.mxu0 0.0
    %1588 = vmatprep.subr.mxu0 0.0
    %1589 = vmatpush1.msra.mxu0 0.0
    %1590 = vmatprep.subr.mxu0 0.0
    %1591 = vmatpush1.msra.mxu0 0.0
    %1592 = vmatprep.subr.mxu0 0.0
    %1593 = vmatpush1.msra.mxu0 0.0
    %1594 = vmatprep.subr.mxu0 0.0
    %1595 = vmatpush1.msra.mxu0 0.0
    %1596 = vmatprep.subr.mxu0 0.0
    %1597 = vmatpush1.msra.mxu0 0.0
    %1598 = vmatprep.subr.mxu0 0.0
    %1599 = vmatpush1.msra.mxu0 0.0
    %1600 = vmatprep.subr.mxu0 0.0
    %1601 = vmatpush1.msra.mxu0 0.0
    %1602 = vmatprep.subr.mxu0 0.0
    %1603 = vmatpush1.msra.mxu0 0.0
    %1604 = vmatprep.subr.mxu0 0.0
    %1605 = vmatpush1.msra.mxu0 0.0
    %1606 = vmatprep.subr.mxu0 0.0
    %1607 = vmatpush1.msra.mxu0 0.0
    %1608 = vmatprep.subr.mxu0 0.0
    %1609 = vmatpush1.msra.mxu0 0.0
    %1610 = vmatprep.subr.mxu0 0.0
    %1611 = vmatpush1.msra.mxu0 0.0
    %1612 = vmatprep.subr.mxu0 0.0
    %1613 = vmatpush1.msra.mxu0 0.0
    %1614 = vmatprep.subr.mxu0 0.0
    %1615 = vmatpush1.msra.mxu0 0.0
    %1616 = vmatprep.subr.mxu0 0.0
    %1617 = vmatpush1.msra.mxu0 0.0
    %1618 = vmatprep.subr.mxu0 0.0
    %1619 = vmatpush1.msra.mxu0 0.0
    %1620 = vmatprep.subr.mxu0 0.0
    %1621 = vmatpush1.msra.mxu0 0.0
    %1622 = vmatprep.subr.mxu0 0.0
    %1623 = vmatpush1.msra.mxu0 0.0
    %1624 = vmatprep.subr.mxu0 0.0
    %1625 = vmatpush1.msra.mxu0 0.0
    %1626 = vmatprep.subr.mxu0 0.0
    %1627 = vmatpush1.msra.mxu0 0.0
    %1628 = vmatprep.subr.mxu0 0.0
    %1629 = vmatpush1.msra.mxu0 0.0
    %1630 = vmatprep.subr.mxu0 0.0
    %1631 = vmatpush1.msra.mxu0 0.0
    %1632 = vmatprep.subr.mxu0 0.0
    %1633 = vmatpush1.msra.mxu0 0.0
    %1634 = vmatprep.subr.mxu0 0.0
    %1635 = vmatpush1.msra.mxu0 0.0
    %1636 = vmatprep.subr.mxu0 0.0
    %1637 = vmatpush1.msra.mxu0 0.0
    %1638 = vmatprep.subr.mxu0 0.0
    %1639 = vmatpush1.msra.mxu0 0.0
    %1640 = vmatprep.mubr.f32.mxu0 0.0
    %1641 = vmatmul.mubr.f32.gmra.mrb[0].mxu0 %v118
    %v1642 = vpop.f32.mrb[0].mxu0
    %v1643 = vadd.f32 0.0, %v1642
    %v1644 = vpop.f32.mrb[0].mxu0
    %v1645 = vadd.f32 0.0, %v1644
    %1646 = vdwg.mxu0
    %1647 = vmatprep.subr.mxu0 %v1384
    %1648 = vmatpush1.msra.mxu0 %v1382
    %1649 = vmatprep.subr.mxu0 0.0
    %1650 = vmatpush1.msra.mxu0 0.0
    %1651 = vmatprep.subr.mxu0 0.0
    %1652 = vmatpush1.msra.mxu0 0.0
    %1653 = vmatprep.subr.mxu0 0.0
    %1654 = vmatpush1.msra.mxu0 0.0
    %1655 = vmatprep.subr.mxu0 0.0
    %1656 = vmatpush1.msra.mxu0 0.0
    %1657 = vmatprep.subr.mxu0 0.0
    %1658 = vmatpush1.msra.mxu0 0.0
    %1659 = vmatprep.subr.mxu0 0.0
    %1660 = vmatpush1.msra.mxu0 0.0
    %1661 = vmatprep.subr.mxu0 0.0
    %1662 = vmatpush1.msra.mxu0 0.0
    %1663 = vmatprep.subr.mxu0 0.0
    %1664 = vmatpush1.msra.mxu0 0.0
    %1665 = vmatprep.subr.mxu0 0.0
    %1666 = vmatpush1.msra.mxu0 0.0
    %1667 = vmatprep.subr.mxu0 0.0
    %1668 = vmatpush1.msra.mxu0 0.0
    %1669 = vmatprep.subr.mxu0 0.0
    %1670 = vmatpush1.msra.mxu0 0.0
    %1671 = vmatprep.subr.mxu0 0.0
    %1672 = vmatpush1.msra.mxu0 0.0
    %1673 = vmatprep.subr.mxu0 0.0
    %1674 = vmatpush1.msra.mxu0 0.0
    %1675 = vmatprep.subr.mxu0 0.0
    %1676 = vmatpush1.msra.mxu0 0.0
    %1677 = vmatprep.subr.mxu0 0.0
    %1678 = vmatpush1.msra.mxu0 0.0
    %1679 = vmatprep.subr.mxu0 0.0
    %1680 = vmatpush1.msra.mxu0 0.0
    %1681 = vmatprep.subr.mxu0 0.0
    %1682 = vmatpush1.msra.mxu0 0.0
    %1683 = vmatprep.subr.mxu0 0.0
    %1684 = vmatpush1.msra.mxu0 0.0
    %1685 = vmatprep.subr.mxu0 0.0
    %1686 = vmatpush1.msra.mxu0 0.0
    %1687 = vmatprep.subr.mxu0 0.0
    %1688 = vmatpush1.msra.mxu0 0.0
    %1689 = vmatprep.subr.mxu0 0.0
    %1690 = vmatpush1.msra.mxu0 0.0
    %1691 = vmatprep.subr.mxu0 0.0
    %1692 = vmatpush1.msra.mxu0 0.0
    %1693 = vmatprep.subr.mxu0 0.0
    %1694 = vmatpush1.msra.mxu0 0.0
    %1695 = vmatprep.subr.mxu0 0.0
    %1696 = vmatpush1.msra.mxu0 0.0
    %1697 = vmatprep.subr.mxu0 0.0
    %1698 = vmatpush1.msra.mxu0 0.0
    %1699 = vmatprep.subr.mxu0 0.0
    %1700 = vmatpush1.msra.mxu0 0.0
    %1701 = vmatprep.subr.mxu0 0.0
    %1702 = vmatpush1.msra.mxu0 0.0
    %1703 = vmatprep.subr.mxu0 0.0
    %1704 = vmatpush1.msra.mxu0 0.0
    %1705 = vmatprep.subr.mxu0 0.0
    %1706 = vmatpush1.msra.mxu0 0.0
    %1707 = vmatprep.subr.mxu0 0.0
    %1708 = vmatpush1.msra.mxu0 0.0
    %1709 = vmatprep.subr.mxu0 0.0
    %1710 = vmatpush1.msra.mxu0 0.0
    %1711 = vmatprep.mubr.f32.mxu0 0.0
    %1712 = vmatmul.mubr.f32.gmra.mrb[0].mxu0 %v118
    %v1713 = vpop.f32.mrb[0].mxu0
    %v1714 = vadd.f32 0.0, %v1713
    %v1715 = vpop.f32.mrb[0].mxu0
    %v1716 = vadd.f32 0.0, %v1715
    %1717 = vdwg.mxu0
    %1718 = vmatprep.subr.mxu0 %v1388
    %1719 = vmatpush1.msra.mxu0 %v1386
    %1720 = vmatprep.subr.mxu0 0.0
    %1721 = vmatpush1.msra.mxu0 0.0
    %1722 = vmatprep.subr.mxu0 0.0
    %1723 = vmatpush1.msra.mxu0 0.0
    %1724 = vmatprep.subr.mxu0 0.0
    %1725 = vmatpush1.msra.mxu0 0.0
    %1726 = vmatprep.subr.mxu0 0.0
    %1727 = vmatpush1.msra.mxu0 0.0
    %1728 = vmatprep.subr.mxu0 0.0
    %1729 = vmatpush1.msra.mxu0 0.0
    %1730 = vmatprep.subr.mxu0 0.0
    %1731 = vmatpush1.msra.mxu0 0.0
    %1732 = vmatprep.subr.mxu0 0.0
    %1733 = vmatpush1.msra.mxu0 0.0
    %1734 = vmatprep.subr.mxu0 0.0
    %1735 = vmatpush1.msra.mxu0 0.0
    %1736 = vmatprep.subr.mxu0 0.0
    %1737 = vmatpush1.msra.mxu0 0.0
    %1738 = vmatprep.subr.mxu0 0.0
    %1739 = vmatpush1.msra.mxu0 0.0
    %1740 = vmatprep.subr.mxu0 0.0
    %1741 = vmatpush1.msra.mxu0 0.0
    %1742 = vmatprep.subr.mxu0 0.0
    %1743 = vmatpush1.msra.mxu0 0.0
    %1744 = vmatprep.subr.mxu0 0.0
    %1745 = vmatpush1.msra.mxu0 0.0
    %1746 = vmatprep.subr.mxu0 0.0
    %1747 = vmatpush1.msra.mxu0 0.0
    %1748 = vmatprep.subr.mxu0 0.0
    %1749 = vmatpush1.msra.mxu0 0.0
    %1750 = vmatprep.subr.mxu0 0.0
    %1751 = vmatpush1.msra.mxu0 0.0
    %1752 = vmatprep.subr.mxu0 0.0
    %1753 = vmatpush1.msra.mxu0 0.0
    %1754 = vmatprep.subr.mxu0 0.0
    %1755 = vmatpush1.msra.mxu0 0.0
    %1756 = vmatprep.subr.mxu0 0.0
    %1757 = vmatpush1.msra.mxu0 0.0
    %1758 = vmatprep.subr.mxu0 0.0
    %1759 = vmatpush1.msra.mxu0 0.0
    %1760 = vmatprep.subr.mxu0 0.0
    %1761 = vmatpush1.msra.mxu0 0.0
    %1762 = vmatprep.subr.mxu0 0.0
    %1763 = vmatpush1.msra.mxu0 0.0
    %1764 = vmatprep.subr.mxu0 0.0
    %1765 = vmatpush1.msra.mxu0 0.0
    %1766 = vmatprep.subr.mxu0 0.0
    %1767 = vmatpush1.msra.mxu0 0.0
    %1768 = vmatprep.subr.mxu0 0.0
    %1769 = vmatpush1.msra.mxu0 0.0
    %1770 = vmatprep.subr.mxu0 0.0
    %1771 = vmatpush1.msra.mxu0 0.0
    %1772 = vmatprep.subr.mxu0 0.0
    %1773 = vmatpush1.msra.mxu0 0.0
    %1774 = vmatprep.subr.mxu0 0.0
    %1775 = vmatpush1.msra.mxu0 0.0
    %1776 = vmatprep.subr.mxu0 0.0
    %1777 = vmatpush1.msra.mxu0 0.0
    %1778 = vmatprep.subr.mxu0 0.0
    %1779 = vmatpush1.msra.mxu0 0.0
    %1780 = vmatprep.subr.mxu0 0.0
    %1781 = vmatpush1.msra.mxu0 0.0
    %1782 = vmatprep.mubr.f32.mxu0 0.0
    %1783 = vmatmul.mubr.f32.gmra.mrb[0].mxu0 %v118
    %v1784 = vpop.f32.mrb[0].mxu0
    %v1785 = vadd.f32 0.0, %v1784
    %v1786 = vpop.f32.mrb[0].mxu0
    %v1787 = vadd.f32 0.0, %v1786
    %1788 = vdwg.mxu0
    %1789 = vmatprep.subr.mxu0 %v1392
    %1790 = vmatpush1.msra.mxu0 %v1390
    %1791 = vmatprep.subr.mxu0 0.0
    %1792 = vmatpush1.msra.mxu0 0.0
    %1793 = vmatprep.subr.mxu0 0.0
    %1794 = vmatpush1.msra.mxu0 0.0
    %1795 = vmatprep.subr.mxu0 0.0
    %1796 = vmatpush1.msra.mxu0 0.0
    %1797 = vmatprep.subr.mxu0 0.0
    %1798 = vmatpush1.msra.mxu0 0.0
    %1799 = vmatprep.subr.mxu0 0.0
    %1800 = vmatpush1.msra.mxu0 0.0
    %1801 = vmatprep.subr.mxu0 0.0
    %1802 = vmatpush1.msra.mxu0 0.0
    %1803 = vmatprep.subr.mxu0 0.0
    %1804 = vmatpush1.msra.mxu0 0.0
    %1805 = vmatprep.subr.mxu0 0.0
    %1806 = vmatpush1.msra.mxu0 0.0
    %1807 = vmatprep.subr.mxu0 0.0
    %1808 = vmatpush1.msra.mxu0 0.0
    %1809 = vmatprep.subr.mxu0 0.0
    %1810 = vmatpush1.msra.mxu0 0.0
    %1811 = vmatprep.subr.mxu0 0.0
    %1812 = vmatpush1.msra.mxu0 0.0
    %1813 = vmatprep.subr.mxu0 0.0
    %1814 = vmatpush1.msra.mxu0 0.0
    %1815 = vmatprep.subr.mxu0 0.0
    %1816 = vmatpush1.msra.mxu0 0.0
    %1817 = vmatprep.subr.mxu0 0.0
    %1818 = vmatpush1.msra.mxu0 0.0
    %1819 = vmatprep.subr.mxu0 0.0
    %1820 = vmatpush1.msra.mxu0 0.0
    %1821 = vmatprep.subr.mxu0 0.0
    %1822 = vmatpush1.msra.mxu0 0.0
    %1823 = vmatprep.subr.mxu0 0.0
    %1824 = vmatpush1.msra.mxu0 0.0
    %1825 = vmatprep.subr.mxu0 0.0
    %1826 = vmatpush1.msra.mxu0 0.0
    %1827 = vmatprep.subr.mxu0 0.0
    %1828 = vmatpush1.msra.mxu0 0.0
    %1829 = vmatprep.subr.mxu0 0.0
    %1830 = vmatpush1.msra.mxu0 0.0
    %1831 = vmatprep.subr.mxu0 0.0
    %1832 = vmatpush1.msra.mxu0 0.0
    %1833 = vmatprep.subr.mxu0 0.0
    %1834 = vmatpush1.msra.mxu0 0.0
    %1835 = vmatprep.subr.mxu0 0.0
    %1836 = vmatpush1.msra.mxu0 0.0
    %1837 = vmatprep.subr.mxu0 0.0
    %1838 = vmatpush1.msra.mxu0 0.0
    %1839 = vmatprep.subr.mxu0 0.0
    %1840 = vmatpush1.msra.mxu0 0.0
    %1841 = vmatprep.subr.mxu0 0.0
    %1842 = vmatpush1.msra.mxu0 0.0
    %1843 = vmatprep.subr.mxu0 0.0
    %1844 = vmatpush1.msra.mxu0 0.0
    %1845 = vmatprep.subr.mxu0 0.0
    %1846 = vmatpush1.msra.mxu0 0.0
    %1847 = vmatprep.subr.mxu0 0.0
    %1848 = vmatpush1.msra.mxu0 0.0
    %1849 = vmatprep.subr.mxu0 0.0
    %1850 = vmatpush1.msra.mxu0 0.0
    %1851 = vmatprep.subr.mxu0 0.0
    %1852 = vmatpush1.msra.mxu0 0.0
    %1853 = vmatprep.mubr.f32.mxu0 0.0
    %1854 = vmatmul.mubr.f32.gmra.mrb[0].mxu0 %v118
    %v1855 = vpop.f32.mrb[0].mxu0
    %v1856 = vadd.f32 0.0, %v1855
    %v1857 = vpop.f32.mrb[0].mxu0
    %v1858 = vadd.f32 0.0, %v1857
    %1859 = vdwg.mxu0
    %1860 = vmatprep.subr.mxu0 %v1396
    %1861 = vmatpush1.msra.mxu0 %v1394
    %1862 = vmatprep.subr.mxu0 0.0
    %1863 = vmatpush1.msra.mxu0 0.0
    %1864 = vmatprep.subr.mxu0 0.0
    %1865 = vmatpush1.msra.mxu0 0.0
    %1866 = vmatprep.subr.mxu0 0.0
    %1867 = vmatpush1.msra.mxu0 0.0
    %1868 = vmatprep.subr.mxu0 0.0
    %1869 = vmatpush1.msra.mxu0 0.0
    %1870 = vmatprep.subr.mxu0 0.0
    %1871 = vmatpush1.msra.mxu0 0.0
    %1872 = vmatprep.subr.mxu0 0.0
    %1873 = vmatpush1.msra.mxu0 0.0
    %1874 = vmatprep.subr.mxu0 0.0
    %1875 = vmatpush1.msra.mxu0 0.0
    %1876 = vmatprep.subr.mxu0 0.0
    %1877 = vmatpush1.msra.mxu0 0.0
    %1878 = vmatprep.subr.mxu0 0.0
    %1879 = vmatpush1.msra.mxu0 0.0
    %1880 = vmatprep.subr.mxu0 0.0
    %1881 = vmatpush1.msra.mxu0 0.0
    %1882 = vmatprep.subr.mxu0 0.0
    %1883 = vmatpush1.msra.mxu0 0.0
    %1884 = vmatprep.subr.mxu0 0.0
    %1885 = vmatpush1.msra.mxu0 0.0
    %1886 = vmatprep.subr.mxu0 0.0
    %1887 = vmatpush1.msra.mxu0 0.0
    %1888 = vmatprep.subr.mxu0 0.0
    %1889 = vmatpush1.msra.mxu0 0.0
    %1890 = vmatprep.subr.mxu0 0.0
    %1891 = vmatpush1.msra.mxu0 0.0
    %1892 = vmatprep.subr.mxu0 0.0
    %1893 = vmatpush1.msra.mxu0 0.0
    %1894 = vmatprep.subr.mxu0 0.0
    %1895 = vmatpush1.msra.mxu0 0.0
    %1896 = vmatprep.subr.mxu0 0.0
    %1897 = vmatpush1.msra.mxu0 0.0
    %1898 = vmatprep.subr.mxu0 0.0
    %1899 = vmatpush1.msra.mxu0 0.0
    %1900 = vmatprep.subr.mxu0 0.0
    %1901 = vmatpush1.msra.mxu0 0.0
    %1902 = vmatprep.subr.mxu0 0.0
    %1903 = vmatpush1.msra.mxu0 0.0
    %1904 = vmatprep.subr.mxu0 0.0
    %1905 = vmatpush1.msra.mxu0 0.0
    %1906 = vmatprep.subr.mxu0 0.0
    %1907 = vmatpush1.msra.mxu0 0.0
    %1908 = vmatprep.subr.mxu0 0.0
    %1909 = vmatpush1.msra.mxu0 0.0
    %1910 = vmatprep.subr.mxu0 0.0
    %1911 = vmatpush1.msra.mxu0 0.0
    %1912 = vmatprep.subr.mxu0 0.0
    %1913 = vmatpush1.msra.mxu0 0.0
    %1914 = vmatprep.subr.mxu0 0.0
    %1915 = vmatpush1.msra.mxu0 0.0
    %1916 = vmatprep.subr.mxu0 0.0
    %1917 = vmatpush1.msra.mxu0 0.0
    %1918 = vmatprep.subr.mxu0 0.0
    %1919 = vmatpush1.msra.mxu0 0.0
    %1920 = vmatprep.subr.mxu0 0.0
    %1921 = vmatpush1.msra.mxu0 0.0
    %1922 = vmatprep.subr.mxu0 0.0
    %1923 = vmatpush1.msra.mxu0 0.0
    %1924 = vmatprep.mubr.f32.mxu0 0.0
    %1925 = vmatmul.mubr.f32.gmra.mrb[0].mxu0 %v118
    %v1926 = vpop.f32.mrb[0].mxu0
    %v1927 = vadd.f32 0.0, %v1926
    %v1928 = vpop.f32.mrb[0].mxu0
    %v1929 = vadd.f32 0.0, %v1928
    %1930 = vdwg.mxu0
    %1931 = vmatprep.subr.mxu0 %v1400
    %1932 = vmatpush1.msra.mxu0 %v1398
    %1933 = vmatprep.subr.mxu0 0.0
    %1934 = vmatpush1.msra.mxu0 0.0
    %1935 = vmatprep.subr.mxu0 0.0
    %1936 = vmatpush1.msra.mxu0 0.0
    %1937 = vmatprep.subr.mxu0 0.0
    %1938 = vmatpush1.msra.mxu0 0.0
    %1939 = vmatprep.subr.mxu0 0.0
    %1940 = vmatpush1.msra.mxu0 0.0
    %1941 = vmatprep.subr.mxu0 0.0
    %1942 = vmatpush1.msra.mxu0 0.0
    %1943 = vmatprep.subr.mxu0 0.0
    %1944 = vmatpush1.msra.mxu0 0.0
    %1945 = vmatprep.subr.mxu0 0.0
    %1946 = vmatpush1.msra.mxu0 0.0
    %1947 = vmatprep.subr.mxu0 0.0
    %1948 = vmatpush1.msra.mxu0 0.0
    %1949 = vmatprep.subr.mxu0 0.0
    %1950 = vmatpush1.msra.mxu0 0.0
    %1951 = vmatprep.subr.mxu0 0.0
    %1952 = vmatpush1.msra.mxu0 0.0
    %1953 = vmatprep.subr.mxu0 0.0
    %1954 = vmatpush1.msra.mxu0 0.0
    %1955 = vmatprep.subr.mxu0 0.0
    %1956 = vmatpush1.msra.mxu0 0.0
    %1957 = vmatprep.subr.mxu0 0.0
    %1958 = vmatpush1.msra.mxu0 0.0
    %1959 = vmatprep.subr.mxu0 0.0
    %1960 = vmatpush1.msra.mxu0 0.0
    %1961 = vmatprep.subr.mxu0 0.0
    %1962 = vmatpush1.msra.mxu0 0.0
    %1963 = vmatprep.subr.mxu0 0.0
    %1964 = vmatpush1.msra.mxu0 0.0
    %1965 = vmatprep.subr.mxu0 0.0
    %1966 = vmatpush1.msra.mxu0 0.0
    %1967 = vmatprep.subr.mxu0 0.0
    %1968 = vmatpush1.msra.mxu0 0.0
    %1969 = vmatprep.subr.mxu0 0.0
    %1970 = vmatpush1.msra.mxu0 0.0
    %1971 = vmatprep.subr.mxu0 0.0
    %1972 = vmatpush1.msra.mxu0 0.0
    %1973 = vmatprep.subr.mxu0 0.0
    %1974 = vmatpush1.msra.mxu0 0.0
    %1975 = vmatprep.subr.mxu0 0.0
    %1976 = vmatpush1.msra.mxu0 0.0
    %1977 = vmatprep.subr.mxu0 0.0
    %1978 = vmatpush1.msra.mxu0 0.0
    %1979 = vmatprep.subr.mxu0 0.0
    %1980 = vmatpush1.msra.mxu0 0.0
    %1981 = vmatprep.subr.mxu0 0.0
    %1982 = vmatpush1.msra.mxu0 0.0
    %1983 = vmatprep.subr.mxu0 0.0
    %1984 = vmatpush1.msra.mxu0 0.0
    %1985 = vmatprep.subr.mxu0 0.0
    %1986 = vmatpush1.msra.mxu0 0.0
    %1987 = vmatprep.subr.mxu0 0.0
    %1988 = vmatpush1.msra.mxu0 0.0
    %1989 = vmatprep.subr.mxu0 0.0
    %1990 = vmatpush1.msra.mxu0 0.0
    %1991 = vmatprep.subr.mxu0 0.0
    %1992 = vmatpush1.msra.mxu0 0.0
    %1993 = vmatprep.subr.mxu0 0.0
    %1994 = vmatpush1.msra.mxu0 0.0
    %1995 = vmatprep.mubr.f32.mxu0 0.0
    %1996 = vmatmul.mubr.f32.gmra.mrb[0].mxu0 %v118
    %v1997 = vpop.f32.mrb[0].mxu0
    %v1998 = vadd.f32 0.0, %v1997
    %v1999 = vpop.f32.mrb[0].mxu0
    %v2000 = vadd.f32 0.0, %v1999
    %2001 = vdwg.mxu0
    %2002 = vmatprep.subr.mxu0 %v1404
    %2003 = vmatpush1.msra.mxu0 %v1402
    %2004 = vmatprep.subr.mxu0 0.0
    %2005 = vmatpush1.msra.mxu0 0.0
    %2006 = vmatprep.subr.mxu0 0.0
    %2007 = vmatpush1.msra.mxu0 0.0
    %2008 = vmatprep.subr.mxu0 0.0
    %2009 = vmatpush1.msra.mxu0 0.0
    %2010 = vmatprep.subr.mxu0 0.0
    %2011 = vmatpush1.msra.mxu0 0.0
    %2012 = vmatprep.subr.mxu0 0.0
    %2013 = vmatpush1.msra.mxu0 0.0
    %2014 = vmatprep.subr.mxu0 0.0
    %2015 = vmatpush1.msra.mxu0 0.0
    %2016 = vmatprep.subr.mxu0 0.0
    %2017 = vmatpush1.msra.mxu0 0.0
    %2018 = vmatprep.subr.mxu0 0.0
    %2019 = vmatpush1.msra.mxu0 0.0
    %2020 = vmatprep.subr.mxu0 0.0
    %2021 = vmatpush1.msra.mxu0 0.0
    %2022 = vmatprep.subr.mxu0 0.0
    %2023 = vmatpush1.msra.mxu0 0.0
    %2024 = vmatprep.subr.mxu0 0.0
    %2025 = vmatpush1.msra.mxu0 0.0
    %2026 = vmatprep.subr.mxu0 0.0
    %2027 = vmatpush1.msra.mxu0 0.0
    %2028 = vmatprep.subr.mxu0 0.0
    %2029 = vmatpush1.msra.mxu0 0.0
    %2030 = vmatprep.subr.mxu0 0.0
    %2031 = vmatpush1.msra.mxu0 0.0
    %2032 = vmatprep.subr.mxu0 0.0
    %2033 = vmatpush1.msra.mxu0 0.0
    %2034 = vmatprep.subr.mxu0 0.0
    %2035 = vmatpush1.msra.mxu0 0.0
    %2036 = vmatprep.subr.mxu0 0.0
    %2037 = vmatpush1.msra.mxu0 0.0
    %2038 = vmatprep.subr.mxu0 0.0
    %2039 = vmatpush1.msra.mxu0 0.0
    %2040 = vmatprep.subr.mxu0 0.0
    %2041 = vmatpush1.msra.mxu0 0.0
    %2042 = vmatprep.subr.mxu0 0.0
    %2043 = vmatpush1.msra.mxu0 0.0
    %2044 = vmatprep.subr.mxu0 0.0
    %2045 = vmatpush1.msra.mxu0 0.0
    %2046 = vmatprep.subr.mxu0 0.0
    %2047 = vmatpush1.msra.mxu0 0.0
    %2048 = vmatprep.subr.mxu0 0.0
    %2049 = vmatpush1.msra.mxu0 0.0
    %2050 = vmatprep.subr.mxu0 0.0
    %2051 = vmatpush1.msra.mxu0 0.0
    %2052 = vmatprep.subr.mxu0 0.0
    %2053 = vmatpush1.msra.mxu0 0.0
    %2054 = vmatprep.subr.mxu0 0.0
    %2055 = vmatpush1.msra.mxu0 0.0
    %2056 = vmatprep.subr.mxu0 0.0
    %2057 = vmatpush1.msra.mxu0 0.0
    %2058 = vmatprep.subr.mxu0 0.0
    %2059 = vmatpush1.msra.mxu0 0.0
    %2060 = vmatprep.subr.mxu0 0.0
    %2061 = vmatpush1.msra.mxu0 0.0
    %2062 = vmatprep.subr.mxu0 0.0
    %2063 = vmatpush1.msra.mxu0 0.0
    %2064 = vmatprep.subr.mxu0 0.0
    %2065 = vmatpush1.msra.mxu0 0.0
    %2066 = vmatprep.mubr.f32.mxu0 0.0
    %2067 = vmatmul.mubr.f32.gmra.mrb[0].mxu0 %v118
    %v2068 = vpop.f32.mrb[0].mxu0
    %v2069 = vadd.f32 0.0, %v2068
    %v2070 = vpop.f32.mrb[0].mxu0
    %v2071 = vadd.f32 0.0, %v2070
    %2072 = vdwg.mxu0
    %2073 = vmatprep.subr.mxu0 %v1408
    %2074 = vmatpush1.msra.mxu0 %v1406
    %2075 = vmatprep.subr.mxu0 0.0
    %2076 = vmatpush1.msra.mxu0 0.0
    %2077 = vmatprep.subr.mxu0 0.0
    %2078 = vmatpush1.msra.mxu0 0.0
    %2079 = vmatprep.subr.mxu0 0.0
    %2080 = vmatpush1.msra.mxu0 0.0
    %2081 = vmatprep.subr.mxu0 0.0
    %2082 = vmatpush1.msra.mxu0 0.0
    %2083 = vmatprep.subr.mxu0 0.0
    %2084 = vmatpush1.msra.mxu0 0.0
    %2085 = vmatprep.subr.mxu0 0.0
    %2086 = vmatpush1.msra.mxu0 0.0
    %2087 = vmatprep.subr.mxu0 0.0
    %2088 = vmatpush1.msra.mxu0 0.0
    %2089 = vmatprep.subr.mxu0 0.0
    %2090 = vmatpush1.msra.mxu0 0.0
    %2091 = vmatprep.subr.mxu0 0.0
    %2092 = vmatpush1.msra.mxu0 0.0
    %2093 = vmatprep.subr.mxu0 0.0
    %2094 = vmatpush1.msra.mxu0 0.0
    %2095 = vmatprep.subr.mxu0 0.0
    %2096 = vmatpush1.msra.mxu0 0.0
    %2097 = vmatprep.subr.mxu0 0.0
    %2098 = vmatpush1.msra.mxu0 0.0
    %2099 = vmatprep.subr.mxu0 0.0
    %2100 = vmatpush1.msra.mxu0 0.0
    %2101 = vmatprep.subr.mxu0 0.0
    %2102 = vmatpush1.msra.mxu0 0.0
    %2103 = vmatprep.subr.mxu0 0.0
    %2104 = vmatpush1.msra.mxu0 0.0
    %2105 = vmatprep.subr.mxu0 0.0
    %2106 = vmatpush1.msra.mxu0 0.0
    %2107 = vmatprep.subr.mxu0 0.0
    %2108 = vmatpush1.msra.mxu0 0.0
    %2109 = vmatprep.subr.mxu0 0.0
    %2110 = vmatpush1.msra.mxu0 0.0
    %2111 = vmatprep.subr.mxu0 0.0
    %2112 = vmatpush1.msra.mxu0 0.0
    %2113 = vmatprep.subr.mxu0 0.0
    %2114 = vmatpush1.msra.mxu0 0.0
    %2115 = vmatprep.subr.mxu0 0.0
    %2116 = vmatpush1.msra.mxu0 0.0
    %2117 = vmatprep.subr.mxu0 0.0
    %2118 = vmatpush1.msra.mxu0 0.0
    %2119 = vmatprep.subr.mxu0 0.0
    %2120 = vmatpush1.msra.mxu0 0.0
    %2121 = vmatprep.subr.mxu0 0.0
    %2122 = vmatpush1.msra.mxu0 0.0
    %2123 = vmatprep.subr.mxu0 0.0
    %2124 = vmatpush1.msra.mxu0 0.0
    %2125 = vmatprep.subr.mxu0 0.0
    %2126 = vmatpush1.msra.mxu0 0.0
    %2127 = vmatprep.subr.mxu0 0.0
    %2128 = vmatpush1.msra.mxu0 0.0
    %2129 = vmatprep.subr.mxu0 0.0
    %2130 = vmatpush1.msra.mxu0 0.0
    %2131 = vmatprep.subr.mxu0 0.0
    %2132 = vmatpush1.msra.mxu0 0.0
    %2133 = vmatprep.subr.mxu0 0.0
    %2134 = vmatpush1.msra.mxu0 0.0
    %2135 = vmatprep.subr.mxu0 0.0
    %2136 = vmatpush1.msra.mxu0 0.0
    %2137 = vmatprep.mubr.f32.mxu0 0.0
    %2138 = vmatmul.mubr.f32.gmra.mrb[0].mxu0 %v118
    %v2139 = vpop.f32.mrb[0].mxu0
    %v2140 = vadd.f32 0.0, %v2139
    %v2141 = vpop.f32.mrb[0].mxu0
    %v2142 = vadd.f32 0.0, %v2141
    %2143 = vdwg.mxu0
    %2144 = vmatprep.subr.mxu0 %v1412
    %2145 = vmatpush1.msra.mxu0 %v1410
    %2146 = vmatprep.subr.mxu0 0.0
    %2147 = vmatpush1.msra.mxu0 0.0
    %2148 = vmatprep.subr.mxu0 0.0
    %2149 = vmatpush1.msra.mxu0 0.0
    %2150 = vmatprep.subr.mxu0 0.0
    %2151 = vmatpush1.msra.mxu0 0.0
    %2152 = vmatprep.subr.mxu0 0.0
    %2153 = vmatpush1.msra.mxu0 0.0
    %2154 = vmatprep.subr.mxu0 0.0
    %2155 = vmatpush1.msra.mxu0 0.0
    %2156 = vmatprep.subr.mxu0 0.0
    %2157 = vmatpush1.msra.mxu0 0.0
    %2158 = vmatprep.subr.mxu0 0.0
    %2159 = vmatpush1.msra.mxu0 0.0
    %2160 = vmatprep.subr.mxu0 0.0
    %2161 = vmatpush1.msra.mxu0 0.0
    %2162 = vmatprep.subr.mxu0 0.0
    %2163 = vmatpush1.msra.mxu0 0.0
    %2164 = vmatprep.subr.mxu0 0.0
    %2165 = vmatpush1.msra.mxu0 0.0
    %2166 = vmatprep.subr.mxu0 0.0
    %2167 = vmatpush1.msra.mxu0 0.0
    %2168 = vmatprep.subr.mxu0 0.0
    %2169 = vmatpush1.msra.mxu0 0.0
    %2170 = vmatprep.subr.mxu0 0.0
    %2171 = vmatpush1.msra.mxu0 0.0
    %2172 = vmatprep.subr.mxu0 0.0
    %2173 = vmatpush1.msra.mxu0 0.0
    %2174 = vmatprep.subr.mxu0 0.0
    %2175 = vmatpush1.msra.mxu0 0.0
    %2176 = vmatprep.subr.mxu0 0.0
    %2177 = vmatpush1.msra.mxu0 0.0
    %2178 = vmatprep.subr.mxu0 0.0
    %2179 = vmatpush1.msra.mxu0 0.0
    %2180 = vmatprep.subr.mxu0 0.0
    %2181 = vmatpush1.msra.mxu0 0.0
    %2182 = vmatprep.subr.mxu0 0.0
    %2183 = vmatpush1.msra.mxu0 0.0
    %2184 = vmatprep.subr.mxu0 0.0
    %2185 = vmatpush1.msra.mxu0 0.0
    %2186 = vmatprep.subr.mxu0 0.0
    %2187 = vmatpush1.msra.mxu0 0.0
    %2188 = vmatprep.subr.mxu0 0.0
    %2189 = vmatpush1.msra.mxu0 0.0
    %2190 = vmatprep.subr.mxu0 0.0
    %2191 = vmatpush1.msra.mxu0 0.0
    %2192 = vmatprep.subr.mxu0 0.0
    %2193 = vmatpush1.msra.mxu0 0.0
    %2194 = vmatprep.subr.mxu0 0.0
    %2195 = vmatpush1.msra.mxu0 0.0
    %2196 = vmatprep.subr.mxu0 0.0
    %2197 = vmatpush1.msra.mxu0 0.0
    %2198 = vmatprep.subr.mxu0 0.0
    %2199 = vmatpush1.msra.mxu0 0.0
    %2200 = vmatprep.subr.mxu0 0.0
    %2201 = vmatpush1.msra.mxu0 0.0
    %2202 = vmatprep.subr.mxu0 0.0
    %2203 = vmatpush1.msra.mxu0 0.0
    %2204 = vmatprep.subr.mxu0 0.0
    %2205 = vmatpush1.msra.mxu0 0.0
    %2206 = vmatprep.subr.mxu0 0.0
    %2207 = vmatpush1.msra.mxu0 0.0
    %2208 = vmatprep.mubr.f32.mxu0 0.0
    %2209 = vmatmul.mubr.f32.gmra.mrb[0].mxu0 %v118
    %v2210 = vpop.f32.mrb[0].mxu0
    %v2211 = vadd.f32 0.0, %v2210
    %v2212 = vpop.f32.mrb[0].mxu0
    %v2213 = vadd.f32 0.0, %v2212
    %2214 = vdwg.mxu0
    %2215 = vmatprep.subr.mxu0 %v1416
    %2216 = vmatpush1.msra.mxu0 %v1414
    %2217 = vmatprep.subr.mxu0 0.0
    %2218 = vmatpush1.msra.mxu0 0.0
    %2219 = vmatprep.subr.mxu0 0.0
    %2220 = vmatpush1.msra.mxu0 0.0
    %2221 = vmatprep.subr.mxu0 0.0
    %2222 = vmatpush1.msra.mxu0 0.0
    %2223 = vmatprep.subr.mxu0 0.0
    %2224 = vmatpush1.msra.mxu0 0.0
    %2225 = vmatprep.subr.mxu0 0.0
    %2226 = vmatpush1.msra.mxu0 0.0
    %2227 = vmatprep.subr.mxu0 0.0
    %2228 = vmatpush1.msra.mxu0 0.0
    %2229 = vmatprep.subr.mxu0 0.0
    %2230 = vmatpush1.msra.mxu0 0.0
    %2231 = vmatprep.subr.mxu0 0.0
    %2232 = vmatpush1.msra.mxu0 0.0
    %2233 = vmatprep.subr.mxu0 0.0
    %2234 = vmatpush1.msra.mxu0 0.0
    %2235 = vmatprep.subr.mxu0 0.0
    %2236 = vmatpush1.msra.mxu0 0.0
    %2237 = vmatprep.subr.mxu0 0.0
    %2238 = vmatpush1.msra.mxu0 0.0
    %2239 = vmatprep.subr.mxu0 0.0
    %2240 = vmatpush1.msra.mxu0 0.0
    %2241 = vmatprep.subr.mxu0 0.0
    %2242 = vmatpush1.msra.mxu0 0.0
    %2243 = vmatprep.subr.mxu0 0.0
    %2244 = vmatpush1.msra.mxu0 0.0
    %2245 = vmatprep.subr.mxu0 0.0
    %2246 = vmatpush1.msra.mxu0 0.0
    %2247 = vmatprep.subr.mxu0 0.0
    %2248 = vmatpush1.msra.mxu0 0.0
    %2249 = vmatprep.subr.mxu0 0.0
    %2250 = vmatpush1.msra.mxu0 0.0
    %2251 = vmatprep.subr.mxu0 0.0
    %2252 = vmatpush1.msra.mxu0 0.0
    %2253 = vmatprep.subr.mxu0 0.0
    %2254 = vmatpush1.msra.mxu0 0.0
    %2255 = vmatprep.subr.mxu0 0.0
    %2256 = vmatpush1.msra.mxu0 0.0
    %2257 = vmatprep.subr.mxu0 0.0
    %2258 = vmatpush1.msra.mxu0 0.0
    %2259 = vmatprep.subr.mxu0 0.0
    %2260 = vmatpush1.msra.mxu0 0.0
    %2261 = vmatprep.subr.mxu0 0.0
    %2262 = vmatpush1.msra.mxu0 0.0
    %2263 = vmatprep.subr.mxu0 0.0
    %2264 = vmatpush1.msra.mxu0 0.0
    %2265 = vmatprep.subr.mxu0 0.0
    %2266 = vmatpush1.msra.mxu0 0.0
    %2267 = vmatprep.subr.mxu0 0.0
    %2268 = vmatpush1.msra.mxu0 0.0
    %2269 = vmatprep.subr.mxu0 0.0
    %2270 = vmatpush1.msra.mxu0 0.0
    %2271 = vmatprep.subr.mxu0 0.0
    %2272 = vmatpush1.msra.mxu0 0.0
    %2273 = vmatprep.subr.mxu0 0.0
    %2274 = vmatpush1.msra.mxu0 0.0
    %2275 = vmatprep.subr.mxu0 0.0
    %2276 = vmatpush1.msra.mxu0 0.0
    %2277 = vmatprep.subr.mxu0 0.0
    %2278 = vmatpush1.msra.mxu0 0.0
    %2279 = vmatprep.mubr.f32.mxu0 0.0
    %2280 = vmatmul.mubr.f32.gmra.mrb[0].mxu0 %v118
    %v2281 = vpop.f32.mrb[0].mxu0
    %v2282 = vadd.f32 0.0, %v2281
    %v2283 = vpop.f32.mrb[0].mxu0
    %v2284 = vadd.f32 0.0, %v2283
    %2285 = vdwg.mxu0
    %2286 = vmatprep.subr.mxu0 %v1420
    %2287 = vmatpush1.msra.mxu0 %v1418
    %2288 = vmatprep.subr.mxu0 0.0
    %2289 = vmatpush1.msra.mxu0 0.0
    %2290 = vmatprep.subr.mxu0 0.0
    %2291 = vmatpush1.msra.mxu0 0.0
    %2292 = vmatprep.subr.mxu0 0.0
    %2293 = vmatpush1.msra.mxu0 0.0
    %2294 = vmatprep.subr.mxu0 0.0
    %2295 = vmatpush1.msra.mxu0 0.0
    %2296 = vmatprep.subr.mxu0 0.0
    %2297 = vmatpush1.msra.mxu0 0.0
    %2298 = vmatprep.subr.mxu0 0.0
    %2299 = vmatpush1.msra.mxu0 0.0
    %2300 = vmatprep.subr.mxu0 0.0
    %2301 = vmatpush1.msra.mxu0 0.0
    %2302 = vmatprep.subr.mxu0 0.0
    %2303 = vmatpush1.msra.mxu0 0.0
    %2304 = vmatprep.subr.mxu0 0.0
    %2305 = vmatpush1.msra.mxu0 0.0
    %2306 = vmatprep.subr.mxu0 0.0
    %2307 = vmatpush1.msra.mxu0 0.0
    %2308 = vmatprep.subr.mxu0 0.0
    %2309 = vmatpush1.msra.mxu0 0.0
    %2310 = vmatprep.subr.mxu0 0.0
    %2311 = vmatpush1.msra.mxu0 0.0
    %2312 = vmatprep.subr.mxu0 0.0
    %2313 = vmatpush1.msra.mxu0 0.0
    %2314 = vmatprep.subr.mxu0 0.0
    %2315 = vmatpush1.msra.mxu0 0.0
    %2316 = vmatprep.subr.mxu0 0.0
    %2317 = vmatpush1.msra.mxu0 0.0
    %2318 = vmatprep.subr.mxu0 0.0
    %2319 = vmatpush1.msra.mxu0 0.0
    %2320 = vmatprep.subr.mxu0 0.0
    %2321 = vmatpush1.msra.mxu0 0.0
    %2322 = vmatprep.subr.mxu0 0.0
    %2323 = vmatpush1.msra.mxu0 0.0
    %2324 = vmatprep.subr.mxu0 0.0
    %2325 = vmatpush1.msra.mxu0 0.0
    %2326 = vmatprep.subr.mxu0 0.0
    %2327 = vmatpush1.msra.mxu0 0.0
    %2328 = vmatprep.subr.mxu0 0.0
    %2329 = vmatpush1.msra.mxu0 0.0
    %2330 = vmatprep.subr.mxu0 0.0
    %2331 = vmatpush1.msra.mxu0 0.0
    %2332 = vmatprep.subr.mxu0 0.0
    %2333 = vmatpush1.msra.mxu0 0.0
    %2334 = vmatprep.subr.mxu0 0.0
    %2335 = vmatpush1.msra.mxu0 0.0
    %2336 = vmatprep.subr.mxu0 0.0
    %2337 = vmatpush1.msra.mxu0 0.0
    %2338 = vmatprep.subr.mxu0 0.0
    %2339 = vmatpush1.msra.mxu0 0.0
    %2340 = vmatprep.subr.mxu0 0.0
    %2341 = vmatpush1.msra.mxu0 0.0
    %2342 = vmatprep.subr.mxu0 0.0
    %2343 = vmatpush1.msra.mxu0 0.0
    %2344 = vmatprep.subr.mxu0 0.0
    %2345 = vmatpush1.msra.mxu0 0.0
    %2346 = vmatprep.subr.mxu0 0.0
    %2347 = vmatpush1.msra.mxu0 0.0
    %2348 = vmatprep.subr.mxu0 0.0
    %2349 = vmatpush1.msra.mxu0 0.0
    %2350 = vmatprep.mubr.f32.mxu0 0.0
    %2351 = vmatmul.mubr.f32.gmra.mrb[0].mxu0 %v118
    %v2352 = vpop.f32.mrb[0].mxu0
    %v2353 = vadd.f32 0.0, %v2352
    %v2354 = vpop.f32.mrb[0].mxu0
    %v2355 = vadd.f32 0.0, %v2354
    %2356 = vdwg.mxu0
    %2357 = vmatprep.subr.mxu0 %v1424
    %2358 = vmatpush1.msra.mxu0 %v1422
    %2359 = vmatprep.subr.mxu0 0.0
    %2360 = vmatpush1.msra.mxu0 0.0
    %2361 = vmatprep.subr.mxu0 0.0
    %2362 = vmatpush1.msra.mxu0 0.0
    %2363 = vmatprep.subr.mxu0 0.0
    %2364 = vmatpush1.msra.mxu0 0.0
    %2365 = vmatprep.subr.mxu0 0.0
    %2366 = vmatpush1.msra.mxu0 0.0
    %2367 = vmatprep.subr.mxu0 0.0
    %2368 = vmatpush1.msra.mxu0 0.0
    %2369 = vmatprep.subr.mxu0 0.0
    %2370 = vmatpush1.msra.mxu0 0.0
    %2371 = vmatprep.subr.mxu0 0.0
    %2372 = vmatpush1.msra.mxu0 0.0
    %2373 = vmatprep.subr.mxu0 0.0
    %2374 = vmatpush1.msra.mxu0 0.0
    %2375 = vmatprep.subr.mxu0 0.0
    %2376 = vmatpush1.msra.mxu0 0.0
    %2377 = vmatprep.subr.mxu0 0.0
    %2378 = vmatpush1.msra.mxu0 0.0
    %2379 = vmatprep.subr.mxu0 0.0
    %2380 = vmatpush1.msra.mxu0 0.0
    %2381 = vmatprep.subr.mxu0 0.0
    %2382 = vmatpush1.msra.mxu0 0.0
    %2383 = vmatprep.subr.mxu0 0.0
    %2384 = vmatpush1.msra.mxu0 0.0
    %2385 = vmatprep.subr.mxu0 0.0
    %2386 = vmatpush1.msra.mxu0 0.0
    %2387 = vmatprep.subr.mxu0 0.0
    %2388 = vmatpush1.msra.mxu0 0.0
    %2389 = vmatprep.subr.mxu0 0.0
    %2390 = vmatpush1.msra.mxu0 0.0
    %2391 = vmatprep.subr.mxu0 0.0
    %2392 = vmatpush1.msra.mxu0 0.0
    %2393 = vmatprep.subr.mxu0 0.0
    %2394 = vmatpush1.msra.mxu0 0.0
    %2395 = vmatprep.subr.mxu0 0.0
    %2396 = vmatpush1.msra.mxu0 0.0
    %2397 = vmatprep.subr.mxu0 0.0
    %2398 = vmatpush1.msra.mxu0 0.0
    %2399 = vmatprep.subr.mxu0 0.0
    %2400 = vmatpush1.msra.mxu0 0.0
    %2401 = vmatprep.subr.mxu0 0.0
    %2402 = vmatpush1.msra.mxu0 0.0
    %2403 = vmatprep.subr.mxu0 0.0
    %2404 = vmatpush1.msra.mxu0 0.0
    %2405 = vmatprep.subr.mxu0 0.0
    %2406 = vmatpush1.msra.mxu0 0.0
    %2407 = vmatprep.subr.mxu0 0.0
    %2408 = vmatpush1.msra.mxu0 0.0
    %2409 = vmatprep.subr.mxu0 0.0
    %2410 = vmatpush1.msra.mxu0 0.0
    %2411 = vmatprep.subr.mxu0 0.0
    %2412 = vmatpush1.msra.mxu0 0.0
    %2413 = vmatprep.subr.mxu0 0.0
    %2414 = vmatpush1.msra.mxu0 0.0
    %2415 = vmatprep.subr.mxu0 0.0
    %2416 = vmatpush1.msra.mxu0 0.0
    %2417 = vmatprep.subr.mxu0 0.0
    %2418 = vmatpush1.msra.mxu0 0.0
    %2419 = vmatprep.subr.mxu0 0.0
    %2420 = vmatpush1.msra.mxu0 0.0
    %2421 = vmatprep.mubr.f32.mxu0 0.0
    %2422 = vmatmul.mubr.f32.gmra.mrb[0].mxu0 %v118
    %v2423 = vpop.f32.mrb[0].mxu0
    %v2424 = vadd.f32 0.0, %v2423
    %v2425 = vpop.f32.mrb[0].mxu0
    %v2426 = vadd.f32 0.0, %v2425
    %2427 = vdwg.mxu0
    %2428 = vmatprep.subr.mxu0 %v1428
    %2429 = vmatpush1.msra.mxu0 %v1426
    %2430 = vmatprep.subr.mxu0 0.0
    %2431 = vmatpush1.msra.mxu0 0.0
    %2432 = vmatprep.subr.mxu0 0.0
    %2433 = vmatpush1.msra.mxu0 0.0
    %2434 = vmatprep.subr.mxu0 0.0
    %2435 = vmatpush1.msra.mxu0 0.0
    %2436 = vmatprep.subr.mxu0 0.0
    %2437 = vmatpush1.msra.mxu0 0.0
    %2438 = vmatprep.subr.mxu0 0.0
    %2439 = vmatpush1.msra.mxu0 0.0
    %2440 = vmatprep.subr.mxu0 0.0
    %2441 = vmatpush1.msra.mxu0 0.0
    %2442 = vmatprep.subr.mxu0 0.0
    %2443 = vmatpush1.msra.mxu0 0.0
    %2444 = vmatprep.subr.mxu0 0.0
    %2445 = vmatpush1.msra.mxu0 0.0
    %2446 = vmatprep.subr.mxu0 0.0
    %2447 = vmatpush1.msra.mxu0 0.0
    %2448 = vmatprep.subr.mxu0 0.0
    %2449 = vmatpush1.msra.mxu0 0.0
    %2450 = vmatprep.subr.mxu0 0.0
    %2451 = vmatpush1.msra.mxu0 0.0
    %2452 = vmatprep.subr.mxu0 0.0
    %2453 = vmatpush1.msra.mxu0 0.0
    %2454 = vmatprep.subr.mxu0 0.0
    %2455 = vmatpush1.msra.mxu0 0.0
    %2456 = vmatprep.subr.mxu0 0.0
    %2457 = vmatpush1.msra.mxu0 0.0
    %2458 = vmatprep.subr.mxu0 0.0
    %2459 = vmatpush1.msra.mxu0 0.0
    %2460 = vmatprep.subr.mxu0 0.0
    %2461 = vmatpush1.msra.mxu0 0.0
    %2462 = vmatprep.subr.mxu0 0.0
    %2463 = vmatpush1.msra.mxu0 0.0
    %2464 = vmatprep.subr.mxu0 0.0
    %2465 = vmatpush1.msra.mxu0 0.0
    %2466 = vmatprep.subr.mxu0 0.0
    %2467 = vmatpush1.msra.mxu0 0.0
    %2468 = vmatprep.subr.mxu0 0.0
    %2469 = vmatpush1.msra.mxu0 0.0
    %2470 = vmatprep.subr.mxu0 0.0
    %2471 = vmatpush1.msra.mxu0 0.0
    %2472 = vmatprep.subr.mxu0 0.0
    %2473 = vmatpush1.msra.mxu0 0.0
    %2474 = vmatprep.subr.mxu0 0.0
    %2475 = vmatpush1.msra.mxu0 0.0
    %2476 = vmatprep.subr.mxu0 0.0
    %2477 = vmatpush1.msra.mxu0 0.0
    %2478 = vmatprep.subr.mxu0 0.0
    %2479 = vmatpush1.msra.mxu0 0.0
    %2480 = vmatprep.subr.mxu0 0.0
    %2481 = vmatpush1.msra.mxu0 0.0
    %2482 = vmatprep.subr.mxu0 0.0
    %2483 = vmatpush1.msra.mxu0 0.0
    %2484 = vmatprep.subr.mxu0 0.0
    %2485 = vmatpush1.msra.mxu0 0.0
    %2486 = vmatprep.subr.mxu0 0.0
    %2487 = vmatpush1.msra.mxu0 0.0
    %2488 = vmatprep.subr.mxu0 0.0
    %2489 = vmatpush1.msra.mxu0 0.0
    %2490 = vmatprep.subr.mxu0 0.0
    %2491 = vmatpush1.msra.mxu0 0.0
    %2492 = vmatprep.mubr.f32.mxu0 0.0
    %2493 = vmatmul.mubr.f32.gmra.mrb[0].mxu0 %v118
    %v2494 = vpop.f32.mrb[0].mxu0
    %v2495 = vadd.f32 0.0, %v2494
    %v2496 = vpop.f32.mrb[0].mxu0
    %v2497 = vadd.f32 0.0, %v2496
    %2498 = vdwg.mxu0
    %2499 = vmatprep.subr.mxu0 %v1432
    %2500 = vmatpush1.msra.mxu0 %v1430
    %2501 = vmatprep.subr.mxu0 0.0
    %2502 = vmatpush1.msra.mxu0 0.0
    %2503 = vmatprep.subr.mxu0 0.0
    %2504 = vmatpush1.msra.mxu0 0.0
    %2505 = vmatprep.subr.mxu0 0.0
    %2506 = vmatpush1.msra.mxu0 0.0
    %2507 = vmatprep.subr.mxu0 0.0
    %2508 = vmatpush1.msra.mxu0 0.0
    %2509 = vmatprep.subr.mxu0 0.0
    %2510 = vmatpush1.msra.mxu0 0.0
    %2511 = vmatprep.subr.mxu0 0.0
    %2512 = vmatpush1.msra.mxu0 0.0
    %2513 = vmatprep.subr.mxu0 0.0
    %2514 = vmatpush1.msra.mxu0 0.0
    %2515 = vmatprep.subr.mxu0 0.0
    %2516 = vmatpush1.msra.mxu0 0.0
    %2517 = vmatprep.subr.mxu0 0.0
    %2518 = vmatpush1.msra.mxu0 0.0
    %2519 = vmatprep.subr.mxu0 0.0
    %2520 = vmatpush1.msra.mxu0 0.0
    %2521 = vmatprep.subr.mxu0 0.0
    %2522 = vmatpush1.msra.mxu0 0.0
    %2523 = vmatprep.subr.mxu0 0.0
    %2524 = vmatpush1.msra.mxu0 0.0
    %2525 = vmatprep.subr.mxu0 0.0
    %2526 = vmatpush1.msra.mxu0 0.0
    %2527 = vmatprep.subr.mxu0 0.0
    %2528 = vmatpush1.msra.mxu0 0.0
    %2529 = vmatprep.subr.mxu0 0.0
    %2530 = vmatpush1.msra.mxu0 0.0
    %2531 = vmatprep.subr.mxu0 0.0
    %2532 = vmatpush1.msra.mxu0 0.0
    %2533 = vmatprep.subr.mxu0 0.0
    %2534 = vmatpush1.msra.mxu0 0.0
    %2535 = vmatprep.subr.mxu0 0.0
    %2536 = vmatpush1.msra.mxu0 0.0
    %2537 = vmatprep.subr.mxu0 0.0
    %2538 = vmatpush1.msra.mxu0 0.0
    %2539 = vmatprep.subr.mxu0 0.0
    %2540 = vmatpush1.msra.mxu0 0.0
    %2541 = vmatprep.subr.mxu0 0.0
    %2542 = vmatpush1.msra.mxu0 0.0
    %2543 = vmatprep.subr.mxu0 0.0
    %2544 = vmatpush1.msra.mxu0 0.0
    %2545 = vmatprep.subr.mxu0 0.0
    %2546 = vmatpush1.msra.mxu0 0.0
    %2547 = vmatprep.subr.mxu0 0.0
    %2548 = vmatpush1.msra.mxu0 0.0
    %2549 = vmatprep.subr.mxu0 0.0
    %2550 = vmatpush1.msra.mxu0 0.0
    %2551 = vmatprep.subr.mxu0 0.0
    %2552 = vmatpush1.msra.mxu0 0.0
    %2553 = vmatprep.subr.mxu0 0.0
    %2554 = vmatpush1.msra.mxu0 0.0
    %2555 = vmatprep.subr.mxu0 0.0
    %2556 = vmatpush1.msra.mxu0 0.0
    %2557 = vmatprep.subr.mxu0 0.0
    %2558 = vmatpush1.msra.mxu0 0.0
    %2559 = vmatprep.subr.mxu0 0.0
    %2560 = vmatpush1.msra.mxu0 0.0
    %2561 = vmatprep.subr.mxu0 0.0
    %2562 = vmatpush1.msra.mxu0 0.0
    %2563 = vmatprep.mubr.f32.mxu0 0.0
    %2564 = vmatmul.mubr.f32.gmra.mrb[0].mxu0 %v118
    %v2565 = vpop.f32.mrb[0].mxu0
    %v2566 = vadd.f32 0.0, %v2565
    %v2567 = vpop.f32.mrb[0].mxu0
    %v2568 = vadd.f32 0.0, %v2567
    %2569 = vdwg.mxu0
    %v2570 = vadd.f32 %v252, %v254
    %v2571 = vadd.f32 %v2570, %v323
    %v2572 = vadd.f32 %v2571, %v325
    %v2573 = vadd.f32 %v2572, %v394
    %v2574 = vadd.f32 %v2573, %v396
    %v2575 = vadd.f32 %v2574, %v465
    %v2576 = vadd.f32 %v2575, %v467
    %v2577 = vadd.f32 %v2576, %v536
    %v2578 = vadd.f32 %v2577, %v538
    %v2579 = vadd.f32 %v2578, %v607
    %v2580 = vadd.f32 %v2579, %v609
    %v2581 = vadd.f32 %v2580, %v678
    %v2582 = vadd.f32 %v2581, %v680
    %v2583 = vadd.f32 %v2582, %v749
    %v2584 = vadd.f32 %v2583, %v751
    %v2585 = vadd.f32 %v2584, %v820
    %v2586 = vadd.f32 %v2585, %v822
    %v2587 = vadd.f32 %v2586, %v891
    %v2588 = vadd.f32 %v2587, %v893
    %v2589 = vadd.f32 %v2588, %v962
    %v2590 = vadd.f32 %v2589, %v964
    %v2591 = vadd.f32 %v2590, %v1033
    %v2592 = vadd.f32 %v2591, %v1035
    %v2593 = vadd.f32 %v2592, %v1104
    %v2594 = vadd.f32 %v2593, %v1106
    %v2595 = vadd.f32 %v2594, %v1175
    %v2596 = vadd.f32 %v2595, %v1177
    %v2597 = vadd.f32 %v2596, %v1246
    %v2598 = vadd.f32 %v2597, %v1248
    %v2599 = vadd.f32 %v2598, %v1317
    %v2600 = vadd.f32 %v2599, %v1319
    %2601 = vadd.xlane.f32.xlu0 %v2600
    %v2602 = vpop.xlane.xlu0 %2601
    %v2603 = vadd.f32 %v2602, 0.0
    %v2604 = vadd.f32 %v1501, %v1503
    %v2605 = vadd.f32 %v2604, %v1572
    %v2606 = vadd.f32 %v2605, %v1574
    %v2607 = vadd.f32 %v2606, %v1643
    %v2608 = vadd.f32 %v2607, %v1645
    %v2609 = vadd.f32 %v2608, %v1714
    %v2610 = vadd.f32 %v2609, %v1716
    %v2611 = vadd.f32 %v2610, %v1785
    %v2612 = vadd.f32 %v2611, %v1787
    %v2613 = vadd.f32 %v2612, %v1856
    %v2614 = vadd.f32 %v2613, %v1858
    %v2615 = vadd.f32 %v2614, %v1927
    %v2616 = vadd.f32 %v2615, %v1929
    %v2617 = vadd.f32 %v2616, %v1998
    %v2618 = vadd.f32 %v2617, %v2000
    %v2619 = vadd.f32 %v2618, %v2069
    %v2620 = vadd.f32 %v2619, %v2071
    %v2621 = vadd.f32 %v2620, %v2140
    %v2622 = vadd.f32 %v2621, %v2142
    %v2623 = vadd.f32 %v2622, %v2211
    %v2624 = vadd.f32 %v2623, %v2213
    %v2625 = vadd.f32 %v2624, %v2282
    %v2626 = vadd.f32 %v2625, %v2284
    %v2627 = vadd.f32 %v2626, %v2353
    %v2628 = vadd.f32 %v2627, %v2355
    %v2629 = vadd.f32 %v2628, %v2424
    %v2630 = vadd.f32 %v2629, %v2426
    %v2631 = vadd.f32 %v2630, %v2495
    %v2632 = vadd.f32 %v2631, %v2497
    %v2633 = vadd.f32 %v2632, %v2566
    %v2634 = vadd.f32 %v2633, %v2568
    %2635 = vadd.xlane.f32.xlu0 %v2634
    %v2636 = vpop.xlane.xlu0 %2635
    %v2637 = vadd.f32 %v2603, %v2636
    %v2638 = vmul.f32 %v2637, 0.00012207031
    %v2639 = vsub.f32 %v252, %v2638
    %v2640 = vsub.f32 %v254, %v2638
    %v2641 = vsub.f32 %v323, %v2638
    %v2642 = vsub.f32 %v325, %v2638
    %v2643 = vsub.f32 %v394, %v2638
    %v2644 = vsub.f32 %v396, %v2638
    %v2645 = vsub.f32 %v465, %v2638
    %v2646 = vsub.f32 %v467, %v2638
    %v2647 = vsub.f32 %v536, %v2638
    %v2648 = vsub.f32 %v538, %v2638
    %v2649 = vsub.f32 %v607, %v2638
    %v2650 = vsub.f32 %v609, %v2638
    %v2651 = vsub.f32 %v678, %v2638
    %v2652 = vsub.f32 %v680, %v2638
    %v2653 = vsub.f32 %v749, %v2638
    %v2654 = vsub.f32 %v751, %v2638
    %v2655 = vsub.f32 %v820, %v2638
    %v2656 = vsub.f32 %v822, %v2638
    %v2657 = vsub.f32 %v891, %v2638
    %v2658 = vsub.f32 %v893, %v2638
    %v2659 = vsub.f32 %v962, %v2638
    %v2660 = vsub.f32 %v964, %v2638
    %v2661 = vsub.f32 %v1033, %v2638
    %v2662 = vsub.f32 %v1035, %v2638
    %v2663 = vsub.f32 %v1104, %v2638
    %v2664 = vsub.f32 %v1106, %v2638
    %v2665 = vsub.f32 %v1175, %v2638
    %v2666 = vsub.f32 %v1177, %v2638
    %v2667 = vsub.f32 %v1246, %v2638
    %v2668 = vsub.f32 %v1248, %v2638
    %v2669 = vsub.f32 %v1317, %v2638
    %v2670 = vsub.f32 %v1319, %v2638
    %v2671 = vmul.f32 %v2639, %v2639
    %v2672 = vmul.f32 %v2640, %v2640
    %v2673 = vmul.f32 %v2641, %v2641
    %v2674 = vmul.f32 %v2642, %v2642
    %v2675 = vmul.f32 %v2643, %v2643
    %v2676 = vmul.f32 %v2644, %v2644
    %v2677 = vmul.f32 %v2645, %v2645
    %v2678 = vmul.f32 %v2646, %v2646
    %v2679 = vmul.f32 %v2647, %v2647
    %v2680 = vmul.f32 %v2648, %v2648
    %v2681 = vmul.f32 %v2649, %v2649
    %v2682 = vmul.f32 %v2650, %v2650
    %v2683 = vmul.f32 %v2651, %v2651
    %v2684 = vmul.f32 %v2652, %v2652
    %v2685 = vmul.f32 %v2653, %v2653
    %v2686 = vmul.f32 %v2654, %v2654
    %v2687 = vmul.f32 %v2655, %v2655
    %v2688 = vmul.f32 %v2656, %v2656
    %v2689 = vmul.f32 %v2657, %v2657
    %v2690 = vmul.f32 %v2658, %v2658
    %v2691 = vmul.f32 %v2659, %v2659
    %v2692 = vmul.f32 %v2660, %v2660
    %v2693 = vmul.f32 %v2661, %v2661
    %v2694 = vmul.f32 %v2662, %v2662
    %v2695 = vmul.f32 %v2663, %v2663
    %v2696 = vmul.f32 %v2664, %v2664
    %v2697 = vmul.f32 %v2665, %v2665
    %v2698 = vmul.f32 %v2666, %v2666
    %v2699 = vmul.f32 %v2667, %v2667
    %v2700 = vmul.f32 %v2668, %v2668
    %v2701 = vmul.f32 %v2669, %v2669
    %v2702 = vmul.f32 %v2670, %v2670
    %v2703 = vadd.f32 %v2671, %v2672
    %v2704 = vadd.f32 %v2703, %v2673
    %v2705 = vadd.f32 %v2704, %v2674
    %v2706 = vadd.f32 %v2705, %v2675
    %v2707 = vadd.f32 %v2706, %v2676
    %v2708 = vadd.f32 %v2707, %v2677
    %v2709 = vadd.f32 %v2708, %v2678
    %v2710 = vadd.f32 %v2709, %v2679
    %v2711 = vadd.f32 %v2710, %v2680
    %v2712 = vadd.f32 %v2711, %v2681
    %v2713 = vadd.f32 %v2712, %v2682
    %v2714 = vadd.f32 %v2713, %v2683
    %v2715 = vadd.f32 %v2714, %v2684
    %v2716 = vadd.f32 %v2715, %v2685
    %v2717 = vadd.f32 %v2716, %v2686
    %v2718 = vadd.f32 %v2717, %v2687
    %v2719 = vadd.f32 %v2718, %v2688
    %v2720 = vadd.f32 %v2719, %v2689
    %v2721 = vadd.f32 %v2720, %v2690
    %v2722 = vadd.f32 %v2721, %v2691
    %v2723 = vadd.f32 %v2722, %v2692
    %v2724 = vadd.f32 %v2723, %v2693
    %v2725 = vadd.f32 %v2724, %v2694
    %v2726 = vadd.f32 %v2725, %v2695
    %v2727 = vadd.f32 %v2726, %v2696
    %v2728 = vadd.f32 %v2727, %v2697
    %v2729 = vadd.f32 %v2728, %v2698
    %v2730 = vadd.f32 %v2729, %v2699
    %v2731 = vadd.f32 %v2730, %v2700
    %v2732 = vadd.f32 %v2731, %v2701
    %v2733 = vadd.f32 %v2732, %v2702
    %2734 = vadd.xlane.f32.xlu0 %v2733
    %v2735 = vpop.xlane.xlu0 %2734
    %v2736 = vadd.f32 %v2735, 0.0
    %v2737 = vsub.f32 %v1501, %v2638
    %v2738 = vsub.f32 %v1503, %v2638
    %v2739 = vsub.f32 %v1572, %v2638
    %v2740 = vsub.f32 %v1574, %v2638
    %v2741 = vsub.f32 %v1643, %v2638
    %v2742 = vsub.f32 %v1645, %v2638
    %v2743 = vsub.f32 %v1714, %v2638
    %v2744 = vsub.f32 %v1716, %v2638
    %v2745 = vsub.f32 %v1785, %v2638
    %v2746 = vsub.f32 %v1787, %v2638
    %v2747 = vsub.f32 %v1856, %v2638
    %v2748 = vsub.f32 %v1858, %v2638
    %v2749 = vsub.f32 %v1927, %v2638
    %v2750 = vsub.f32 %v1929, %v2638
    %v2751 = vsub.f32 %v1998, %v2638
    %v2752 = vsub.f32 %v2000, %v2638
    %v2753 = vsub.f32 %v2069, %v2638
    %v2754 = vsub.f32 %v2071, %v2638
    %v2755 = vsub.f32 %v2140, %v2638
    %v2756 = vsub.f32 %v2142, %v2638
    %v2757 = vsub.f32 %v2211, %v2638
    %v2758 = vsub.f32 %v2213, %v2638
    %v2759 = vsub.f32 %v2282, %v2638
    %v2760 = vsub.f32 %v2284, %v2638
    %v2761 = vsub.f32 %v2353, %v2638
    %v2762 = vsub.f32 %v2355, %v2638
    %v2763 = vsub.f32 %v2424, %v2638
    %v2764 = vsub.f32 %v2426, %v2638
    %v2765 = vsub.f32 %v2495, %v2638
    %v2766 = vsub.f32 %v2497, %v2638
    %v2767 = vsub.f32 %v2566, %v2638
    %v2768 = vsub.f32 %v2568, %v2638
    %v2769 = vmul.f32 %v2737, %v2737
    %v2770 = vmul.f32 %v2738, %v2738
    %v2771 = vmul.f32 %v2739, %v2739
    %v2772 = vmul.f32 %v2740, %v2740
    %v2773 = vmul.f32 %v2741, %v2741
    %v2774 = vmul.f32 %v2742, %v2742
    %v2775 = vmul.f32 %v2743, %v2743
    %v2776 = vmul.f32 %v2744, %v2744
    %v2777 = vmul.f32 %v2745, %v2745
    %v2778 = vmul.f32 %v2746, %v2746
    %v2779 = vmul.f32 %v2747, %v2747
    %v2780 = vmul.f32 %v2748, %v2748
    %v2781 = vmul.f32 %v2749, %v2749
    %v2782 = vmul.f32 %v2750, %v2750
    %v2783 = vmul.f32 %v2751, %v2751
    %v2784 = vmul.f32 %v2752, %v2752
    %v2785 = vmul.f32 %v2753, %v2753
    %v2786 = vmul.f32 %v2754, %v2754
    %v2787 = vmul.f32 %v2755, %v2755
    %v2788 = vmul.f32 %v2756, %v2756
    %v2789 = vmul.f32 %v2757, %v2757
    %v2790 = vmul.f32 %v2758, %v2758
    %v2791 = vmul.f32 %v2759, %v2759
    %v2792 = vmul.f32 %v2760, %v2760
    %v2793 = vmul.f32 %v2761, %v2761
    %v2794 = vmul.f32 %v2762, %v2762
    %v2795 = vmul.f32 %v2763, %v2763
    %v2796 = vmul.f32 %v2764, %v2764
    %v2797 = vmul.f32 %v2765, %v2765
    %v2798 = vmul.f32 %v2766, %v2766
    %v2799 = vmul.f32 %v2767, %v2767
    %v2800 = vmul.f32 %v2768, %v2768
    %v2801 = vadd.f32 %v2769, %v2770
    %v2802 = vadd.f32 %v2801, %v2771
    %v2803 = vadd.f32 %v2802, %v2772
    %v2804 = vadd.f32 %v2803, %v2773
    %v2805 = vadd.f32 %v2804, %v2774
    %v2806 = vadd.f32 %v2805, %v2775
    %v2807 = vadd.f32 %v2806, %v2776
    %v2808 = vadd.f32 %v2807, %v2777
    %v2809 = vadd.f32 %v2808, %v2778
    %v2810 = vadd.f32 %v2809, %v2779
    %v2811 = vadd.f32 %v2810, %v2780
    %v2812 = vadd.f32 %v2811, %v2781
    %v2813 = vadd.f32 %v2812, %v2782
    %v2814 = vadd.f32 %v2813, %v2783
    %v2815 = vadd.f32 %v2814, %v2784
    %v2816 = vadd.f32 %v2815, %v2785
    %v2817 = vadd.f32 %v2816, %v2786
    %v2818 = vadd.f32 %v2817, %v2787
    %v2819 = vadd.f32 %v2818, %v2788
    %v2820 = vadd.f32 %v2819, %v2789
    %v2821 = vadd.f32 %v2820, %v2790
    %v2822 = vadd.f32 %v2821, %v2791
    %v2823 = vadd.f32 %v2822, %v2792
    %v2824 = vadd.f32 %v2823, %v2793
    %v2825 = vadd.f32 %v2824, %v2794
    %v2826 = vadd.f32 %v2825, %v2795
    %v2827 = vadd.f32 %v2826, %v2796
    %v2828 = vadd.f32 %v2827, %v2797
    %v2829 = vadd.f32 %v2828, %v2798
    %v2830 = vadd.f32 %v2829, %v2799
    %v2831 = vadd.f32 %v2830, %v2800
    %2832 = vadd.xlane.f32.xlu0 %v2831
    %v2833 = vpop.xlane.xlu0 %2832
    %v2834 = vadd.f32 %v2736, %v2833
    %v2835 = vmul.f32 %v2834, 0.00012207031
    %v2836 = vld [vmem:[#allocation5] sm:$0xff]
    %v2837 = vadd.f32 %v2835, 1e-05
    %v2838 = vrsqrt.pop %v2837
    %v2839 = vmul.f32 %v2836, %v2838
    %v2840 = vld [vmem:[#allocation7] sm:$0xff]
    %v2841 = vmul.f32 %v2839, %v2638
    %v2842 = vsub.f32 %v2840, %v2841
    %2844 = vset.pattern.permute.xlu0 0
    %2845 = vperm.xlu0 %2844, %v2839
    %v2846 = vpop.permute.xlu0 %2845
    %v2848 = vmul.f32 %v252, %v2846
    %v2849 = vmul.f32 %v254, %v2846
    %v2850 = vmul.f32 %v323, %v2846
    %v2851 = vmul.f32 %v325, %v2846
    %v2852 = vmul.f32 %v394, %v2846
    %v2853 = vmul.f32 %v396, %v2846
    %v2854 = vmul.f32 %v465, %v2846
    %v2855 = vmul.f32 %v467, %v2846
    %v2856 = vmul.f32 %v536, %v2846
    %v2857 = vmul.f32 %v538, %v2846
    %v2858 = vmul.f32 %v607, %v2846
    %v2859 = vmul.f32 %v609, %v2846
    %v2860 = vmul.f32 %v678, %v2846
    %v2861 = vmul.f32 %v680, %v2846
    %v2862 = vmul.f32 %v749, %v2846
    %v2863 = vmul.f32 %v751, %v2846
    %v2864 = vmul.f32 %v820, %v2846
    %v2865 = vmul.f32 %v822, %v2846
    %v2866 = vmul.f32 %v891, %v2846
    %v2867 = vmul.f32 %v893, %v2846
    %v2868 = vmul.f32 %v962, %v2846
    %v2869 = vmul.f32 %v964, %v2846
    %v2870 = vmul.f32 %v1033, %v2846
    %v2871 = vmul.f32 %v1035, %v2846
    %v2872 = vmul.f32 %v1104, %v2846
    %v2873 = vmul.f32 %v1106, %v2846
    %v2874 = vmul.f32 %v1175, %v2846
    %v2875 = vmul.f32 %v1177, %v2846
    %v2876 = vmul.f32 %v1246, %v2846
    %v2877 = vmul.f32 %v1248, %v2846
    %v2878 = vmul.f32 %v1317, %v2846
    %v2879 = vmul.f32 %v1319, %v2846
    %2881 = vset.pattern.permute.xlu0 0
    %2882 = vperm.xlu0 %2881, %v2842
    %v2883 = vpop.permute.xlu0 %2882
    %v2885 = vadd.f32 %v2848, %v2883
    %v2886 = vadd.f32 %v2849, %v2883
    %v2887 = vadd.f32 %v2850, %v2883
    %v2888 = vadd.f32 %v2851, %v2883
    %v2889 = vadd.f32 %v2852, %v2883
    %v2890 = vadd.f32 %v2853, %v2883
    %v2891 = vadd.f32 %v2854, %v2883
    %v2892 = vadd.f32 %v2855, %v2883
    %v2893 = vadd.f32 %v2856, %v2883
    %v2894 = vadd.f32 %v2857, %v2883
    %v2895 = vadd.f32 %v2858, %v2883
    %v2896 = vadd.f32 %v2859, %v2883
    %v2897 = vadd.f32 %v2860, %v2883
    %v2898 = vadd.f32 %v2861, %v2883
    %v2899 = vadd.f32 %v2862, %v2883
    %v2900 = vadd.f32 %v2863, %v2883
    %v2901 = vadd.f32 %v2864, %v2883
    %v2902 = vadd.f32 %v2865, %v2883
    %v2903 = vadd.f32 %v2866, %v2883
    %v2904 = vadd.f32 %v2867, %v2883
    %v2905 = vadd.f32 %v2868, %v2883
    %v2906 = vadd.f32 %v2869, %v2883
    %v2907 = vadd.f32 %v2870, %v2883
    %v2908 = vadd.f32 %v2871, %v2883
    %v2909 = vadd.f32 %v2872, %v2883
    %v2910 = vadd.f32 %v2873, %v2883
    %v2911 = vadd.f32 %v2874, %v2883
    %v2912 = vadd.f32 %v2875, %v2883
    %v2913 = vadd.f32 %v2876, %v2883
    %v2914 = vadd.f32 %v2877, %v2883
    %v2915 = vadd.f32 %v2878, %v2883
    %v2916 = vadd.f32 %v2879, %v2883
    %v2917 = vmax.f32 %v2885, 0.0
    %v2918 = vmax.f32 %v2886, 0.0
    %v2919 = vmax.f32 %v2887, 0.0
    %v2920 = vmax.f32 %v2888, 0.0
    %v2921 = vmax.f32 %v2889, 0.0
    %v2922 = vmax.f32 %v2890, 0.0
    %v2923 = vmax.f32 %v2891, 0.0
    %v2924 = vmax.f32 %v2892, 0.0
    %v2925 = vmax.f32 %v2893, 0.0
    %v2926 = vmax.f32 %v2894, 0.0
    %v2927 = vmax.f32 %v2895, 0.0
    %v2928 = vmax.f32 %v2896, 0.0
    %v2929 = vmax.f32 %v2897, 0.0
    %v2930 = vmax.f32 %v2898, 0.0
    %v2931 = vmax.f32 %v2899, 0.0
    %v2932 = vmax.f32 %v2900, 0.0
    %v2933 = vmax.f32 %v2901, 0.0
    %v2934 = vmax.f32 %v2902, 0.0
    %v2935 = vmax.f32 %v2903, 0.0
    %v2936 = vmax.f32 %v2904, 0.0
    %v2937 = vmax.f32 %v2905, 0.0
    %v2938 = vmax.f32 %v2906, 0.0
    %v2939 = vmax.f32 %v2907, 0.0
    %v2940 = vmax.f32 %v2908, 0.0
    %v2941 = vmax.f32 %v2909, 0.0
    %v2942 = vmax.f32 %v2910, 0.0
    %v2943 = vmax.f32 %v2911, 0.0
    %v2944 = vmax.f32 %v2912, 0.0
    %v2945 = vmax.f32 %v2913, 0.0
    %v2946 = vmax.f32 %v2914, 0.0
    %v2947 = vmax.f32 %v2915, 0.0
    %v2948 = vmax.f32 %v2916, 0.0
    %2949 = vst [vmem:[#allocation10] sm:$0xff] %v2917
    %2950 = vst [vmem:[#allocation10 + $0x8] sm:$0xff] %v2918
    %2951 = vst [vmem:[#allocation10 + $0x10] sm:$0xff] %v2919
    %2952 = vst [vmem:[#allocation10 + $0x18] sm:$0xff] %v2920
    %2953 = vst [vmem:[#allocation10 + $0x20] sm:$0xff] %v2921
    %2954 = vst [vmem:[#allocation10 + $0x28] sm:$0xff] %v2922
    %2955 = vst [vmem:[#allocation10 + $0x30] sm:$0xff] %v2923
    %2956 = vst [vmem:[#allocation10 + $0x38] sm:$0xff] %v2924
    %2957 = vst [vmem:[#allocation10 + $0x40] sm:$0xff] %v2925
    %2958 = vst [vmem:[#allocation10 + $0x48] sm:$0xff] %v2926
    %2959 = vst [vmem:[#allocation10 + $0x50] sm:$0xff] %v2927
    %2960 = vst [vmem:[#allocation10 + $0x58] sm:$0xff] %v2928
    %2961 = vst [vmem:[#allocation10 + $0x60] sm:$0xff] %v2929
    %2962 = vst [vmem:[#allocation10 + $0x68] sm:$0xff] %v2930
    %2963 = vst [vmem:[#allocation10 + $0x70] sm:$0xff] %v2931
    %2964 = vst [vmem:[#allocation10 + $0x78] sm:$0xff] %v2932
    %2965 = vst [vmem:[#allocation10 + $0x80] sm:$0xff] %v2933
    %2966 = vst [vmem:[#allocation10 + $0x88] sm:$0xff] %v2934
    %2967 = vst [vmem:[#allocation10 + $0x90] sm:$0xff] %v2935
    %2968 = vst [vmem:[#allocation10 + $0x98] sm:$0xff] %v2936
    %2969 = vst [vmem:[#allocation10 + $0xa0] sm:$0xff] %v2937
    %2970 = vst [vmem:[#allocation10 + $0xa8] sm:$0xff] %v2938
    %2971 = vst [vmem:[#allocation10 + $0xb0] sm:$0xff] %v2939
    %2972 = vst [vmem:[#allocation10 + $0xb8] sm:$0xff] %v2940
    %2973 = vst [vmem:[#allocation10 + $0xc0] sm:$0xff] %v2941
    %2974 = vst [vmem:[#allocation10 + $0xc8] sm:$0xff] %v2942
    %2975 = vst [vmem:[#allocation10 + $0xd0] sm:$0xff] %v2943
    %2976 = vst [vmem:[#allocation10 + $0xd8] sm:$0xff] %v2944
    %2977 = vst [vmem:[#allocation10 + $0xe0] sm:$0xff] %v2945
    %2978 = vst [vmem:[#allocation10 + $0xe8] sm:$0xff] %v2946
    %2979 = vst [vmem:[#allocation10 + $0xf0] sm:$0xff] %v2947
    %2980 = vst [vmem:[#allocation10 + $0xf8] sm:$0xff] %v2948
    %v2981 = vmul.f32 %v1501, %v2846
    %v2982 = vmul.f32 %v1503, %v2846
    %v2983 = vmul.f32 %v1572, %v2846
    %v2984 = vmul.f32 %v1574, %v2846
    %v2985 = vmul.f32 %v1643, %v2846
    %v2986 = vmul.f32 %v1645, %v2846
    %v2987 = vmul.f32 %v1714, %v2846
    %v2988 = vmul.f32 %v1716, %v2846
    %v2989 = vmul.f32 %v1785, %v2846
    %v2990 = vmul.f32 %v1787, %v2846
    %v2991 = vmul.f32 %v1856, %v2846
    %v2992 = vmul.f32 %v1858, %v2846
    %v2993 = vmul.f32 %v1927, %v2846
    %v2994 = vmul.f32 %v1929, %v2846
    %v2995 = vmul.f32 %v1998, %v2846
    %v2996 = vmul.f32 %v2000, %v2846
    %v2997 = vmul.f32 %v2069, %v2846
    %v2998 = vmul.f32 %v2071, %v2846
    %v2999 = vmul.f32 %v2140, %v2846
    %v3000 = vmul.f32 %v2142, %v2846
    %v3001 = vmul.f32 %v2211, %v2846
    %v3002 = vmul.f32 %v2213, %v2846
    %v3003 = vmul.f32 %v2282, %v2846
    %v3004 = vmul.f32 %v2284, %v2846
    %v3005 = vmul.f32 %v2353, %v2846
    %v3006 = vmul.f32 %v2355, %v2846
    %v3007 = vmul.f32 %v2424, %v2846
    %v3008 = vmul.f32 %v2426, %v2846
    %v3009 = vmul.f32 %v2495, %v2846
    %v3010 = vmul.f32 %v2497, %v2846
    %v3011 = vmul.f32 %v2566, %v2846
    %v3012 = vmul.f32 %v2568, %v2846
    %v3013 = vadd.f32 %v2981, %v2883
    %v3014 = vadd.f32 %v2982, %v2883
    %v3015 = vadd.f32 %v2983, %v2883
    %v3016 = vadd.f32 %v2984, %v2883
    %v3017 = vadd.f32 %v2985, %v2883
    %v3018 = vadd.f32 %v2986, %v2883
    %v3019 = vadd.f32 %v2987, %v2883
    %v3020 = vadd.f32 %v2988, %v2883
    %v3021 = vadd.f32 %v2989, %v2883
    %v3022 = vadd.f32 %v2990, %v2883
    %v3023 = vadd.f32 %v2991, %v2883
    %v3024 = vadd.f32 %v2992, %v2883
    %v3025 = vadd.f32 %v2993, %v2883
    %v3026 = vadd.f32 %v2994, %v2883
    %v3027 = vadd.f32 %v2995, %v2883
    %v3028 = vadd.f32 %v2996, %v2883
    %v3029 = vadd.f32 %v2997, %v2883
    %v3030 = vadd.f32 %v2998, %v2883
    %v3031 = vadd.f32 %v2999, %v2883
    %v3032 = vadd.f32 %v3000, %v2883
    %v3033 = vadd.f32 %v3001, %v2883
    %v3034 = vadd.f32 %v3002, %v2883
    %v3035 = vadd.f32 %v3003, %v2883
    %v3036 = vadd.f32 %v3004, %v2883
    %v3037 = vadd.f32 %v3005, %v2883
    %v3038 = vadd.f32 %v3006, %v2883
    %v3039 = vadd.f32 %v3007, %v2883
    %v3040 = vadd.f32 %v3008, %v2883
    %v3041 = vadd.f32 %v3009, %v2883
    %v3042 = vadd.f32 %v3010, %v2883
    %v3043 = vadd.f32 %v3011, %v2883
    %v3044 = vadd.f32 %v3012, %v2883
    %v3045 = vmax.f32 %v3013, 0.0
    %v3046 = vmax.f32 %v3014, 0.0
    %v3047 = vmax.f32 %v3015, 0.0
    %v3048 = vmax.f32 %v3016, 0.0
    %v3049 = vmax.f32 %v3017, 0.0
    %v3050 = vmax.f32 %v3018, 0.0
    %v3051 = vmax.f32 %v3019, 0.0
    %v3052 = vmax.f32 %v3020, 0.0
    %v3053 = vmax.f32 %v3021, 0.0
    %v3054 = vmax.f32 %v3022, 0.0
    %v3055 = vmax.f32 %v3023, 0.0
    %v3056 = vmax.f32 %v3024, 0.0
    %v3057 = vmax.f32 %v3025, 0.0
    %v3058 = vmax.f32 %v3026, 0.0
    %v3059 = vmax.f32 %v3027, 0.0
    %v3060 = vmax.f32 %v3028, 0.0
    %v3061 = vmax.f32 %v3029, 0.0
    %v3062 = vmax.f32 %v3030, 0.0
    %v3063 = vmax.f32 %v3031, 0.0
    %v3064 = vmax.f32 %v3032, 0.0
    %v3065 = vmax.f32 %v3033, 0.0
    %v3066 = vmax.f32 %v3034, 0.0
    %v3067 = vmax.f32 %v3035, 0.0
    %v3068 = vmax.f32 %v3036, 0.0
    %v3069 = vmax.f32 %v3037, 0.0
    %v3070 = vmax.f32 %v3038, 0.0
    %v3071 = vmax.f32 %v3039, 0.0
    %v3072 = vmax.f32 %v3040, 0.0
    %v3073 = vmax.f32 %v3041, 0.0
    %v3074 = vmax.f32 %v3042, 0.0
    %v3075 = vmax.f32 %v3043, 0.0
    %v3076 = vmax.f32 %v3044, 0.0
    %s3077 = scalar_lea.vmem [#allocation10], 256
    %3078 = vst [vmem:[%s3077] sm:$0xff] %v3045
    %3079 = vst [vmem:[%s3077 + $0x8] sm:$0xff] %v3046
    %3080 = vst [vmem:[%s3077 + $0x10] sm:$0xff] %v3047
    %3081 = vst [vmem:[%s3077 + $0x18] sm:$0xff] %v3048
    %3082 = vst [vmem:[%s3077 + $0x20] sm:$0xff] %v3049
    %3083 = vst [vmem:[%s3077 + $0x28] sm:$0xff] %v3050
    %3084 = vst [vmem:[%s3077 + $0x30] sm:$0xff] %v3051
    %3085 = vst [vmem:[%s3077 + $0x38] sm:$0xff] %v3052
    %3086 = vst [vmem:[%s3077 + $0x40] sm:$0xff] %v3053
    %3087 = vst [vmem:[%s3077 + $0x48] sm:$0xff] %v3054
    %3088 = vst [vmem:[%s3077 + $0x50] sm:$0xff] %v3055
    %3089 = vst [vmem:[%s3077 + $0x58] sm:$0xff] %v3056
    %3090 = vst [vmem:[%s3077 + $0x60] sm:$0xff] %v3057
    %3091 = vst [vmem:[%s3077 + $0x68] sm:$0xff] %v3058
    %3092 = vst [vmem:[%s3077 + $0x70] sm:$0xff] %v3059
    %3093 = vst [vmem:[%s3077 + $0x78] sm:$0xff] %v3060
    %3094 = vst [vmem:[%s3077 + $0x80] sm:$0xff] %v3061
    %3095 = vst [vmem:[%s3077 + $0x88] sm:$0xff] %v3062
    %3096 = vst [vmem:[%s3077 + $0x90] sm:$0xff] %v3063
    %3097 = vst [vmem:[%s3077 + $0x98] sm:$0xff] %v3064
    %3098 = vst [vmem:[%s3077 + $0xa0] sm:$0xff] %v3065
    %3099 = vst [vmem:[%s3077 + $0xa8] sm:$0xff] %v3066
    %3100 = vst [vmem:[%s3077 + $0xb0] sm:$0xff] %v3067
    %3101 = vst [vmem:[%s3077 + $0xb8] sm:$0xff] %v3068
    %3102 = vst [vmem:[%s3077 + $0xc0] sm:$0xff] %v3069
    %3103 = vst [vmem:[%s3077 + $0xc8] sm:$0xff] %v3070
    %3104 = vst [vmem:[%s3077 + $0xd0] sm:$0xff] %v3071
    %3105 = vst [vmem:[%s3077 + $0xd8] sm:$0xff] %v3072
    %3106 = vst [vmem:[%s3077 + $0xe0] sm:$0xff] %v3073
    %3107 = vst [vmem:[%s3077 + $0xe8] sm:$0xff] %v3074
    %3108 = vst [vmem:[%s3077 + $0xf0] sm:$0xff] %v3075
    %3109 = vst [vmem:[%s3077 + $0xf8] sm:$0xff] %v3076
    // Predicated region
    $region34: #{tpu_custom_call.1} parent=1 // pred_check
      _
    $region35: #{tpu_custom_call.1} parent=1 // pred_check_branch
      %3111 = sbr.rel (0) target = $region37
    $region36: #{tpu_custom_call.1} parent=1 // pred_region
      %s3113 = ssub.s32 8192, 8192
      %3114 = vsyncadd [#allocation4], %s3113
      %s3115 = sshll.u32 [#allocation10], 4
      %s3116 = int_to_ptr.vmem [resolvable:$true] %s3115
      %3121 = dma.vmem_to_hbm [thread:$0]  %s3116, 8192, %s4, [#allocation4], 4096, 4096, 256
    $region37: #{tpu_custom_call.1} parent=1 // pred_fallthru
      _
    // Predicated region
    $region38: #{tpu_custom_call.1} parent=1 // pred_check
      _
    $region39: #{tpu_custom_call.1} parent=1 // pred_check_branch
      %3123 = sbr.rel (0) target = $region41
    $region40: #{tpu_custom_call.1} parent=1 // pred_region
      %3124 = dma.done [#allocation4], 8192
    $region41: #{tpu_custom_call.1} parent=1 // pred_fallthru
      _
    %3125 = vsyncpa [#allocation3], 1
    %3126 = vsyncpa [#allocation6], 1
    %3127 = vsyncpa [#allocation9], 1
    %3128 = vsyncpa [#allocation4], 1

</llo_original>
